<compile_context>
chip_gen: v7x
topology: tpu7x:2x2x1
jax: 0.10.0
libtpu: 0.0.40
codegen_flags: <defaults>
</compile_context>

<pallas_src>
import functools

import jax
import jax.numpy as jnp
from jax import lax
from jax.experimental import pallas as pl
from jax.experimental.pallas import tpu as pltpu


# ---------------------------------------------------------------------------
# Main path: channels-on-lanes (NHWC) kernel, used when C >= 32.
# ---------------------------------------------------------------------------
def _msdc_nhwc_kernel(x_ref, w_ref, b_ref, *refs, kernel_sizes, stride,
                      w_out, max_pad, dw_parallel, h_in, w_in):
    """One (C-block, batch, H-strip) grid step.

    x_ref : (strip_in_h, W_pad, C_blk)   zero-padded NHWC input strip (halo incl.)
    w_ref : (T, C_blk)                   BN-folded depthwise weights, T = sum(k*k)
    b_ref : (n_br, C_blk)                folded BN bias
    refs  : n_br output refs (strip_out_h, W_out, C_blk)
            [+ xwork scratch (strip_in_h, W_pad, C_blk) iff dw_parallel=False]
    """
    n_br = len(kernel_sizes)
    out_refs = refs[:n_br]
    strip_out_h = out_refs[0].shape[0]
    c_blk = x_ref.shape[-1]

    w_all = w_ref[...].astype(jnp.float32)       # (T, C_blk)  ~KBs
    b_all = b_ref[...].astype(jnp.float32)       # (n_br, C_blk)

    if dw_parallel:
        src = x_ref                              # read-only, no scratch copy
    else:
        xwork = refs[n_br]
        xwork[...] = x_ref[...].astype(jnp.float32)
        src = xwork

    tap_base = 0
    for j, k in enumerate(kernel_sizes):
        off = max_pad - k // 2
        col_span = stride * (w_out - 1) + 1
        # Hoisted (loop-invariant) per-branch params.
        bias_full = jnp.broadcast_to(b_all[j:j + 1], (w_out, c_blk))
        taps = [w_all[tap_base + t:tap_base + t + 1] for t in range(k * k)]
        tap_base += k * k
        out_ref = out_refs[j]

        def row_body(ho, carry, *, k=k, off=off, col_span=col_span,
                     bias_full=bias_full, taps=taps, out_ref=out_ref):
            acc = bias_full                      # (W_out, C_blk) -- stays in vregs
            hi = ho * stride + off
            for kh in range(k):                  # kh: free outer-dim index
                row = src[hi + kh].astype(jnp.float32)   # (W_pad, C_blk)
                for kw in range(k):              # kw: cheap sublane select
                    lo = off + kw
                    if stride == 1:
                        win = row[lo:lo + w_out]
                    else:
                        win = row[lo:lo + col_span:stride]
                    acc = acc + win * taps[kh * k + kw]
            y = jnp.clip(acc, 0.0, 6.0)          # ReLU6
            out_ref[ho] = y.astype(out_ref.dtype)
            return carry

        lax.fori_loop(0, strip_out_h, row_body, 0)

        if (not dw_parallel) and (j + 1 < n_br):
            # Fused residual x <- x + dw_out (stride==1 enforced upstream).
            xwork[max_pad:max_pad + h_in, max_pad:max_pad + w_in, :] = (
                xwork[max_pad:max_pad + h_in, max_pad:max_pad + w_in, :]
                + out_ref[...].astype(jnp.float32))


# ---------------------------------------------------------------------------
# Fallback path: W-on-lanes (NCHW) kernel for tiny channel counts (C < 32).
# ---------------------------------------------------------------------------
def _msdc_nchw_kernel(x_ref, w_ref, b_ref, *refs, kernel_sizes, stride,
                      h_out, w_out, max_pad, dw_parallel, h_in, w_in):
    """One batch element.

    x_ref : (C, H_pad, W_pad)  zero-padded NCHW plane
    w_ref : (T, C, W_out)      BN-folded weights, pre-tiled along W (C tiny)
    b_ref : (n_br, C, W_out)   folded BN bias, pre-tiled along W
    refs  : n_br output refs (C, H_out, W_out)
            [+ xwork scratch (C, H_pad, W_pad) iff dw_parallel=False]
    """
    n_br = len(kernel_sizes)
    out_refs = refs[:n_br]
    c = x_ref.shape[0]

    if dw_parallel:
        src = x_ref
    else:
        xwork = refs[n_br]
        xwork[...] = x_ref[...].astype(jnp.float32)
        src = xwork

    row_span = stride * (h_out - 1) + 1
    col_span = stride * (w_out - 1) + 1

    tap_base = 0
    for j, k in enumerate(kernel_sizes):
        off = max_pad - k // 2
        acc = jnp.broadcast_to(b_ref[j][:, None, :], (c, h_out, w_out))
        acc = acc.astype(jnp.float32)
        for kh in range(k):
            rows = src[:, off + kh: off + kh + row_span, :].astype(jnp.float32)
            if stride > 1:
                rows = rows[:, ::stride, :]
            for kw in range(k):
                win = rows[:, :, off + kw: off + kw + col_span]
                if stride > 1:
                    win = win[:, :, ::stride]
                acc = acc + win * w_ref[tap_base + kh * k + kw][:, None, :]
        tap_base += k * k
        y = jnp.clip(acc, 0.0, 6.0)
        out_refs[j][...] = y.astype(out_refs[j].dtype)
        if (not dw_parallel) and (j + 1 < n_br):
            xwork[:, max_pad:max_pad + h_in, max_pad:max_pad + w_in] = (
                xwork[:, max_pad:max_pad + h_in, max_pad:max_pad + w_in] + y)


class MSDCPallas:
    """JAX/Pallas port of MSDC: multi-scale depthwise convs + BN + ReLU6."""

    def __init__(self, in_channels, kernel_sizes, stride, activation='relu6',
                 dw_parallel=True, key=None, max_strip_out_rows=None):
        assert activation == 'relu6', "only relu6 implemented"
        assert all(k % 2 == 1 for k in kernel_sizes), "odd kernel sizes expected"
        if not dw_parallel:
            assert stride == 1, "dw_parallel=False requires stride=1"
        if key is None:
            key = jax.random.PRNGKey(0)
        self.in_channels = in_channels
        self.kernel_sizes = list(kernel_sizes)
        self.stride = stride
        self.dw_parallel = dw_parallel
        self.max_strip_out_rows = max_strip_out_rows  # test hook for strip tiling
        self.eps = 1e-5

        # init_weights('normal'): conv weight ~ N(0, 0.02^2); BN gamma=1, beta=0,
        # running_mean=0, running_var=1 (eval-mode stats).
        self.conv_w, self.bn_scale, self.bn_bias = [], [], []
        for k in self.kernel_sizes:
            key, sub = jax.random.split(key)
            self.conv_w.append(
                0.02 * jax.random.normal(sub, (in_channels, 1, k, k), jnp.float32))
            gamma = jnp.ones((in_channels,), jnp.float32)
            beta = jnp.zeros((in_channels,), jnp.float32)
            mean = jnp.zeros((in_channels,), jnp.float32)
            var = jnp.ones((in_channels,), jnp.float32)
            scale = gamma / jnp.sqrt(var + self.eps)
            self.bn_scale.append(scale)
            self.bn_bias.append(beta - mean * scale)

    # ------------------------------------------------------------------ utils
    def _out_hw(self, h, w):
        s = self.stride
        h_outs = {(h + 2 * (k // 2) - k) // s + 1 for k in self.kernel_sizes}
        w_outs = {(w + 2 * (k // 2) - k) // s + 1 for k in self.kernel_sizes}
        assert len(h_outs) == 1 and len(w_outs) == 1
        return h_outs.pop(), w_outs.pop()

    def _folded_weights_lane_c(self):
        """(T, C) weights and (n_br, C) bias, BN scale folded in (lane-dense C)."""
        rows = []
        for j, k in enumerate(self.kernel_sizes):
            wj = self.conv_w[j][:, 0] * self.bn_scale[j][:, None, None]   # (C,k,k)
            rows.append(jnp.transpose(wj, (1, 2, 0)).reshape(k * k, self.in_channels))
        w_all = jnp.concatenate(rows, axis=0)                             # (T, C)
        b_all = jnp.stack(self.bn_bias, axis=0)                           # (n_br, C)
        return w_all, b_all

    # --------------------------------------------------------------- dispatch
    def __call__(self, x_nchw):
        n, c, h, w = x_nchw.shape
        assert c == self.in_channels
        if c >= 32:
            return self._forward_nhwc(x_nchw)
        return self._forward_nchw(x_nchw)

    # ------------------------------------------------- main C-on-lanes path
    def _forward_nhwc(self, x_nchw):
        n, c, h, w = x_nchw.shape
        s = self.stride
        ks = self.kernel_sizes
        n_br = len(ks)
        max_pad = max(ks) // 2
        h_out, w_out = self._out_hw(h, w)
        w_pad = w + 2 * max_pad

        c_blk = 128 if (c % 128 == 0) else c
        n_cb = c // c_blk

        # H-strip selection: largest divisor of H_out whose double-buffered
        # working set (input strip + branch outputs, f32) stays ~<=10 MiB.
        if self.dw_parallel:
            target = 10 * 1024 * 1024
            strip_out_h = 1
            for d in range(1, h_out + 1):
                if h_out % d:
                    continue
                if (self.max_strip_out_rows is not None
                        and d > self.max_strip_out_rows):
                    continue
                strip_in = (d - 1) * s + 1 + 2 * max_pad
                bytes_ = 8 * c_blk * (strip_in * w_pad + n_br * d * w_out)
                if bytes_ <= target:
                    strip_out_h = d
        else:
            strip_out_h = h_out   # residual chaining needs the whole plane
        n_hs = h_out // strip_out_h
        strip_in_h = (strip_out_h - 1) * s + 1 + 2 * max_pad

        # One XLA layout pass: NCHW -> zero-padded NHWC halo strips.
        x_nhwc = jnp.transpose(x_nchw, (0, 2, 3, 1))
        x_p = jnp.pad(x_nhwc,
                      ((0, 0), (max_pad, max_pad), (max_pad, max_pad), (0, 0)))
        if n_hs == 1:
            x_strips = x_p[:, :strip_in_h]                      # (N, sih, Wp, C)
        else:
            x_strips = jnp.stack(
                [x_p[:, hs * strip_out_h * s: hs * strip_out_h * s + strip_in_h]
                 for hs in range(n_hs)], axis=1)
            x_strips = x_strips.reshape(n * n_hs, strip_in_h, w_pad, c)

        w_all, b_all = self._folded_weights_lane_c()
        t_taps = w_all.shape[0]

        kernel = functools.partial(
            _msdc_nhwc_kernel, kernel_sizes=tuple(ks), stride=s, w_out=w_out,
            max_pad=max_pad, dw_parallel=self.dw_parallel, h_in=h, w_in=w)

        scratch = []
        if not self.dw_parallel:
            scratch = [pltpu.VMEM((strip_in_h, w_pad, c_blk), jnp.float32)]

        x_map = lambda cb, b, hs: (b * n_hs + hs, 0, 0, cb)
        prm_map = lambda cb, b, hs: (0, cb)
        out_map = lambda cb, b, hs: (b, hs, 0, cb)

        outs = pl.pallas_call(
            kernel,
            out_shape=tuple(
                jax.ShapeDtypeStruct((n, h_out, w_out, c), x_nchw.dtype)
                for _ in ks),
            grid_spec=pltpu.PrefetchScalarGridSpec(
                num_scalar_prefetch=0,
                grid=(n_cb, n, n_hs),
                in_specs=[
                    pl.BlockSpec((None, strip_in_h, w_pad, c_blk), x_map),
                    pl.BlockSpec((t_taps, c_blk), prm_map),
                    pl.BlockSpec((n_br, c_blk), prm_map),
                ],
                out_specs=tuple(
                    pl.BlockSpec((None, strip_out_h, w_out, c_blk), out_map)
                    for _ in ks),
                scratch_shapes=scratch),
            compiler_params=pltpu.CompilerParams(
                dimension_semantics=("parallel", "parallel", "parallel"),
                vmem_limit_bytes=32 * 1024 * 1024),
        )(x_strips, w_all, b_all)

        # Restore the module's NCHW output layout.
        return [jnp.transpose(o, (0, 3, 1, 2)) for o in outs]

    # ------------------------------------------- tiny-C W-on-lanes fallback
    def _forward_nchw(self, x_nchw):
        n, c, h, w = x_nchw.shape
        s = self.stride
        ks = self.kernel_sizes
        n_br = len(ks)
        max_pad = max(ks) // 2
        h_out, w_out = self._out_hw(h, w)
        h_pad, w_pad = h + 2 * max_pad, w + 2 * max_pad

        x_p = jnp.pad(x_nchw,
                      ((0, 0), (0, 0), (max_pad, max_pad), (max_pad, max_pad)))

        # Weights pre-tiled along W (W is the lane axis here; C is tiny so the
        # extra traffic is a few KiB).
        w_all, b_all = self._folded_weights_lane_c()              # (T,C),(nbr,C)
        t_taps = w_all.shape[0]
        w_all = jnp.broadcast_to(w_all[:, :, None], (t_taps, c, w_out))
        b_all = jnp.broadcast_to(b_all[:, :, None], (n_br, c, w_out))

        kernel = functools.partial(
            _msdc_nchw_kernel, kernel_sizes=tuple(ks), stride=s,
            h_out=h_out, w_out=w_out, max_pad=max_pad,
            dw_parallel=self.dw_parallel, h_in=h, w_in=w)

        scratch = []
        if not self.dw_parallel:
            scratch = [pltpu.VMEM((c, h_pad, w_pad), jnp.float32)]

        outs = pl.pallas_call(
            kernel,
            out_shape=tuple(
                jax.ShapeDtypeStruct((n, c, h_out, w_out), x_nchw.dtype)
                for _ in ks),
            grid_spec=pltpu.PrefetchScalarGridSpec(
                num_scalar_prefetch=0,
                grid=(n,),
                in_specs=[
                    pl.BlockSpec((None, c, h_pad, w_pad), lambda b: (b, 0, 0, 0)),
                    pl.BlockSpec((t_taps, c, w_out), lambda b: (0, 0, 0)),
                    pl.BlockSpec((n_br, c, w_out), lambda b: (0, 0, 0)),
                ],
                out_specs=tuple(
                    pl.BlockSpec((None, c, h_out, w_out), lambda b: (b, 0, 0, 0))
                    for _ in ks),
                scratch_shapes=scratch),
            compiler_params=pltpu.CompilerParams(
                dimension_semantics=("parallel",),
                vmem_limit_bytes=32 * 1024 * 1024),
        )(x_p, w_all, b_all)
        return list(outs)


def _reference_forward(x_nchw, module):
    """Pure-JAX (XLA) reference matching PyTorch semantics."""
    outs = []
    cur = x_nchw
    for j, k in enumerate(module.kernel_sizes):
        pad = k // 2
        y = lax.conv_general_dilated(
            cur, module.conv_w[j],
            window_strides=(module.stride, module.stride),
            padding=[(pad, pad), (pad, pad)],
            dimension_numbers=("NCHW", "OIHW", "NCHW"),
            feature_group_count=module.in_channels,
            precision=lax.Precision.HIGHEST)
        y = (y * module.bn_scale[j][None, :, None, None]
             + module.bn_bias[j][None, :, None, None])
        y = jnp.clip(y, 0.0, 6.0)
        outs.append(y)
        if not module.dw_parallel:
            cur = cur + y
    return outs


if __name__ == "__main__":
    key = jax.random.PRNGKey(0)

    def check(module, x, tag):
        outs = [jax.block_until_ready(o) for o in module(x)]
        refs = _reference_forward(x, module)
        for i, (o, r) in enumerate(zip(outs, refs)):
            assert o.shape == r.shape, (tag, i, o.shape, r.shape)
            err = float(jnp.max(jnp.abs(o.astype(jnp.float32) - r)))
            assert err < 1e-4, (tag, i, err)

    # --- tiny-C fallback path (the spec's small shape) ----------------------
    kx, kw1 = jax.random.split(key)
    x_small = jax.random.normal(kx, (2, 4, 16, 16), jnp.float32)
    check(MSDCPallas(4, [1, 3, 5], 1, dw_parallel=True, key=kw1), x_small, "nchw-par")
    check(MSDCPallas(4, [1, 3, 5], 1, dw_parallel=False, key=kw1), x_small, "nchw-seq")
    check(MSDCPallas(4, [3, 5], 2, dw_parallel=True, key=kw1), x_small, "nchw-s2")

    # --- channels-on-lanes main path (incl. H-strip tiling and stride 2) ----
    kx2, kw2 = jax.random.split(kx)
    x_big = jax.random.normal(kx2, (2, 64, 16, 16), jnp.float32)
    check(MSDCPallas(64, [1, 3, 5], 1, dw_parallel=True, key=kw2), x_big, "nhwc-par")
    check(MSDCPallas(64, [1, 3, 5], 1, dw_parallel=True, key=kw2,
                     max_strip_out_rows=4), x_big, "nhwc-strips")
    check(MSDCPallas(64, [1, 3, 5], 1, dw_parallel=False, key=kw2), x_big, "nhwc-seq")
    check(MSDCPallas(64, [3, 5], 2, dw_parallel=True, key=kw2,
                     max_strip_out_rows=4), x_big, "nhwc-s2-strips")

    print("KERNEL_OK")
</pallas_src>

<mosaic_0001>
module attributes {stable_mosaic.version = 11 : i64} {
  func.func @_msdc_nchw_kernel(%arg0: i32, %arg1: memref<1x4x20x20xf32, #tpu.memory_space<vmem>>, %arg2: memref<35x4x16xf32, #tpu.memory_space<vmem>>, %arg3: memref<3x4x16xf32, #tpu.memory_space<vmem>>, %arg4: memref<1x4x16x16xf32, #tpu.memory_space<vmem>>, %arg5: memref<1x4x16x16xf32, #tpu.memory_space<vmem>>, %arg6: memref<1x4x16x16xf32, #tpu.memory_space<vmem>>) attributes {dimension_semantics = [#tpu.dimension_semantics<parallel>], iteration_bounds = array<i64: 2>, scalar_prefetch = 0 : i64, scratch_operands = 0 : i64, tpu.core_type = #tpu.core_type<tc>, window_params = [{transform_indices = @transform_0, window_bounds = array<i64: 1, 4, 20, 20>}, {pipeline_mode = #tpu.pipeline_mode<synchronous>, transform_indices = @transform_1, window_bounds = array<i64: 35, 4, 16>}, {pipeline_mode = #tpu.pipeline_mode<synchronous>, transform_indices = @transform_2, window_bounds = array<i64: 3, 4, 16>}, {transform_indices = @transform_3, window_bounds = array<i64: 1, 4, 16, 16>}, {transform_indices = @transform_4, window_bounds = array<i64: 1, 4, 16, 16>}, {transform_indices = @transform_5, window_bounds = array<i64: 1, 4, 16, 16>}]} {
    %c0 = arith.constant 0 : index
    %c0_0 = arith.constant 0 : index
    %c0_1 = arith.constant 0 : index
    %0 = vector.load %arg3[%c0, %c0_0, %c0_1] : memref<3x4x16xf32, #tpu.memory_space<vmem>>, vector<1x4x16xf32>
    %1 = vector.shape_cast %0 : vector<1x4x16xf32> to vector<4x16xf32>
    %2 = vector.shape_cast %1 : vector<4x16xf32> to vector<4x1x16xf32>
    %3 = vector.shape_cast %2 : vector<4x1x16xf32> to vector<4x1x16xf32>
    %4 = vector.broadcast %3 : vector<4x1x16xf32> to vector<4x16x16xf32>
    %c0_2 = arith.constant 0 : index
    %c0_3 = arith.constant 0 : index
    %c2 = arith.constant 2 : index
    %c0_4 = arith.constant 0 : index
    %5 = vector.load %arg1[%c0_2, %c0_3, %c2, %c0_4] : memref<1x4x20x20xf32, #tpu.memory_space<vmem>>, vector<1x4x16x20xf32>
    %6 = vector.shape_cast %5 : vector<1x4x16x20xf32> to vector<4x16x20xf32>
    %7 = vector.extract_strided_slice %6 {offsets = [0, 0, 2], sizes = [4, 16, 16], strides = [1, 1, 1]} : vector<4x16x20xf32> to vector<4x16x16xf32>
    %c0_5 = arith.constant 0 : index
    %c0_6 = arith.constant 0 : index
    %c0_7 = arith.constant 0 : index
    %8 = vector.load %arg2[%c0_5, %c0_6, %c0_7] : memref<35x4x16xf32, #tpu.memory_space<vmem>>, vector<1x4x16xf32>
    %9 = vector.shape_cast %8 : vector<1x4x16xf32> to vector<4x16xf32>
    %10 = vector.shape_cast %9 : vector<4x16xf32> to vector<4x1x16xf32>
    %11 = vector.broadcast %10 : vector<4x1x16xf32> to vector<4x16x16xf32>
    %12 = arith.mulf %7, %11 : vector<4x16x16xf32>
    %13 = arith.addf %4, %12 : vector<4x16x16xf32>
    %cst = arith.constant 0.000000e+00 : f32
    %cst_8 = arith.constant 6.000000e+00 : f32
    %14 = vector.broadcast %cst : f32 to vector<4x16x16xf32>
    %15 = arith.maximumf %14, %13 : vector<4x16x16xf32>
    %16 = vector.broadcast %cst_8 : f32 to vector<4x16x16xf32>
    %17 = arith.minimumf %16, %15 : vector<4x16x16xf32>
    %c0_9 = arith.constant 0 : index
    %c0_10 = arith.constant 0 : index
    %c0_11 = arith.constant 0 : index
    %c0_12 = arith.constant 0 : index
    %18 = vector.load %arg4[%c0_9, %c0_10, %c0_11, %c0_12] : memref<1x4x16x16xf32, #tpu.memory_space<vmem>>, vector<1x4x16x16xf32>
    %19 = vector.shape_cast %18 : vector<1x4x16x16xf32> to vector<4x16x16xf32>
    %20 = vector.shape_cast %17 : vector<4x16x16xf32> to vector<1x4x16x16xf32>
    tpu.vector_store %arg4[%c0_9, %c0_10, %c0_11, %c0_12], %20 {strides = array<i32>} : memref<1x4x16x16xf32, #tpu.memory_space<vmem>>, vector<1x4x16x16xf32>,
    %c1 = arith.constant 1 : index
    %c0_13 = arith.constant 0 : index
    %c0_14 = arith.constant 0 : index
    %21 = vector.load %arg3[%c1, %c0_13, %c0_14] : memref<3x4x16xf32, #tpu.memory_space<vmem>>, vector<1x4x16xf32>
    %22 = vector.shape_cast %21 : vector<1x4x16xf32> to vector<4x16xf32>
    %23 = vector.shape_cast %22 : vector<4x16xf32> to vector<4x1x16xf32>
    %24 = vector.shape_cast %23 : vector<4x1x16xf32> to vector<4x1x16xf32>
    %25 = vector.broadcast %24 : vector<4x1x16xf32> to vector<4x16x16xf32>
    %c0_15 = arith.constant 0 : index
    %c0_16 = arith.constant 0 : index
    %c1_17 = arith.constant 1 : index
    %c0_18 = arith.constant 0 : index
    %26 = vector.load %arg1[%c0_15, %c0_16, %c1_17, %c0_18] : memref<1x4x20x20xf32, #tpu.memory_space<vmem>>, vector<1x4x16x20xf32>
    %27 = vector.shape_cast %26 : vector<1x4x16x20xf32> to vector<4x16x20xf32>
    %28 = vector.extract_strided_slice %27 {offsets = [0, 0, 1], sizes = [4, 16, 16], strides = [1, 1, 1]} : vector<4x16x20xf32> to vector<4x16x16xf32>
    %c1_19 = arith.constant 1 : index
    %c0_20 = arith.constant 0 : index
    %c0_21 = arith.constant 0 : index
    %29 = vector.load %arg2[%c1_19, %c0_20, %c0_21] : memref<35x4x16xf32, #tpu.memory_space<vmem>>, vector<1x4x16xf32>
    %30 = vector.shape_cast %29 : vector<1x4x16xf32> to vector<4x16xf32>
    %31 = vector.shape_cast %30 : vector<4x16xf32> to vector<4x1x16xf32>
    %32 = vector.broadcast %31 : vector<4x1x16xf32> to vector<4x16x16xf32>
    %33 = arith.mulf %28, %32 : vector<4x16x16xf32>
    %34 = arith.addf %25, %33 : vector<4x16x16xf32>
    %35 = vector.extract_strided_slice %27 {offsets = [0, 0, 2], sizes = [4, 16, 16], strides = [1, 1, 1]} : vector<4x16x20xf32> to vector<4x16x16xf32>
    %c2_22 = arith.constant 2 : index
    %c0_23 = arith.constant 0 : index
    %c0_24 = arith.constant 0 : index
    %36 = vector.load %arg2[%c2_22, %c0_23, %c0_24] : memref<35x4x16xf32, #tpu.memory_space<vmem>>, vector<1x4x16xf32>
    %37 = vector.shape_cast %36 : vector<1x4x16xf32> to vector<4x16xf32>
    %38 = vector.shape_cast %37 : vector<4x16xf32> to vector<4x1x16xf32>
    %39 = vector.broadcast %38 : vector<4x1x16xf32> to vector<4x16x16xf32>
    %40 = arith.mulf %35, %39 : vector<4x16x16xf32>
    %41 = arith.addf %34, %40 : vector<4x16x16xf32>
    %42 = vector.extract_strided_slice %27 {offsets = [0, 0, 3], sizes = [4, 16, 16], strides = [1, 1, 1]} : vector<4x16x20xf32> to vector<4x16x16xf32>
    %c3 = arith.constant 3 : index
    %c0_25 = arith.constant 0 : index
    %c0_26 = arith.constant 0 : index
    %43 = vector.load %arg2[%c3, %c0_25, %c0_26] : memref<35x4x16xf32, #tpu.memory_space<vmem>>, vector<1x4x16xf32>
    %44 = vector.shape_cast %43 : vector<1x4x16xf32> to vector<4x16xf32>
    %45 = vector.shape_cast %44 : vector<4x16xf32> to vector<4x1x16xf32>
    %46 = vector.broadcast %45 : vector<4x1x16xf32> to vector<4x16x16xf32>
    %47 = arith.mulf %42, %46 : vector<4x16x16xf32>
    %48 = arith.addf %41, %47 : vector<4x16x16xf32>
    %c0_27 = arith.constant 0 : index
    %c0_28 = arith.constant 0 : index
    %c2_29 = arith.constant 2 : index
    %c0_30 = arith.constant 0 : index
    %49 = vector.load %arg1[%c0_27, %c0_28, %c2_29, %c0_30] : memref<1x4x20x20xf32, #tpu.memory_space<vmem>>, vector<1x4x16x20xf32>
    %50 = vector.shape_cast %49 : vector<1x4x16x20xf32> to vector<4x16x20xf32>
    %51 = vector.extract_strided_slice %50 {offsets = [0, 0, 1], sizes = [4, 16, 16], strides = [1, 1, 1]} : vector<4x16x20xf32> to vector<4x16x16xf32>
    %c4 = arith.constant 4 : index
    %c0_31 = arith.constant 0 : index
    %c0_32 = arith.constant 0 : index
    %52 = vector.load %arg2[%c4, %c0_31, %c0_32] : memref<35x4x16xf32, #tpu.memory_space<vmem>>, vector<1x4x16xf32>
    %53 = vector.shape_cast %52 : vector<1x4x16xf32> to vector<4x16xf32>
    %54 = vector.shape_cast %53 : vector<4x16xf32> to vector<4x1x16xf32>
    %55 = vector.broadcast %54 : vector<4x1x16xf32> to vector<4x16x16xf32>
    %56 = arith.mulf %51, %55 : vector<4x16x16xf32>
    %57 = arith.addf %48, %56 : vector<4x16x16xf32>
    %58 = vector.extract_strided_slice %50 {offsets = [0, 0, 2], sizes = [4, 16, 16], strides = [1, 1, 1]} : vector<4x16x20xf32> to vector<4x16x16xf32>
    %c5 = arith.constant 5 : index
    %c0_33 = arith.constant 0 : index
    %c0_34 = arith.constant 0 : index
    %59 = vector.load %arg2[%c5, %c0_33, %c0_34] : memref<35x4x16xf32, #tpu.memory_space<vmem>>, vector<1x4x16xf32>
    %60 = vector.shape_cast %59 : vector<1x4x16xf32> to vector<4x16xf32>
    %61 = vector.shape_cast %60 : vector<4x16xf32> to vector<4x1x16xf32>
    %62 = vector.broadcast %61 : vector<4x1x16xf32> to vector<4x16x16xf32>
    %63 = arith.mulf %58, %62 : vector<4x16x16xf32>
    %64 = arith.addf %57, %63 : vector<4x16x16xf32>
    %65 = vector.extract_strided_slice %50 {offsets = [0, 0, 3], sizes = [4, 16, 16], strides = [1, 1, 1]} : vector<4x16x20xf32> to vector<4x16x16xf32>
    %c6 = arith.constant 6 : index
    %c0_35 = arith.constant 0 : index
    %c0_36 = arith.constant 0 : index
    %66 = vector.load %arg2[%c6, %c0_35, %c0_36] : memref<35x4x16xf32, #tpu.memory_space<vmem>>, vector<1x4x16xf32>
    %67 = vector.shape_cast %66 : vector<1x4x16xf32> to vector<4x16xf32>
    %68 = vector.shape_cast %67 : vector<4x16xf32> to vector<4x1x16xf32>
    %69 = vector.broadcast %68 : vector<4x1x16xf32> to vector<4x16x16xf32>
    %70 = arith.mulf %65, %69 : vector<4x16x16xf32>
    %71 = arith.addf %64, %70 : vector<4x16x16xf32>
    %c0_37 = arith.constant 0 : index
    %c0_38 = arith.constant 0 : index
    %c3_39 = arith.constant 3 : index
    %c0_40 = arith.constant 0 : index
    %72 = vector.load %arg1[%c0_37, %c0_38, %c3_39, %c0_40] : memref<1x4x20x20xf32, #tpu.memory_space<vmem>>, vector<1x4x16x20xf32>
    %73 = vector.shape_cast %72 : vector<1x4x16x20xf32> to vector<4x16x20xf32>
    %74 = vector.extract_strided_slice %73 {offsets = [0, 0, 1], sizes = [4, 16, 16], strides = [1, 1, 1]} : vector<4x16x20xf32> to vector<4x16x16xf32>
    %c7 = arith.constant 7 : index
    %c0_41 = arith.constant 0 : index
    %c0_42 = arith.constant 0 : index
    %75 = vector.load %arg2[%c7, %c0_41, %c0_42] : memref<35x4x16xf32, #tpu.memory_space<vmem>>, vector<1x4x16xf32>
    %76 = vector.shape_cast %75 : vector<1x4x16xf32> to vector<4x16xf32>
    %77 = vector.shape_cast %76 : vector<4x16xf32> to vector<4x1x16xf32>
    %78 = vector.broadcast %77 : vector<4x1x16xf32> to vector<4x16x16xf32>
    %79 = arith.mulf %74, %78 : vector<4x16x16xf32>
    %80 = arith.addf %71, %79 : vector<4x16x16xf32>
    %81 = vector.extract_strided_slice %73 {offsets = [0, 0, 2], sizes = [4, 16, 16], strides = [1, 1, 1]} : vector<4x16x20xf32> to vector<4x16x16xf32>
    %c8 = arith.constant 8 : index
    %c0_43 = arith.constant 0 : index
    %c0_44 = arith.constant 0 : index
    %82 = vector.load %arg2[%c8, %c0_43, %c0_44] : memref<35x4x16xf32, #tpu.memory_space<vmem>>, vector<1x4x16xf32>
    %83 = vector.shape_cast %82 : vector<1x4x16xf32> to vector<4x16xf32>
    %84 = vector.shape_cast %83 : vector<4x16xf32> to vector<4x1x16xf32>
    %85 = vector.broadcast %84 : vector<4x1x16xf32> to vector<4x16x16xf32>
    %86 = arith.mulf %81, %85 : vector<4x16x16xf32>
    %87 = arith.addf %80, %86 : vector<4x16x16xf32>
    %88 = vector.extract_strided_slice %73 {offsets = [0, 0, 3], sizes = [4, 16, 16], strides = [1, 1, 1]} : vector<4x16x20xf32> to vector<4x16x16xf32>
    %c9 = arith.constant 9 : index
    %c0_45 = arith.constant 0 : index
    %c0_46 = arith.constant 0 : index
    %89 = vector.load %arg2[%c9, %c0_45, %c0_46] : memref<35x4x16xf32, #tpu.memory_space<vmem>>, vector<1x4x16xf32>
    %90 = vector.shape_cast %89 : vector<1x4x16xf32> to vector<4x16xf32>
    %91 = vector.shape_cast %90 : vector<4x16xf32> to vector<4x1x16xf32>
    %92 = vector.broadcast %91 : vector<4x1x16xf32> to vector<4x16x16xf32>
    %93 = arith.mulf %88, %92 : vector<4x16x16xf32>
    %94 = arith.addf %87, %93 : vector<4x16x16xf32>
    %cst_47 = arith.constant 0.000000e+00 : f32
    %cst_48 = arith.constant 6.000000e+00 : f32
    %95 = vector.broadcast %cst_47 : f32 to vector<4x16x16xf32>
    %96 = arith.maximumf %95, %94 : vector<4x16x16xf32>
    %97 = vector.broadcast %cst_48 : f32 to vector<4x16x16xf32>
    %98 = arith.minimumf %97, %96 : vector<4x16x16xf32>
    %c0_49 = arith.constant 0 : index
    %c0_50 = arith.constant 0 : index
    %c0_51 = arith.constant 0 : index
    %c0_52 = arith.constant 0 : index
    %99 = vector.load %arg5[%c0_49, %c0_50, %c0_51, %c0_52] : memref<1x4x16x16xf32, #tpu.memory_space<vmem>>, vector<1x4x16x16xf32>
    %100 = vector.shape_cast %99 : vector<1x4x16x16xf32> to vector<4x16x16xf32>
    %101 = vector.shape_cast %98 : vector<4x16x16xf32> to vector<1x4x16x16xf32>
    tpu.vector_store %arg5[%c0_49, %c0_50, %c0_51, %c0_52], %101 {strides = array<i32>} : memref<1x4x16x16xf32, #tpu.memory_space<vmem>>, vector<1x4x16x16xf32>,
    %c2_53 = arith.constant 2 : index
    %c0_54 = arith.constant 0 : index
    %c0_55 = arith.constant 0 : index
    %102 = vector.load %arg3[%c2_53, %c0_54, %c0_55] : memref<3x4x16xf32, #tpu.memory_space<vmem>>, vector<1x4x16xf32>
    %103 = vector.shape_cast %102 : vector<1x4x16xf32> to vector<4x16xf32>
    %104 = vector.shape_cast %103 : vector<4x16xf32> to vector<4x1x16xf32>
    %105 = vector.shape_cast %104 : vector<4x1x16xf32> to vector<4x1x16xf32>
    %106 = vector.broadcast %105 : vector<4x1x16xf32> to vector<4x16x16xf32>
    %c0_56 = arith.constant 0 : index
    %c0_57 = arith.constant 0 : index
    %c0_58 = arith.constant 0 : index
    %c0_59 = arith.constant 0 : index
    %107 = vector.load %arg1[%c0_56, %c0_57, %c0_58, %c0_59] : memref<1x4x20x20xf32, #tpu.memory_space<vmem>>, vector<1x4x16x20xf32>
    %108 = vector.shape_cast %107 : vector<1x4x16x20xf32> to vector<4x16x20xf32>
    %109 = vector.extract_strided_slice %108 {offsets = [0, 0, 0], sizes = [4, 16, 16], strides = [1, 1, 1]} : vector<4x16x20xf32> to vector<4x16x16xf32>
    %c10 = arith.constant 10 : index
    %c0_60 = arith.constant 0 : index
    %c0_61 = arith.constant 0 : index
    %110 = vector.load %arg2[%c10, %c0_60, %c0_61] : memref<35x4x16xf32, #tpu.memory_space<vmem>>, vector<1x4x16xf32>
    %111 = vector.shape_cast %110 : vector<1x4x16xf32> to vector<4x16xf32>
    %112 = vector.shape_cast %111 : vector<4x16xf32> to vector<4x1x16xf32>
    %113 = vector.broadcast %112 : vector<4x1x16xf32> to vector<4x16x16xf32>
    %114 = arith.mulf %109, %113 : vector<4x16x16xf32>
    %115 = arith.addf %106, %114 : vector<4x16x16xf32>
    %116 = vector.extract_strided_slice %108 {offsets = [0, 0, 1], sizes = [4, 16, 16], strides = [1, 1, 1]} : vector<4x16x20xf32> to vector<4x16x16xf32>
    %c11 = arith.constant 11 : index
    %c0_62 = arith.constant 0 : index
    %c0_63 = arith.constant 0 : index
    %117 = vector.load %arg2[%c11, %c0_62, %c0_63] : memref<35x4x16xf32, #tpu.memory_space<vmem>>, vector<1x4x16xf32>
    %118 = vector.shape_cast %117 : vector<1x4x16xf32> to vector<4x16xf32>
    %119 = vector.shape_cast %118 : vector<4x16xf32> to vector<4x1x16xf32>
    %120 = vector.broadcast %119 : vector<4x1x16xf32> to vector<4x16x16xf32>
    %121 = arith.mulf %116, %120 : vector<4x16x16xf32>
    %122 = arith.addf %115, %121 : vector<4x16x16xf32>
    %123 = vector.extract_strided_slice %108 {offsets = [0, 0, 2], sizes = [4, 16, 16], strides = [1, 1, 1]} : vector<4x16x20xf32> to vector<4x16x16xf32>
    %c12 = arith.constant 12 : index
    %c0_64 = arith.constant 0 : index
    %c0_65 = arith.constant 0 : index
    %124 = vector.load %arg2[%c12, %c0_64, %c0_65] : memref<35x4x16xf32, #tpu.memory_space<vmem>>, vector<1x4x16xf32>
    %125 = vector.shape_cast %124 : vector<1x4x16xf32> to vector<4x16xf32>
    %126 = vector.shape_cast %125 : vector<4x16xf32> to vector<4x1x16xf32>
    %127 = vector.broadcast %126 : vector<4x1x16xf32> to vector<4x16x16xf32>
    %128 = arith.mulf %123, %127 : vector<4x16x16xf32>
    %129 = arith.addf %122, %128 : vector<4x16x16xf32>
    %130 = vector.extract_strided_slice %108 {offsets = [0, 0, 3], sizes = [4, 16, 16], strides = [1, 1, 1]} : vector<4x16x20xf32> to vector<4x16x16xf32>
    %c13 = arith.constant 13 : index
    %c0_66 = arith.constant 0 : index
    %c0_67 = arith.constant 0 : index
    %131 = vector.load %arg2[%c13, %c0_66, %c0_67] : memref<35x4x16xf32, #tpu.memory_space<vmem>>, vector<1x4x16xf32>
    %132 = vector.shape_cast %131 : vector<1x4x16xf32> to vector<4x16xf32>
    %133 = vector.shape_cast %132 : vector<4x16xf32> to vector<4x1x16xf32>
    %134 = vector.broadcast %133 : vector<4x1x16xf32> to vector<4x16x16xf32>
    %135 = arith.mulf %130, %134 : vector<4x16x16xf32>
    %136 = arith.addf %129, %135 : vector<4x16x16xf32>
    %137 = vector.extract_strided_slice %108 {offsets = [0, 0, 4], sizes = [4, 16, 16], strides = [1, 1, 1]} : vector<4x16x20xf32> to vector<4x16x16xf32>
    %c14 = arith.constant 14 : index
    %c0_68 = arith.constant 0 : index
    %c0_69 = arith.constant 0 : index
    %138 = vector.load %arg2[%c14, %c0_68, %c0_69] : memref<35x4x16xf32, #tpu.memory_space<vmem>>, vector<1x4x16xf32>
    %139 = vector.shape_cast %138 : vector<1x4x16xf32> to vector<4x16xf32>
    %140 = vector.shape_cast %139 : vector<4x16xf32> to vector<4x1x16xf32>
    %141 = vector.broadcast %140 : vector<4x1x16xf32> to vector<4x16x16xf32>
    %142 = arith.mulf %137, %141 : vector<4x16x16xf32>
    %143 = arith.addf %136, %142 : vector<4x16x16xf32>
    %c0_70 = arith.constant 0 : index
    %c0_71 = arith.constant 0 : index
    %c1_72 = arith.constant 1 : index
    %c0_73 = arith.constant 0 : index
    %144 = vector.load %arg1[%c0_70, %c0_71, %c1_72, %c0_73] : memref<1x4x20x20xf32, #tpu.memory_space<vmem>>, vector<1x4x16x20xf32>
    %145 = vector.shape_cast %144 : vector<1x4x16x20xf32> to vector<4x16x20xf32>
    %146 = vector.extract_strided_slice %145 {offsets = [0, 0, 0], sizes = [4, 16, 16], strides = [1, 1, 1]} : vector<4x16x20xf32> to vector<4x16x16xf32>
    %c15 = arith.constant 15 : index
    %c0_74 = arith.constant 0 : index
    %c0_75 = arith.constant 0 : index
    %147 = vector.load %arg2[%c15, %c0_74, %c0_75] : memref<35x4x16xf32, #tpu.memory_space<vmem>>, vector<1x4x16xf32>
    %148 = vector.shape_cast %147 : vector<1x4x16xf32> to vector<4x16xf32>
    %149 = vector.shape_cast %148 : vector<4x16xf32> to vector<4x1x16xf32>
    %150 = vector.broadcast %149 : vector<4x1x16xf32> to vector<4x16x16xf32>
    %151 = arith.mulf %146, %150 : vector<4x16x16xf32>
    %152 = arith.addf %143, %151 : vector<4x16x16xf32>
    %153 = vector.extract_strided_slice %145 {offsets = [0, 0, 1], sizes = [4, 16, 16], strides = [1, 1, 1]} : vector<4x16x20xf32> to vector<4x16x16xf32>
    %c16 = arith.constant 16 : index
    %c0_76 = arith.constant 0 : index
    %c0_77 = arith.constant 0 : index
    %154 = vector.load %arg2[%c16, %c0_76, %c0_77] : memref<35x4x16xf32, #tpu.memory_space<vmem>>, vector<1x4x16xf32>
    %155 = vector.shape_cast %154 : vector<1x4x16xf32> to vector<4x16xf32>
    %156 = vector.shape_cast %155 : vector<4x16xf32> to vector<4x1x16xf32>
    %157 = vector.broadcast %156 : vector<4x1x16xf32> to vector<4x16x16xf32>
    %158 = arith.mulf %153, %157 : vector<4x16x16xf32>
    %159 = arith.addf %152, %158 : vector<4x16x16xf32>
    %160 = vector.extract_strided_slice %145 {offsets = [0, 0, 2], sizes = [4, 16, 16], strides = [1, 1, 1]} : vector<4x16x20xf32> to vector<4x16x16xf32>
    %c17 = arith.constant 17 : index
    %c0_78 = arith.constant 0 : index
    %c0_79 = arith.constant 0 : index
    %161 = vector.load %arg2[%c17, %c0_78, %c0_79] : memref<35x4x16xf32, #tpu.memory_space<vmem>>, vector<1x4x16xf32>
    %162 = vector.shape_cast %161 : vector<1x4x16xf32> to vector<4x16xf32>
    %163 = vector.shape_cast %162 : vector<4x16xf32> to vector<4x1x16xf32>
    %164 = vector.broadcast %163 : vector<4x1x16xf32> to vector<4x16x16xf32>
    %165 = arith.mulf %160, %164 : vector<4x16x16xf32>
    %166 = arith.addf %159, %165 : vector<4x16x16xf32>
    %167 = vector.extract_strided_slice %145 {offsets = [0, 0, 3], sizes = [4, 16, 16], strides = [1, 1, 1]} : vector<4x16x20xf32> to vector<4x16x16xf32>
    %c18 = arith.constant 18 : index
    %c0_80 = arith.constant 0 : index
    %c0_81 = arith.constant 0 : index
    %168 = vector.load %arg2[%c18, %c0_80, %c0_81] : memref<35x4x16xf32, #tpu.memory_space<vmem>>, vector<1x4x16xf32>
    %169 = vector.shape_cast %168 : vector<1x4x16xf32> to vector<4x16xf32>
    %170 = vector.shape_cast %169 : vector<4x16xf32> to vector<4x1x16xf32>
    %171 = vector.broadcast %170 : vector<4x1x16xf32> to vector<4x16x16xf32>
    %172 = arith.mulf %167, %171 : vector<4x16x16xf32>
    %173 = arith.addf %166, %172 : vector<4x16x16xf32>
    %174 = vector.extract_strided_slice %145 {offsets = [0, 0, 4], sizes = [4, 16, 16], strides = [1, 1, 1]} : vector<4x16x20xf32> to vector<4x16x16xf32>
    %c19 = arith.constant 19 : index
    %c0_82 = arith.constant 0 : index
    %c0_83 = arith.constant 0 : index
    %175 = vector.load %arg2[%c19, %c0_82, %c0_83] : memref<35x4x16xf32, #tpu.memory_space<vmem>>, vector<1x4x16xf32>
    %176 = vector.shape_cast %175 : vector<1x4x16xf32> to vector<4x16xf32>
    %177 = vector.shape_cast %176 : vector<4x16xf32> to vector<4x1x16xf32>
    %178 = vector.broadcast %177 : vector<4x1x16xf32> to vector<4x16x16xf32>
    %179 = arith.mulf %174, %178 : vector<4x16x16xf32>
    %180 = arith.addf %173, %179 : vector<4x16x16xf32>
    %c0_84 = arith.constant 0 : index
    %c0_85 = arith.constant 0 : index
    %c2_86 = arith.constant 2 : index
    %c0_87 = arith.constant 0 : index
    %181 = vector.load %arg1[%c0_84, %c0_85, %c2_86, %c0_87] : memref<1x4x20x20xf32, #tpu.memory_space<vmem>>, vector<1x4x16x20xf32>
    %182 = vector.shape_cast %181 : vector<1x4x16x20xf32> to vector<4x16x20xf32>
    %183 = vector.extract_strided_slice %182 {offsets = [0, 0, 0], sizes = [4, 16, 16], strides = [1, 1, 1]} : vector<4x16x20xf32> to vector<4x16x16xf32>
    %c20 = arith.constant 20 : index
    %c0_88 = arith.constant 0 : index
    %c0_89 = arith.constant 0 : index
    %184 = vector.load %arg2[%c20, %c0_88, %c0_89] : memref<35x4x16xf32, #tpu.memory_space<vmem>>, vector<1x4x16xf32>
    %185 = vector.shape_cast %184 : vector<1x4x16xf32> to vector<4x16xf32>
    %186 = vector.shape_cast %185 : vector<4x16xf32> to vector<4x1x16xf32>
    %187 = vector.broadcast %186 : vector<4x1x16xf32> to vector<4x16x16xf32>
    %188 = arith.mulf %183, %187 : vector<4x16x16xf32>
    %189 = arith.addf %180, %188 : vector<4x16x16xf32>
    %190 = vector.extract_strided_slice %182 {offsets = [0, 0, 1], sizes = [4, 16, 16], strides = [1, 1, 1]} : vector<4x16x20xf32> to vector<4x16x16xf32>
    %c21 = arith.constant 21 : index
    %c0_90 = arith.constant 0 : index
    %c0_91 = arith.constant 0 : index
    %191 = vector.load %arg2[%c21, %c0_90, %c0_91] : memref<35x4x16xf32, #tpu.memory_space<vmem>>, vector<1x4x16xf32>
    %192 = vector.shape_cast %191 : vector<1x4x16xf32> to vector<4x16xf32>
    %193 = vector.shape_cast %192 : vector<4x16xf32> to vector<4x1x16xf32>
    %194 = vector.broadcast %193 : vector<4x1x16xf32> to vector<4x16x16xf32>
    %195 = arith.mulf %190, %194 : vector<4x16x16xf32>
    %196 = arith.addf %189, %195 : vector<4x16x16xf32>
    %197 = vector.extract_strided_slice %182 {offsets = [0, 0, 2], sizes = [4, 16, 16], strides = [1, 1, 1]} : vector<4x16x20xf32> to vector<4x16x16xf32>
    %c22 = arith.constant 22 : index
    %c0_92 = arith.constant 0 : index
    %c0_93 = arith.constant 0 : index
    %198 = vector.load %arg2[%c22, %c0_92, %c0_93] : memref<35x4x16xf32, #tpu.memory_space<vmem>>, vector<1x4x16xf32>
    %199 = vector.shape_cast %198 : vector<1x4x16xf32> to vector<4x16xf32>
    %200 = vector.shape_cast %199 : vector<4x16xf32> to vector<4x1x16xf32>
    %201 = vector.broadcast %200 : vector<4x1x16xf32> to vector<4x16x16xf32>
    %202 = arith.mulf %197, %201 : vector<4x16x16xf32>
    %203 = arith.addf %196, %202 : vector<4x16x16xf32>
    %204 = vector.extract_strided_slice %182 {offsets = [0, 0, 3], sizes = [4, 16, 16], strides = [1, 1, 1]} : vector<4x16x20xf32> to vector<4x16x16xf32>
    %c23 = arith.constant 23 : index
    %c0_94 = arith.constant 0 : index
    %c0_95 = arith.constant 0 : index
    %205 = vector.load %arg2[%c23, %c0_94, %c0_95] : memref<35x4x16xf32, #tpu.memory_space<vmem>>, vector<1x4x16xf32>
    %206 = vector.shape_cast %205 : vector<1x4x16xf32> to vector<4x16xf32>
    %207 = vector.shape_cast %206 : vector<4x16xf32> to vector<4x1x16xf32>
    %208 = vector.broadcast %207 : vector<4x1x16xf32> to vector<4x16x16xf32>
    %209 = arith.mulf %204, %208 : vector<4x16x16xf32>
    %210 = arith.addf %203, %209 : vector<4x16x16xf32>
    %211 = vector.extract_strided_slice %182 {offsets = [0, 0, 4], sizes = [4, 16, 16], strides = [1, 1, 1]} : vector<4x16x20xf32> to vector<4x16x16xf32>
    %c24 = arith.constant 24 : index
    %c0_96 = arith.constant 0 : index
    %c0_97 = arith.constant 0 : index
    %212 = vector.load %arg2[%c24, %c0_96, %c0_97] : memref<35x4x16xf32, #tpu.memory_space<vmem>>, vector<1x4x16xf32>
    %213 = vector.shape_cast %212 : vector<1x4x16xf32> to vector<4x16xf32>
    %214 = vector.shape_cast %213 : vector<4x16xf32> to vector<4x1x16xf32>
    %215 = vector.broadcast %214 : vector<4x1x16xf32> to vector<4x16x16xf32>
    %216 = arith.mulf %211, %215 : vector<4x16x16xf32>
    %217 = arith.addf %210, %216 : vector<4x16x16xf32>
    %c0_98 = arith.constant 0 : index
    %c0_99 = arith.constant 0 : index
    %c3_100 = arith.constant 3 : index
    %c0_101 = arith.constant 0 : index
    %218 = vector.load %arg1[%c0_98, %c0_99, %c3_100, %c0_101] : memref<1x4x20x20xf32, #tpu.memory_space<vmem>>, vector<1x4x16x20xf32>
    %219 = vector.shape_cast %218 : vector<1x4x16x20xf32> to vector<4x16x20xf32>
    %220 = vector.extract_strided_slice %219 {offsets = [0, 0, 0], sizes = [4, 16, 16], strides = [1, 1, 1]} : vector<4x16x20xf32> to vector<4x16x16xf32>
    %c25 = arith.constant 25 : index
    %c0_102 = arith.constant 0 : index
    %c0_103 = arith.constant 0 : index
    %221 = vector.load %arg2[%c25, %c0_102, %c0_103] : memref<35x4x16xf32, #tpu.memory_space<vmem>>, vector<1x4x16xf32>
    %222 = vector.shape_cast %221 : vector<1x4x16xf32> to vector<4x16xf32>
    %223 = vector.shape_cast %222 : vector<4x16xf32> to vector<4x1x16xf32>
    %224 = vector.broadcast %223 : vector<4x1x16xf32> to vector<4x16x16xf32>
    %225 = arith.mulf %220, %224 : vector<4x16x16xf32>
    %226 = arith.addf %217, %225 : vector<4x16x16xf32>
    %227 = vector.extract_strided_slice %219 {offsets = [0, 0, 1], sizes = [4, 16, 16], strides = [1, 1, 1]} : vector<4x16x20xf32> to vector<4x16x16xf32>
    %c26 = arith.constant 26 : index
    %c0_104 = arith.constant 0 : index
    %c0_105 = arith.constant 0 : index
    %228 = vector.load %arg2[%c26, %c0_104, %c0_105] : memref<35x4x16xf32, #tpu.memory_space<vmem>>, vector<1x4x16xf32>
    %229 = vector.shape_cast %228 : vector<1x4x16xf32> to vector<4x16xf32>
    %230 = vector.shape_cast %229 : vector<4x16xf32> to vector<4x1x16xf32>
    %231 = vector.broadcast %230 : vector<4x1x16xf32> to vector<4x16x16xf32>
    %232 = arith.mulf %227, %231 : vector<4x16x16xf32>
    %233 = arith.addf %226, %232 : vector<4x16x16xf32>
    %234 = vector.extract_strided_slice %219 {offsets = [0, 0, 2], sizes = [4, 16, 16], strides = [1, 1, 1]} : vector<4x16x20xf32> to vector<4x16x16xf32>
    %c27 = arith.constant 27 : index
    %c0_106 = arith.constant 0 : index
    %c0_107 = arith.constant 0 : index
    %235 = vector.load %arg2[%c27, %c0_106, %c0_107] : memref<35x4x16xf32, #tpu.memory_space<vmem>>, vector<1x4x16xf32>
    %236 = vector.shape_cast %235 : vector<1x4x16xf32> to vector<4x16xf32>
    %237 = vector.shape_cast %236 : vector<4x16xf32> to vector<4x1x16xf32>
    %238 = vector.broadcast %237 : vector<4x1x16xf32> to vector<4x16x16xf32>
    %239 = arith.mulf %234, %238 : vector<4x16x16xf32>
    %240 = arith.addf %233, %239 : vector<4x16x16xf32>
    %241 = vector.extract_strided_slice %219 {offsets = [0, 0, 3], sizes = [4, 16, 16], strides = [1, 1, 1]} : vector<4x16x20xf32> to vector<4x16x16xf32>
    %c28 = arith.constant 28 : index
    %c0_108 = arith.constant 0 : index
    %c0_109 = arith.constant 0 : index
    %242 = vector.load %arg2[%c28, %c0_108, %c0_109] : memref<35x4x16xf32, #tpu.memory_space<vmem>>, vector<1x4x16xf32>
    %243 = vector.shape_cast %242 : vector<1x4x16xf32> to vector<4x16xf32>
    %244 = vector.shape_cast %243 : vector<4x16xf32> to vector<4x1x16xf32>
    %245 = vector.broadcast %244 : vector<4x1x16xf32> to vector<4x16x16xf32>
    %246 = arith.mulf %241, %245 : vector<4x16x16xf32>
    %247 = arith.addf %240, %246 : vector<4x16x16xf32>
    %248 = vector.extract_strided_slice %219 {offsets = [0, 0, 4], sizes = [4, 16, 16], strides = [1, 1, 1]} : vector<4x16x20xf32> to vector<4x16x16xf32>
    %c29 = arith.constant 29 : index
    %c0_110 = arith.constant 0 : index
    %c0_111 = arith.constant 0 : index
    %249 = vector.load %arg2[%c29, %c0_110, %c0_111] : memref<35x4x16xf32, #tpu.memory_space<vmem>>, vector<1x4x16xf32>
    %250 = vector.shape_cast %249 : vector<1x4x16xf32> to vector<4x16xf32>
    %251 = vector.shape_cast %250 : vector<4x16xf32> to vector<4x1x16xf32>
    %252 = vector.broadcast %251 : vector<4x1x16xf32> to vector<4x16x16xf32>
    %253 = arith.mulf %248, %252 : vector<4x16x16xf32>
    %254 = arith.addf %247, %253 : vector<4x16x16xf32>
    %c0_112 = arith.constant 0 : index
    %c0_113 = arith.constant 0 : index
    %c4_114 = arith.constant 4 : index
    %c0_115 = arith.constant 0 : index
    %255 = vector.load %arg1[%c0_112, %c0_113, %c4_114, %c0_115] : memref<1x4x20x20xf32, #tpu.memory_space<vmem>>, vector<1x4x16x20xf32>
    %256 = vector.shape_cast %255 : vector<1x4x16x20xf32> to vector<4x16x20xf32>
    %257 = vector.extract_strided_slice %256 {offsets = [0, 0, 0], sizes = [4, 16, 16], strides = [1, 1, 1]} : vector<4x16x20xf32> to vector<4x16x16xf32>
    %c30 = arith.constant 30 : index
    %c0_116 = arith.constant 0 : index
    %c0_117 = arith.constant 0 : index
    %258 = vector.load %arg2[%c30, %c0_116, %c0_117] : memref<35x4x16xf32, #tpu.memory_space<vmem>>, vector<1x4x16xf32>
    %259 = vector.shape_cast %258 : vector<1x4x16xf32> to vector<4x16xf32>
    %260 = vector.shape_cast %259 : vector<4x16xf32> to vector<4x1x16xf32>
    %261 = vector.broadcast %260 : vector<4x1x16xf32> to vector<4x16x16xf32>
    %262 = arith.mulf %257, %261 : vector<4x16x16xf32>
    %263 = arith.addf %254, %262 : vector<4x16x16xf32>
    %264 = vector.extract_strided_slice %256 {offsets = [0, 0, 1], sizes = [4, 16, 16], strides = [1, 1, 1]} : vector<4x16x20xf32> to vector<4x16x16xf32>
    %c31 = arith.constant 31 : index
    %c0_118 = arith.constant 0 : index
    %c0_119 = arith.constant 0 : index
    %265 = vector.load %arg2[%c31, %c0_118, %c0_119] : memref<35x4x16xf32, #tpu.memory_space<vmem>>, vector<1x4x16xf32>
    %266 = vector.shape_cast %265 : vector<1x4x16xf32> to vector<4x16xf32>
    %267 = vector.shape_cast %266 : vector<4x16xf32> to vector<4x1x16xf32>
    %268 = vector.broadcast %267 : vector<4x1x16xf32> to vector<4x16x16xf32>
    %269 = arith.mulf %264, %268 : vector<4x16x16xf32>
    %270 = arith.addf %263, %269 : vector<4x16x16xf32>
    %271 = vector.extract_strided_slice %256 {offsets = [0, 0, 2], sizes = [4, 16, 16], strides = [1, 1, 1]} : vector<4x16x20xf32> to vector<4x16x16xf32>
    %c32 = arith.constant 32 : index
    %c0_120 = arith.constant 0 : index
    %c0_121 = arith.constant 0 : index
    %272 = vector.load %arg2[%c32, %c0_120, %c0_121] : memref<35x4x16xf32, #tpu.memory_space<vmem>>, vector<1x4x16xf32>
    %273 = vector.shape_cast %272 : vector<1x4x16xf32> to vector<4x16xf32>
    %274 = vector.shape_cast %273 : vector<4x16xf32> to vector<4x1x16xf32>
    %275 = vector.broadcast %274 : vector<4x1x16xf32> to vector<4x16x16xf32>
    %276 = arith.mulf %271, %275 : vector<4x16x16xf32>
    %277 = arith.addf %270, %276 : vector<4x16x16xf32>
    %278 = vector.extract_strided_slice %256 {offsets = [0, 0, 3], sizes = [4, 16, 16], strides = [1, 1, 1]} : vector<4x16x20xf32> to vector<4x16x16xf32>
    %c33 = arith.constant 33 : index
    %c0_122 = arith.constant 0 : index
    %c0_123 = arith.constant 0 : index
    %279 = vector.load %arg2[%c33, %c0_122, %c0_123] : memref<35x4x16xf32, #tpu.memory_space<vmem>>, vector<1x4x16xf32>
    %280 = vector.shape_cast %279 : vector<1x4x16xf32> to vector<4x16xf32>
    %281 = vector.shape_cast %280 : vector<4x16xf32> to vector<4x1x16xf32>
    %282 = vector.broadcast %281 : vector<4x1x16xf32> to vector<4x16x16xf32>
    %283 = arith.mulf %278, %282 : vector<4x16x16xf32>
    %284 = arith.addf %277, %283 : vector<4x16x16xf32>
    %285 = vector.extract_strided_slice %256 {offsets = [0, 0, 4], sizes = [4, 16, 16], strides = [1, 1, 1]} : vector<4x16x20xf32> to vector<4x16x16xf32>
    %c34 = arith.constant 34 : index
    %c0_124 = arith.constant 0 : index
    %c0_125 = arith.constant 0 : index
    %286 = vector.load %arg2[%c34, %c0_124, %c0_125] : memref<35x4x16xf32, #tpu.memory_space<vmem>>, vector<1x4x16xf32>
    %287 = vector.shape_cast %286 : vector<1x4x16xf32> to vector<4x16xf32>
    %288 = vector.shape_cast %287 : vector<4x16xf32> to vector<4x1x16xf32>
    %289 = vector.broadcast %288 : vector<4x1x16xf32> to vector<4x16x16xf32>
    %290 = arith.mulf %285, %289 : vector<4x16x16xf32>
    %291 = arith.addf %284, %290 : vector<4x16x16xf32>
    %cst_126 = arith.constant 0.000000e+00 : f32
    %cst_127 = arith.constant 6.000000e+00 : f32
    %292 = vector.broadcast %cst_126 : f32 to vector<4x16x16xf32>
    %293 = arith.maximumf %292, %291 : vector<4x16x16xf32>
    %294 = vector.broadcast %cst_127 : f32 to vector<4x16x16xf32>
    %295 = arith.minimumf %294, %293 : vector<4x16x16xf32>
    %c0_128 = arith.constant 0 : index
    %c0_129 = arith.constant 0 : index
    %c0_130 = arith.constant 0 : index
    %c0_131 = arith.constant 0 : index
    %296 = vector.load %arg6[%c0_128, %c0_129, %c0_130, %c0_131] : memref<1x4x16x16xf32, #tpu.memory_space<vmem>>, vector<1x4x16x16xf32>
    %297 = vector.shape_cast %296 : vector<1x4x16x16xf32> to vector<4x16x16xf32>
    %298 = vector.shape_cast %295 : vector<4x16x16xf32> to vector<1x4x16x16xf32>
    tpu.vector_store %arg6[%c0_128, %c0_129, %c0_130, %c0_131], %298 {strides = array<i32>} : memref<1x4x16x16xf32, #tpu.memory_space<vmem>>, vector<1x4x16x16xf32>,
    return
  }
  func.func @transform_0(%arg0: i32) -> (i32, i32, i32, i32) {
    %c0_i32 = arith.constant 0 : i32
    %c0_i32_0 = arith.constant 0 : i32
    %c0_i32_1 = arith.constant 0 : i32
    %c0_i32_2 = arith.constant 0 : i32
    return %arg0, %c0_i32, %c0_i32_0, %c0_i32_1 : i32, i32, i32, i32
  }
  func.func @transform_1(%arg0: i32) -> (i32, i32, i32) {
    %c0_i32 = arith.constant 0 : i32
    %c0_i32_0 = arith.constant 0 : i32
    %c0_i32_1 = arith.constant 0 : i32
    %c0_i32_2 = arith.constant 0 : i32
    return %c0_i32, %c0_i32_0, %c0_i32_1 : i32, i32, i32
  }
  func.func @transform_2(%arg0: i32) -> (i32, i32, i32) {
    %c0_i32 = arith.constant 0 : i32
    %c0_i32_0 = arith.constant 0 : i32
    %c0_i32_1 = arith.constant 0 : i32
    %c0_i32_2 = arith.constant 0 : i32
    return %c0_i32, %c0_i32_0, %c0_i32_1 : i32, i32, i32
  }
  func.func @transform_3(%arg0: i32) -> (i32, i32, i32, i32) {
    %c0_i32 = arith.constant 0 : i32
    %c0_i32_0 = arith.constant 0 : i32
    %c0_i32_1 = arith.constant 0 : i32
    %c0_i32_2 = arith.constant 0 : i32
    return %arg0, %c0_i32, %c0_i32_0, %c0_i32_1 : i32, i32, i32, i32
  }
  func.func @transform_4(%arg0: i32) -> (i32, i32, i32, i32) {
    %c0_i32 = arith.constant 0 : i32
    %c0_i32_0 = arith.constant 0 : i32
    %c0_i32_1 = arith.constant 0 : i32
    %c0_i32_2 = arith.constant 0 : i32
    return %arg0, %c0_i32, %c0_i32_0, %c0_i32_1 : i32, i32, i32, i32
  }
  func.func @transform_5(%arg0: i32) -> (i32, i32, i32, i32) {
    %c0_i32 = arith.constant 0 : i32
    %c0_i32_0 = arith.constant 0 : i32
    %c0_i32_1 = arith.constant 0 : i32
    %c0_i32_2 = arith.constant 0 : i32
    return %arg0, %c0_i32, %c0_i32_0, %c0_i32_1 : i32, i32, i32, i32
  }
}

</mosaic_0001>

<llo_original>
// kernel: tpu_custom_call.1
$region0: #{tpu_custom_call.1}
  #allocation0 [shape = 'u32[]', space=smem, size = 0x4, offset = 0x4, fixed_abs, tag = 'smem constant byte address 0x4 - core index']
  #allocation1 [shape = 'u32[144,128]{1,0:T(1,128)}', space=vmem, size = 0x12000, scoped, tag = 'internal scratch']
  %s0 = inlined_call_operand.vmem [shape: f32[2,4,20,20], index: 0, kind: input, shape index: {}]
  %s1 = inlined_call_operand.vmem [shape: f32[35,4,16], index: 1, kind: input, shape index: {}]
  %s2 = inlined_call_operand.vmem [shape: f32[3,4,16], index: 2, kind: input, shape index: {}]
  %s3 = inlined_call_operand.hbm [shape: f32[2,4,16,16], index: 3, kind: output, shape index: {0}]
  %s4 = inlined_call_operand.hbm [shape: f32[2,4,16,16], index: 4, kind: output, shape index: {1}]
  %s5 = inlined_call_operand.hbm [shape: f32[2,4,16,16], index: 5, kind: output, shape index: {2}]
  %6 = xla_tuple %s3, %s4, %s5
  %s7 = sld [smem:[#allocation0]]
  $region61: #{tpu_custom_call.1} parent=0
    _
  %s9 = ssub.s32 1, %s7
  %s10 = scalar_select 0, %s9, %s7
  $region1: #{tpu_custom_call.1} parent=0
    #allocation2 [shape = 'u8[65536]{0}', space=vmem, size = 0x10000, scoped, tag = 'output window, operand 0']
    #allocation3 [shape = 's32[2]{0}', space=sflag, size = 0x8, scoped, tag = 'scoped memory for tpu_custom_call.1']
    #allocation4 [shape = 'u8[65536]{0}', space=vmem, size = 0x10000, scoped, tag = 'output window, operand 1']
    #allocation5 [shape = 's32[2]{0}', space=sflag, size = 0x8, scoped, tag = 'scoped memory for tpu_custom_call.1']
    #allocation6 [shape = 'u8[65536]{0}', space=vmem, size = 0x10000, scoped, tag = 'output window, operand 2']
    %11 = vsyncpa [#allocation3], 0
    %s12 = scalar_lea.sflag [#allocation3], 1
    %13 = vsyncpa %s12, 0
    %14 = vsyncpa [#allocation5], 0
    %s15 = scalar_lea.sflag [#allocation5], 1
    %16 = vsyncpa %s15, 0
    loop: start=0, step=1, limit=4
    $region2: #{tpu_custom_call.1} parent=1 // loop_pre_header
      _
    $region3: #{tpu_custom_call.1} parent=1 // loop_header
      %s18 = sphi 0, %s22
      %p19 = scmp.ge.s32.totalorder %s18, 4
      %s28 = sphi 0, %s30
      %s31 = sphi 0, %s28
      %s32 = sphi 0, %s31
      %s48 = sphi 0, %s32
      %s52 = sphi 0, %s52
      %s54 = sphi 0, %s52
      %s55 = sphi 0, %s54
      %s69 = sphi 0, %s55
      %s73 = sphi 0, %s73
      %s75 = sphi 0, %s73
      %s76 = sphi 0, %s75
      %s90 = sphi 0, %s76
      %s96 = sphi 0, %s98
      %s99 = sphi 0, %s96
      %s100 = sphi 0, %s99
      %s116 = sphi 0, %s100
      %s122 = sphi 0, %s124
      %s125 = sphi 0, %s122
      %s126 = sphi 0, %s125
      %s142 = sphi 0, %s126
      %s148 = sphi 0, %s150
      %s151 = sphi 0, %s148
      %s152 = sphi 0, %s151
      %s168 = sphi 0, %s152
    $region4: #{tpu_custom_call.1} parent=1 // loop_header_branch
      %21 = sbr.rel (%p19) target = $region8
    $region5: #{tpu_custom_call.1} parent=1 // loop_body
      %s23 = ssub.s32 %s18, 1
      %s24 = ssub.s32 %s18, 2
      %s25 = sadd.s32 %s18, 1
      %s26 = ssub.s32 %s18, %s25
      %p27 = scmp.eq.s32.totalorder %s26, 0
      %s29 = sadd.s32 %s28, 1
      %s30 = scalar_select %p27, %s28, %s29
      %p33 = pneg %p27
      %p34 = scmp.eq.s32.totalorder %s18, 1
      %p35 = por %p33, %p34
      %p36 = scmp.ne.s32.totalorder %s28, %s31
      %p37 = scmp.eq.s32.totalorder %s18, 0
      %p38 = por %p36, %p37
      %p39 = scmp.ne.s32.totalorder %s28, %s31
      %p40 = scmp.eq.s32.totalorder %s23, 1
      %p41 = por %p39, %p40
      %p42 = scmp.ne.s32.totalorder %s31, %s32
      %p43 = scmp.eq.s32.totalorder %s23, 0
      %p44 = por %p42, %p43
      %p45 = scmp.ne.s32.totalorder %s31, %s32
      %p46 = scmp.eq.s32.totalorder %s24, 1
      %p47 = por %p45, %p46
      %p49 = scmp.ne.s32.totalorder %s32, %s48
      %p50 = scmp.eq.s32.totalorder %s24, 0
      %p51 = por %p49, %p50
      %s53 = sadd.s32 %s52, 1
      %p56 = scmp.eq.s32.totalorder %s18, 1
      %p57 = scmp.ne.s32.totalorder %s52, %s54
      %p58 = scmp.eq.s32.totalorder %s18, 0
      %p59 = por %p57, %p58
      %p60 = scmp.ne.s32.totalorder %s52, %s54
      %p61 = scmp.eq.s32.totalorder %s23, 1
      %p62 = por %p60, %p61
      %p63 = scmp.ne.s32.totalorder %s54, %s55
      %p64 = scmp.eq.s32.totalorder %s23, 0
      %p65 = por %p63, %p64
      %p66 = scmp.ne.s32.totalorder %s54, %s55
      %p67 = scmp.eq.s32.totalorder %s24, 1
      %p68 = por %p66, %p67
      %p70 = scmp.ne.s32.totalorder %s55, %s69
      %p71 = scmp.eq.s32.totalorder %s24, 0
      %p72 = por %p70, %p71
      %s74 = sadd.s32 %s73, 1
      %p77 = scmp.eq.s32.totalorder %s18, 1
      %p78 = scmp.ne.s32.totalorder %s73, %s75
      %p79 = scmp.eq.s32.totalorder %s18, 0
      %p80 = por %p78, %p79
      %p81 = scmp.ne.s32.totalorder %s73, %s75
      %p82 = scmp.eq.s32.totalorder %s23, 1
      %p83 = por %p81, %p82
      %p84 = scmp.ne.s32.totalorder %s75, %s76
      %p85 = scmp.eq.s32.totalorder %s23, 0
      %p86 = por %p84, %p85
      %p87 = scmp.ne.s32.totalorder %s75, %s76
      %p88 = scmp.eq.s32.totalorder %s24, 1
      %p89 = por %p87, %p88
      %p91 = scmp.ne.s32.totalorder %s76, %s90
      %p92 = scmp.eq.s32.totalorder %s24, 0
      %p93 = por %p91, %p92
      %s94 = ssub.s32 %s18, %s25
      %p95 = scmp.eq.s32.totalorder %s94, 0
      %s97 = sadd.s32 %s96, 1
      %s98 = scalar_select %p95, %s96, %s97
      %p101 = pneg %p95
      %p102 = scmp.eq.s32.totalorder %s18, 1
      %p103 = por %p101, %p102
      %p104 = scmp.ne.s32.totalorder %s96, %s99
      %p105 = scmp.eq.s32.totalorder %s18, 0
      %p106 = por %p104, %p105
      %p107 = scmp.ne.s32.totalorder %s96, %s99
      %p108 = scmp.eq.s32.totalorder %s23, 1
      %p109 = por %p107, %p108
      %p110 = scmp.ne.s32.totalorder %s99, %s100
      %p111 = scmp.eq.s32.totalorder %s23, 0
      %p112 = por %p110, %p111
      %p113 = scmp.ne.s32.totalorder %s99, %s100
      %p114 = scmp.eq.s32.totalorder %s24, 1
      %p115 = por %p113, %p114
      %p117 = scmp.ne.s32.totalorder %s100, %s116
      %p118 = scmp.eq.s32.totalorder %s24, 0
      %p119 = por %p117, %p118
      %s120 = ssub.s32 %s18, %s25
      %p121 = scmp.eq.s32.totalorder %s120, 0
      %s123 = sadd.s32 %s122, 1
      %s124 = scalar_select %p121, %s122, %s123
      %p127 = pneg %p121
      %p128 = scmp.eq.s32.totalorder %s18, 1
      %p129 = por %p127, %p128
      %p130 = scmp.ne.s32.totalorder %s122, %s125
      %p131 = scmp.eq.s32.totalorder %s18, 0
      %p132 = por %p130, %p131
      %p133 = scmp.ne.s32.totalorder %s122, %s125
      %p134 = scmp.eq.s32.totalorder %s23, 1
      %p135 = por %p133, %p134
      %p136 = scmp.ne.s32.totalorder %s125, %s126
      %p137 = scmp.eq.s32.totalorder %s23, 0
      %p138 = por %p136, %p137
      %p139 = scmp.ne.s32.totalorder %s125, %s126
      %p140 = scmp.eq.s32.totalorder %s24, 1
      %p141 = por %p139, %p140
      %p143 = scmp.ne.s32.totalorder %s126, %s142
      %p144 = scmp.eq.s32.totalorder %s24, 0
      %p145 = por %p143, %p144
      %s146 = ssub.s32 %s18, %s25
      %p147 = scmp.eq.s32.totalorder %s146, 0
      %s149 = sadd.s32 %s148, 1
      %s150 = scalar_select %p147, %s148, %s149
      %p153 = pneg %p147
      %p154 = scmp.eq.s32.totalorder %s18, 1
      %p155 = por %p153, %p154
      %p156 = scmp.ne.s32.totalorder %s148, %s151
      %p157 = scmp.eq.s32.totalorder %s18, 0
      %p158 = por %p156, %p157
      %p159 = scmp.ne.s32.totalorder %s148, %s151
      %p160 = scmp.eq.s32.totalorder %s23, 1
      %p161 = por %p159, %p160
      %p162 = scmp.ne.s32.totalorder %s151, %s152
      %p163 = scmp.eq.s32.totalorder %s23, 0
      %p164 = por %p162, %p163
      %p165 = scmp.ne.s32.totalorder %s151, %s152
      %p166 = scmp.eq.s32.totalorder %s24, 1
      %p167 = por %p165, %p166
      %p169 = scmp.ne.s32.totalorder %s152, %s168
      %p170 = scmp.eq.s32.totalorder %s24, 0
      %p171 = por %p169, %p170
      %p172 = scmp.le.s32.totalorder 1, %s18
      %p173 = scmp.lt.s32.totalorder %s18, 3
      %p174 = pnand %p172, %p173
      %p175 = pneg %p174
      // Predicated region
      $region9: #{tpu_custom_call.1} parent=5 // pred_check
        _
      $region10: #{tpu_custom_call.1} parent=5 // pred_check_branch
        %177 = sbr.rel (%p174) target = $region12
      $region11: #{tpu_custom_call.1} parent=5 // pred_region
        %s178 = ssub.s32 %s18, 1
        // Predicated region
        $region13: #{tpu_custom_call.1} parent=11 // pred_check
          %p179 = pneg %p65
        $region14: #{tpu_custom_call.1} parent=11 // pred_check_branch
          %181 = sbr.rel (%p179) target = $region16
        $region15: #{tpu_custom_call.1} parent=11 // pred_region
          _
        $region16: #{tpu_custom_call.1} parent=11 // pred_fallthru
          _
        // Predicated region
        $region17: #{tpu_custom_call.1} parent=11 // pred_check
          %p182 = pneg %p86
        $region18: #{tpu_custom_call.1} parent=11 // pred_check_branch
          %184 = sbr.rel (%p182) target = $region20
        $region19: #{tpu_custom_call.1} parent=11 // pred_region
          _
        $region20: #{tpu_custom_call.1} parent=11 // pred_fallthru
          _
      $region12: #{tpu_custom_call.1} parent=5 // pred_fallthru
        _
      %p185 = scmp.lt.s32.totalorder %s18, 2
      // Predicated region
      $region21: #{tpu_custom_call.1} parent=5 // pred_check
        %p186 = pneg %p185
      $region22: #{tpu_custom_call.1} parent=5 // pred_check_branch
        %188 = sbr.rel (%p186) target = $region24
      $region23: #{tpu_custom_call.1} parent=5 // pred_region
        // Predicated region
        $region25: #{tpu_custom_call.1} parent=23 // pred_check
          %p189 = pneg %p38
        $region26: #{tpu_custom_call.1} parent=23 // pred_check_branch
          %191 = sbr.rel (%p189) target = $region28
        $region27: #{tpu_custom_call.1} parent=23 // pred_region
          %p192 = scmp.lt.s32.totalorder %s18, 1
          %s193 = scalar_select %p192, %s18, 1
          %s194 = smul.addr %s193, 12
          %s195 = smul.addr %s194, 8
          %s196 = scalar_lea.vmem %s0, %s195
        $region28: #{tpu_custom_call.1} parent=23 // pred_fallthru
          _
      $region24: #{tpu_custom_call.1} parent=5 // pred_fallthru
        _
      %p197 = scmp.le.s32.totalorder 1, %s18
      %p198 = scmp.lt.s32.totalorder %s18, 3
      %p199 = pnand %p197, %p198
      %p200 = pneg %p199
      // Predicated region
      $region29: #{tpu_custom_call.1} parent=5 // pred_check
        _
      $region30: #{tpu_custom_call.1} parent=5 // pred_check_branch
        %202 = sbr.rel (%p199) target = $region32
      $region31: #{tpu_custom_call.1} parent=5 // pred_region
        %s203 = ssub.s32 %s18, 1
        %p204 = scmp.lt.s32.totalorder %s23, 1
        %s205 = scalar_select %p204, %s23, 1
        %s206 = smul.addr %s205, 12
        %s207 = smul.addr %s206, 8
        %s208 = scalar_lea.vmem %s0, %s207
        %p209 = pneg %p44
        %p210 = pneg %p41
        %p211 = pneg %p65
        %p212 = pneg %p62
        %p213 = pneg %p86
        %p214 = pneg %p83
        %p215 = pneg %p112
        %p216 = pneg %p109
        %s217 = sand.u32 %s99, 1
        %s218 = scalar_lea.sflag [#allocation3], %s217
        %s219 = sand.u32 %s99, 1
        %s220 = smul.addr %s219, 64
        %s221 = scalar_lea.vmem [#allocation2], %s220
        %p222 = pneg %p138
        %p223 = pneg %p135
        %s224 = sand.u32 %s23, 1
        %s225 = scalar_lea.sflag [#allocation5], %s224
        %s226 = sand.u32 %s125, 1
        %s227 = smul.addr %s226, 64
        %s228 = scalar_lea.vmem [#allocation4], %s227
        %p229 = pneg %p164
        %p230 = pneg %p161
        %s231 = sand.u32 %s23, 1
        %s232 = scalar_lea.sflag [#allocation5], %s231
        %s233 = sand.u32 %s151, 1
        %s234 = smul.addr %s233, 64
        %s235 = scalar_lea.vmem [#allocation6], %s234
        %p236 = scmp.lt.s32.totalorder %s23, 1
        %s237 = scalar_select %p236, %s23, 1
        %s238 = smul.addr %s237, 12
        %s239 = smul.addr %s238, 8
        %s240 = scalar_lea.vmem %s0, %s239
        %v241 = vld [vmem:[%s2] sm:$0xf]
        %v244 = vunpack.c.l.s4 1966171168
        %v245 = vunpack.c.0.s8 %v244
        %v246 = vlaneseq
        %v247 = vshrl.u32 %v246, 7
        %v248 = vsub.s32 %v245, %v247
        %v249 = vrot.slane %v241, %v248
        %v250 = vcombine.high %v249, %v249
        %v252 = vunpack.c.l.s4 1966171168
        %v253 = vunpack.c.0.s8 %v252
        %v254 = vlaneseq
        %v255 = vshrl.u32 %v254, 7
        %v256 = vsub.s32 %v253, %v255
        %v257 = vrot.slane %v249, %v256
        %v259 = vunpack.c.l.s4 1966171168
        %v260 = vunpack.c.0.s8 %v259
        %v261 = vlaneseq
        %v262 = vshrl.u32 %v261, 7
        %v263 = vsub.s32 %v260, %v262
        %v264 = vrot.slane %v250, %v263
        %v265 = vcombine.high %v257, %v257
        %v266 = vcombine.high %v264, %v264
        %v267 = vlaneseq
        %v268 = vshrl.u32 %v267, 7
        %v269 = vsub.s32 0, %v268
        %v270 = vrot.slane %v257, %v269
        %v271 = vlaneseq
        %v272 = vshrl.u32 %v271, 7
        %v273 = vsub.s32 0, %v272
        %v274 = vrot.slane %v264, %v273
        %v275 = vlaneseq
        %v276 = vshrl.u32 %v275, 7
        %v277 = vsub.s32 0, %v276
        %v278 = vrot.slane %v265, %v277
        %v279 = vlaneseq
        %v280 = vshrl.u32 %v279, 7
        %v281 = vsub.s32 0, %v280
        %v282 = vrot.slane %v266, %v281
        %v287 = vld [vmem:[%s240 + $0x2] sm:$0xff]
        %v288 = vld [vmem:[%s240 + $0xa] sm:$0xff]
        %v289 = vld [vmem:[%s240 + $0x1a] sm:$0xff]
        %v290 = vld [vmem:[%s240 + $0x22] sm:$0xff]
        %v291 = vld [vmem:[%s240 + $0x32] sm:$0xff]
        %v292 = vld [vmem:[%s240 + $0x3a] sm:$0xff]
        %v293 = vld [vmem:[%s240 + $0x4a] sm:$0xff]
        %v294 = vld [vmem:[%s240 + $0x52] sm:$0xff]
        %v295 = vld [vmem:[%s1] sm:$0xf]
        %v298 = vunpack.c.l.s4 1966171168
        %v299 = vunpack.c.0.s8 %v298
        %v300 = vlaneseq
        %v301 = vshrl.u32 %v300, 7
        %v302 = vsub.s32 %v299, %v301
        %v303 = vrot.slane %v295, %v302
        %v304 = vcombine.high %v303, %v303
        %v306 = vunpack.c.l.s4 1966171168
        %v307 = vunpack.c.0.s8 %v306
        %v308 = vlaneseq
        %v309 = vshrl.u32 %v308, 7
        %v310 = vsub.s32 %v307, %v309
        %v311 = vrot.slane %v303, %v310
        %v313 = vunpack.c.l.s4 1966171168
        %v314 = vunpack.c.0.s8 %v313
        %v315 = vlaneseq
        %v316 = vshrl.u32 %v315, 7
        %v317 = vsub.s32 %v314, %v316
        %v318 = vrot.slane %v304, %v317
        %v319 = vcombine.high %v311, %v311
        %v320 = vcombine.high %v318, %v318
        %v321 = vlaneseq
        %v322 = vshrl.u32 %v321, 7
        %v323 = vsub.s32 0, %v322
        %v324 = vrot.slane %v311, %v323
        %v325 = vlaneseq
        %v326 = vshrl.u32 %v325, 7
        %v327 = vsub.s32 0, %v326
        %v328 = vrot.slane %v318, %v327
        %v329 = vlaneseq
        %v330 = vshrl.u32 %v329, 7
        %v331 = vsub.s32 0, %v330
        %v332 = vrot.slane %v319, %v331
        %v333 = vlaneseq
        %v334 = vshrl.u32 %v333, 7
        %v335 = vsub.s32 0, %v334
        %v336 = vrot.slane %v320, %v335
        %337 = vrot.lane.b32.xlu0 %v324, 2
        %v338 = vpop.permute.xlu0 %337
        %339 = vrot.lane.b32.xlu0 %v328, 2
        %v340 = vpop.permute.xlu0 %339
        %341 = vrot.lane.b32.xlu0 %v332, 2
        %v342 = vpop.permute.xlu0 %341
        %343 = vrot.lane.b32.xlu0 %v336, 2
        %v344 = vpop.permute.xlu0 %343
        %v349 = vmul.f32 %v287, %v338
        %v350 = vmul.f32 %v288, %v338
        %v351 = vmul.f32 %v289, %v340
        %v352 = vmul.f32 %v290, %v340
        %v353 = vmul.f32 %v291, %v342
        %v354 = vmul.f32 %v292, %v342
        %v355 = vmul.f32 %v293, %v344
        %v356 = vmul.f32 %v294, %v344
        %365 = vrot.lane.b32.xlu0 %v349, 126
        %v366 = vpop.permute.xlu0 %365
        %367 = vrot.lane.b32.xlu0 %v350, 126
        %v368 = vpop.permute.xlu0 %367
        %369 = vrot.lane.b32.xlu0 %v351, 126
        %v370 = vpop.permute.xlu0 %369
        %371 = vrot.lane.b32.xlu0 %v352, 126
        %v372 = vpop.permute.xlu0 %371
        %373 = vrot.lane.b32.xlu0 %v353, 126
        %v374 = vpop.permute.xlu0 %373
        %375 = vrot.lane.b32.xlu0 %v354, 126
        %v376 = vpop.permute.xlu0 %375
        %377 = vrot.lane.b32.xlu0 %v355, 126
        %v378 = vpop.permute.xlu0 %377
        %379 = vrot.lane.b32.xlu0 %v356, 126
        %v380 = vpop.permute.xlu0 %379
        %v389 = vadd.f32 %v270, %v366
        %v390 = vadd.f32 %v270, %v368
        %v391 = vadd.f32 %v274, %v370
        %v392 = vadd.f32 %v274, %v372
        %v393 = vadd.f32 %v278, %v374
        %v394 = vadd.f32 %v278, %v376
        %v395 = vadd.f32 %v282, %v378
        %v396 = vadd.f32 %v282, %v380
        %v397 = vmax.f32 %v389, 0.0
        %v398 = vmax.f32 %v390, 0.0
        %v399 = vmax.f32 %v391, 0.0
        %v400 = vmax.f32 %v392, 0.0
        %v401 = vmax.f32 %v393, 0.0
        %v402 = vmax.f32 %v394, 0.0
        %v403 = vmax.f32 %v395, 0.0
        %v404 = vmax.f32 %v396, 0.0
        %v405 = vmin.f32 %v397, 6.0
        %v406 = vmin.f32 %v398, 6.0
        %v407 = vmin.f32 %v399, 6.0
        %v408 = vmin.f32 %v400, 6.0
        %v409 = vmin.f32 %v401, 6.0
        %v410 = vmin.f32 %v402, 6.0
        %v411 = vmin.f32 %v403, 6.0
        %v412 = vmin.f32 %v404, 6.0
        %vm413 = vcmask 130048
        %414 = vst.msk [vmem:[%s221] sm:$0xff] %vm413, %v405
        %415 = vst.msk [vmem:[%s221 + $0x8] sm:$0xff] %vm413, %v406
        %416 = vst.msk [vmem:[%s221 + $0x10] sm:$0xff] %vm413, %v407
        %417 = vst.msk [vmem:[%s221 + $0x18] sm:$0xff] %vm413, %v408
        %418 = vst.msk [vmem:[%s221 + $0x20] sm:$0xff] %vm413, %v409
        %419 = vst.msk [vmem:[%s221 + $0x28] sm:$0xff] %vm413, %v410
        %420 = vst.msk [vmem:[%s221 + $0x30] sm:$0xff] %vm413, %v411
        %421 = vst.msk [vmem:[%s221 + $0x38] sm:$0xff] %vm413, %v412
        %s422 = scalar_lea.vmem %s2, 4
        %v423 = vld [vmem:[%s422] sm:$0xf]
        %v426 = vunpack.c.l.s4 1966171168
        %v427 = vunpack.c.0.s8 %v426
        %v428 = vlaneseq
        %v429 = vshrl.u32 %v428, 7
        %v430 = vsub.s32 %v427, %v429
        %v431 = vrot.slane %v423, %v430
        %v432 = vcombine.high %v431, %v431
        %v434 = vunpack.c.l.s4 1966171168
        %v435 = vunpack.c.0.s8 %v434
        %v436 = vlaneseq
        %v437 = vshrl.u32 %v436, 7
        %v438 = vsub.s32 %v435, %v437
        %v439 = vrot.slane %v431, %v438
        %v441 = vunpack.c.l.s4 1966171168
        %v442 = vunpack.c.0.s8 %v441
        %v443 = vlaneseq
        %v444 = vshrl.u32 %v443, 7
        %v445 = vsub.s32 %v442, %v444
        %v446 = vrot.slane %v432, %v445
        %v447 = vcombine.high %v439, %v439
        %v448 = vcombine.high %v446, %v446
        %v449 = vlaneseq
        %v450 = vshrl.u32 %v449, 7
        %v451 = vsub.s32 0, %v450
        %v452 = vrot.slane %v439, %v451
        %v453 = vlaneseq
        %v454 = vshrl.u32 %v453, 7
        %v455 = vsub.s32 0, %v454
        %v456 = vrot.slane %v446, %v455
        %v457 = vlaneseq
        %v458 = vshrl.u32 %v457, 7
        %v459 = vsub.s32 0, %v458
        %v460 = vrot.slane %v447, %v459
        %v461 = vlaneseq
        %v462 = vshrl.u32 %v461, 7
        %v463 = vsub.s32 0, %v462
        %v464 = vrot.slane %v448, %v463
        %v469 = vld [vmem:[%s240 + $0x1] sm:$0xff]
        %v470 = vld [vmem:[%s240 + $0x9] sm:$0xff]
        %v471 = vld [vmem:[%s240 + $0x19] sm:$0xff]
        %v472 = vld [vmem:[%s240 + $0x21] sm:$0xff]
        %v473 = vld [vmem:[%s240 + $0x31] sm:$0xff]
        %v474 = vld [vmem:[%s240 + $0x39] sm:$0xff]
        %v475 = vld [vmem:[%s240 + $0x49] sm:$0xff]
        %v476 = vld [vmem:[%s240 + $0x51] sm:$0xff]
        %s477 = scalar_lea.vmem %s1, 4
        %v478 = vld [vmem:[%s477] sm:$0xf]
        %v481 = vunpack.c.l.s4 1966171168
        %v482 = vunpack.c.0.s8 %v481
        %v483 = vlaneseq
        %v484 = vshrl.u32 %v483, 7
        %v485 = vsub.s32 %v482, %v484
        %v486 = vrot.slane %v478, %v485
        %v487 = vcombine.high %v486, %v486
        %v489 = vunpack.c.l.s4 1966171168
        %v490 = vunpack.c.0.s8 %v489
        %v491 = vlaneseq
        %v492 = vshrl.u32 %v491, 7
        %v493 = vsub.s32 %v490, %v492
        %v494 = vrot.slane %v486, %v493
        %v496 = vunpack.c.l.s4 1966171168
        %v497 = vunpack.c.0.s8 %v496
        %v498 = vlaneseq
        %v499 = vshrl.u32 %v498, 7
        %v500 = vsub.s32 %v497, %v499
        %v501 = vrot.slane %v487, %v500
        %v502 = vcombine.high %v494, %v494
        %v503 = vcombine.high %v501, %v501
        %v504 = vlaneseq
        %v505 = vshrl.u32 %v504, 7
        %v506 = vsub.s32 0, %v505
        %v507 = vrot.slane %v494, %v506
        %v508 = vlaneseq
        %v509 = vshrl.u32 %v508, 7
        %v510 = vsub.s32 0, %v509
        %v511 = vrot.slane %v501, %v510
        %v512 = vlaneseq
        %v513 = vshrl.u32 %v512, 7
        %v514 = vsub.s32 0, %v513
        %v515 = vrot.slane %v502, %v514
        %v516 = vlaneseq
        %v517 = vshrl.u32 %v516, 7
        %v518 = vsub.s32 0, %v517
        %v519 = vrot.slane %v503, %v518
        %520 = vrot.lane.b32.xlu0 %v507, 1
        %v521 = vpop.permute.xlu0 %520
        %522 = vrot.lane.b32.xlu0 %v511, 1
        %v523 = vpop.permute.xlu0 %522
        %524 = vrot.lane.b32.xlu0 %v515, 1
        %v525 = vpop.permute.xlu0 %524
        %526 = vrot.lane.b32.xlu0 %v519, 1
        %v527 = vpop.permute.xlu0 %526
        %v532 = vmul.f32 %v469, %v521
        %v533 = vmul.f32 %v470, %v521
        %v534 = vmul.f32 %v471, %v523
        %v535 = vmul.f32 %v472, %v523
        %v536 = vmul.f32 %v473, %v525
        %v537 = vmul.f32 %v474, %v525
        %v538 = vmul.f32 %v475, %v527
        %v539 = vmul.f32 %v476, %v527
        %548 = vrot.lane.b32.xlu0 %v532, 127
        %v549 = vpop.permute.xlu0 %548
        %550 = vrot.lane.b32.xlu0 %v533, 127
        %v551 = vpop.permute.xlu0 %550
        %552 = vrot.lane.b32.xlu0 %v534, 127
        %v553 = vpop.permute.xlu0 %552
        %554 = vrot.lane.b32.xlu0 %v535, 127
        %v555 = vpop.permute.xlu0 %554
        %556 = vrot.lane.b32.xlu0 %v536, 127
        %v557 = vpop.permute.xlu0 %556
        %558 = vrot.lane.b32.xlu0 %v537, 127
        %v559 = vpop.permute.xlu0 %558
        %560 = vrot.lane.b32.xlu0 %v538, 127
        %v561 = vpop.permute.xlu0 %560
        %562 = vrot.lane.b32.xlu0 %v539, 127
        %v563 = vpop.permute.xlu0 %562
        %v572 = vadd.f32 %v452, %v549
        %v573 = vadd.f32 %v452, %v551
        %v574 = vadd.f32 %v456, %v553
        %v575 = vadd.f32 %v456, %v555
        %v576 = vadd.f32 %v460, %v557
        %v577 = vadd.f32 %v460, %v559
        %v578 = vadd.f32 %v464, %v561
        %v579 = vadd.f32 %v464, %v563
        %s580 = scalar_lea.vmem %s1, 8
        %v581 = vld [vmem:[%s580] sm:$0xf]
        %v584 = vunpack.c.l.s4 1966171168
        %v585 = vunpack.c.0.s8 %v584
        %v586 = vlaneseq
        %v587 = vshrl.u32 %v586, 7
        %v588 = vsub.s32 %v585, %v587
        %v589 = vrot.slane %v581, %v588
        %v590 = vcombine.high %v589, %v589
        %v592 = vunpack.c.l.s4 1966171168
        %v593 = vunpack.c.0.s8 %v592
        %v594 = vlaneseq
        %v595 = vshrl.u32 %v594, 7
        %v596 = vsub.s32 %v593, %v595
        %v597 = vrot.slane %v589, %v596
        %v599 = vunpack.c.l.s4 1966171168
        %v600 = vunpack.c.0.s8 %v599
        %v601 = vlaneseq
        %v602 = vshrl.u32 %v601, 7
        %v603 = vsub.s32 %v600, %v602
        %v604 = vrot.slane %v590, %v603
        %v605 = vcombine.high %v597, %v597
        %v606 = vcombine.high %v604, %v604
        %v607 = vlaneseq
        %v608 = vshrl.u32 %v607, 7
        %v609 = vsub.s32 0, %v608
        %v610 = vrot.slane %v597, %v609
        %v611 = vlaneseq
        %v612 = vshrl.u32 %v611, 7
        %v613 = vsub.s32 0, %v612
        %v614 = vrot.slane %v604, %v613
        %v615 = vlaneseq
        %v616 = vshrl.u32 %v615, 7
        %v617 = vsub.s32 0, %v616
        %v618 = vrot.slane %v605, %v617
        %v619 = vlaneseq
        %v620 = vshrl.u32 %v619, 7
        %v621 = vsub.s32 0, %v620
        %v622 = vrot.slane %v606, %v621
        %623 = vrot.lane.b32.xlu0 %v610, 2
        %v624 = vpop.permute.xlu0 %623
        %625 = vrot.lane.b32.xlu0 %v614, 2
        %v626 = vpop.permute.xlu0 %625
        %627 = vrot.lane.b32.xlu0 %v618, 2
        %v628 = vpop.permute.xlu0 %627
        %629 = vrot.lane.b32.xlu0 %v622, 2
        %v630 = vpop.permute.xlu0 %629
        %v635 = vmul.f32 %v469, %v624
        %v636 = vmul.f32 %v470, %v624
        %v637 = vmul.f32 %v471, %v626
        %v638 = vmul.f32 %v472, %v626
        %v639 = vmul.f32 %v473, %v628
        %v640 = vmul.f32 %v474, %v628
        %v641 = vmul.f32 %v475, %v630
        %v642 = vmul.f32 %v476, %v630
        %651 = vrot.lane.b32.xlu0 %v635, 126
        %v652 = vpop.permute.xlu0 %651
        %653 = vrot.lane.b32.xlu0 %v636, 126
        %v654 = vpop.permute.xlu0 %653
        %655 = vrot.lane.b32.xlu0 %v637, 126
        %v656 = vpop.permute.xlu0 %655
        %657 = vrot.lane.b32.xlu0 %v638, 126
        %v658 = vpop.permute.xlu0 %657
        %659 = vrot.lane.b32.xlu0 %v639, 126
        %v660 = vpop.permute.xlu0 %659
        %661 = vrot.lane.b32.xlu0 %v640, 126
        %v662 = vpop.permute.xlu0 %661
        %663 = vrot.lane.b32.xlu0 %v641, 126
        %v664 = vpop.permute.xlu0 %663
        %665 = vrot.lane.b32.xlu0 %v642, 126
        %v666 = vpop.permute.xlu0 %665
        %v675 = vadd.f32 %v572, %v652
        %v676 = vadd.f32 %v573, %v654
        %v677 = vadd.f32 %v574, %v656
        %v678 = vadd.f32 %v575, %v658
        %v679 = vadd.f32 %v576, %v660
        %v680 = vadd.f32 %v577, %v662
        %v681 = vadd.f32 %v578, %v664
        %v682 = vadd.f32 %v579, %v666
        %s683 = scalar_lea.vmem %s1, 12
        %v684 = vld [vmem:[%s683] sm:$0xf]
        %v687 = vunpack.c.l.s4 1966171168
        %v688 = vunpack.c.0.s8 %v687
        %v689 = vlaneseq
        %v690 = vshrl.u32 %v689, 7
        %v691 = vsub.s32 %v688, %v690
        %v692 = vrot.slane %v684, %v691
        %v693 = vcombine.high %v692, %v692
        %v695 = vunpack.c.l.s4 1966171168
        %v696 = vunpack.c.0.s8 %v695
        %v697 = vlaneseq
        %v698 = vshrl.u32 %v697, 7
        %v699 = vsub.s32 %v696, %v698
        %v700 = vrot.slane %v692, %v699
        %v702 = vunpack.c.l.s4 1966171168
        %v703 = vunpack.c.0.s8 %v702
        %v704 = vlaneseq
        %v705 = vshrl.u32 %v704, 7
        %v706 = vsub.s32 %v703, %v705
        %v707 = vrot.slane %v693, %v706
        %v708 = vcombine.high %v700, %v700
        %v709 = vcombine.high %v707, %v707
        %v710 = vlaneseq
        %v711 = vshrl.u32 %v710, 7
        %v712 = vsub.s32 0, %v711
        %v713 = vrot.slane %v700, %v712
        %v714 = vlaneseq
        %v715 = vshrl.u32 %v714, 7
        %v716 = vsub.s32 0, %v715
        %v717 = vrot.slane %v707, %v716
        %v718 = vlaneseq
        %v719 = vshrl.u32 %v718, 7
        %v720 = vsub.s32 0, %v719
        %v721 = vrot.slane %v708, %v720
        %v722 = vlaneseq
        %v723 = vshrl.u32 %v722, 7
        %v724 = vsub.s32 0, %v723
        %v725 = vrot.slane %v709, %v724
        %726 = vrot.lane.b32.xlu0 %v713, 3
        %v727 = vpop.permute.xlu0 %726
        %728 = vrot.lane.b32.xlu0 %v717, 3
        %v729 = vpop.permute.xlu0 %728
        %730 = vrot.lane.b32.xlu0 %v721, 3
        %v731 = vpop.permute.xlu0 %730
        %732 = vrot.lane.b32.xlu0 %v725, 3
        %v733 = vpop.permute.xlu0 %732
        %v738 = vmul.f32 %v469, %v727
        %v739 = vmul.f32 %v470, %v727
        %v740 = vmul.f32 %v471, %v729
        %v741 = vmul.f32 %v472, %v729
        %v742 = vmul.f32 %v473, %v731
        %v743 = vmul.f32 %v474, %v731
        %v744 = vmul.f32 %v475, %v733
        %v745 = vmul.f32 %v476, %v733
        %754 = vrot.lane.b32.xlu0 %v738, 125
        %v755 = vpop.permute.xlu0 %754
        %756 = vrot.lane.b32.xlu0 %v739, 125
        %v757 = vpop.permute.xlu0 %756
        %758 = vrot.lane.b32.xlu0 %v740, 125
        %v759 = vpop.permute.xlu0 %758
        %760 = vrot.lane.b32.xlu0 %v741, 125
        %v761 = vpop.permute.xlu0 %760
        %762 = vrot.lane.b32.xlu0 %v742, 125
        %v763 = vpop.permute.xlu0 %762
        %764 = vrot.lane.b32.xlu0 %v743, 125
        %v765 = vpop.permute.xlu0 %764
        %766 = vrot.lane.b32.xlu0 %v744, 125
        %v767 = vpop.permute.xlu0 %766
        %768 = vrot.lane.b32.xlu0 %v745, 125
        %v769 = vpop.permute.xlu0 %768
        %v778 = vadd.f32 %v675, %v755
        %v779 = vadd.f32 %v676, %v757
        %v780 = vadd.f32 %v677, %v759
        %v781 = vadd.f32 %v678, %v761
        %v782 = vadd.f32 %v679, %v763
        %v783 = vadd.f32 %v680, %v765
        %v784 = vadd.f32 %v681, %v767
        %v785 = vadd.f32 %v682, %v769
        %v786 = vld [vmem:[%s240 + $0x2] sm:$0xff]
        %v787 = vld [vmem:[%s240 + $0xa] sm:$0xff]
        %v788 = vld [vmem:[%s240 + $0x1a] sm:$0xff]
        %v789 = vld [vmem:[%s240 + $0x22] sm:$0xff]
        %v790 = vld [vmem:[%s240 + $0x32] sm:$0xff]
        %v791 = vld [vmem:[%s240 + $0x3a] sm:$0xff]
        %v792 = vld [vmem:[%s240 + $0x4a] sm:$0xff]
        %v793 = vld [vmem:[%s240 + $0x52] sm:$0xff]
        %s794 = scalar_lea.vmem %s1, 16
        %v795 = vld [vmem:[%s794] sm:$0xf]
        %v798 = vunpack.c.l.s4 1966171168
        %v799 = vunpack.c.0.s8 %v798
        %v800 = vlaneseq
        %v801 = vshrl.u32 %v800, 7
        %v802 = vsub.s32 %v799, %v801
        %v803 = vrot.slane %v795, %v802
        %v804 = vcombine.high %v803, %v803
        %v806 = vunpack.c.l.s4 1966171168
        %v807 = vunpack.c.0.s8 %v806
        %v808 = vlaneseq
        %v809 = vshrl.u32 %v808, 7
        %v810 = vsub.s32 %v807, %v809
        %v811 = vrot.slane %v803, %v810
        %v813 = vunpack.c.l.s4 1966171168
        %v814 = vunpack.c.0.s8 %v813
        %v815 = vlaneseq
        %v816 = vshrl.u32 %v815, 7
        %v817 = vsub.s32 %v814, %v816
        %v818 = vrot.slane %v804, %v817
        %v819 = vcombine.high %v811, %v811
        %v820 = vcombine.high %v818, %v818
        %v821 = vlaneseq
        %v822 = vshrl.u32 %v821, 7
        %v823 = vsub.s32 0, %v822
        %v824 = vrot.slane %v811, %v823
        %v825 = vlaneseq
        %v826 = vshrl.u32 %v825, 7
        %v827 = vsub.s32 0, %v826
        %v828 = vrot.slane %v818, %v827
        %v829 = vlaneseq
        %v830 = vshrl.u32 %v829, 7
        %v831 = vsub.s32 0, %v830
        %v832 = vrot.slane %v819, %v831
        %v833 = vlaneseq
        %v834 = vshrl.u32 %v833, 7
        %v835 = vsub.s32 0, %v834
        %v836 = vrot.slane %v820, %v835
        %837 = vrot.lane.b32.xlu0 %v824, 1
        %v838 = vpop.permute.xlu0 %837
        %839 = vrot.lane.b32.xlu0 %v828, 1
        %v840 = vpop.permute.xlu0 %839
        %841 = vrot.lane.b32.xlu0 %v832, 1
        %v842 = vpop.permute.xlu0 %841
        %843 = vrot.lane.b32.xlu0 %v836, 1
        %v844 = vpop.permute.xlu0 %843
        %v849 = vmul.f32 %v786, %v838
        %v850 = vmul.f32 %v787, %v838
        %v851 = vmul.f32 %v788, %v840
        %v852 = vmul.f32 %v789, %v840
        %v853 = vmul.f32 %v790, %v842
        %v854 = vmul.f32 %v791, %v842
        %v855 = vmul.f32 %v792, %v844
        %v856 = vmul.f32 %v793, %v844
        %865 = vrot.lane.b32.xlu0 %v849, 127
        %v866 = vpop.permute.xlu0 %865
        %867 = vrot.lane.b32.xlu0 %v850, 127
        %v868 = vpop.permute.xlu0 %867
        %869 = vrot.lane.b32.xlu0 %v851, 127
        %v870 = vpop.permute.xlu0 %869
        %871 = vrot.lane.b32.xlu0 %v852, 127
        %v872 = vpop.permute.xlu0 %871
        %873 = vrot.lane.b32.xlu0 %v853, 127
        %v874 = vpop.permute.xlu0 %873
        %875 = vrot.lane.b32.xlu0 %v854, 127
        %v876 = vpop.permute.xlu0 %875
        %877 = vrot.lane.b32.xlu0 %v855, 127
        %v878 = vpop.permute.xlu0 %877
        %879 = vrot.lane.b32.xlu0 %v856, 127
        %v880 = vpop.permute.xlu0 %879
        %v889 = vadd.f32 %v778, %v866
        %v890 = vadd.f32 %v779, %v868
        %v891 = vadd.f32 %v780, %v870
        %v892 = vadd.f32 %v781, %v872
        %v893 = vadd.f32 %v782, %v874
        %v894 = vadd.f32 %v783, %v876
        %v895 = vadd.f32 %v784, %v878
        %v896 = vadd.f32 %v785, %v880
        %s897 = scalar_lea.vmem %s1, 20
        %v898 = vld [vmem:[%s897] sm:$0xf]
        %v901 = vunpack.c.l.s4 1966171168
        %v902 = vunpack.c.0.s8 %v901
        %v903 = vlaneseq
        %v904 = vshrl.u32 %v903, 7
        %v905 = vsub.s32 %v902, %v904
        %v906 = vrot.slane %v898, %v905
        %v907 = vcombine.high %v906, %v906
        %v909 = vunpack.c.l.s4 1966171168
        %v910 = vunpack.c.0.s8 %v909
        %v911 = vlaneseq
        %v912 = vshrl.u32 %v911, 7
        %v913 = vsub.s32 %v910, %v912
        %v914 = vrot.slane %v906, %v913
        %v916 = vunpack.c.l.s4 1966171168
        %v917 = vunpack.c.0.s8 %v916
        %v918 = vlaneseq
        %v919 = vshrl.u32 %v918, 7
        %v920 = vsub.s32 %v917, %v919
        %v921 = vrot.slane %v907, %v920
        %v922 = vcombine.high %v914, %v914
        %v923 = vcombine.high %v921, %v921
        %v924 = vlaneseq
        %v925 = vshrl.u32 %v924, 7
        %v926 = vsub.s32 0, %v925
        %v927 = vrot.slane %v914, %v926
        %v928 = vlaneseq
        %v929 = vshrl.u32 %v928, 7
        %v930 = vsub.s32 0, %v929
        %v931 = vrot.slane %v921, %v930
        %v932 = vlaneseq
        %v933 = vshrl.u32 %v932, 7
        %v934 = vsub.s32 0, %v933
        %v935 = vrot.slane %v922, %v934
        %v936 = vlaneseq
        %v937 = vshrl.u32 %v936, 7
        %v938 = vsub.s32 0, %v937
        %v939 = vrot.slane %v923, %v938
        %940 = vrot.lane.b32.xlu0 %v927, 2
        %v941 = vpop.permute.xlu0 %940
        %942 = vrot.lane.b32.xlu0 %v931, 2
        %v943 = vpop.permute.xlu0 %942
        %944 = vrot.lane.b32.xlu0 %v935, 2
        %v945 = vpop.permute.xlu0 %944
        %946 = vrot.lane.b32.xlu0 %v939, 2
        %v947 = vpop.permute.xlu0 %946
        %v952 = vmul.f32 %v786, %v941
        %v953 = vmul.f32 %v787, %v941
        %v954 = vmul.f32 %v788, %v943
        %v955 = vmul.f32 %v789, %v943
        %v956 = vmul.f32 %v790, %v945
        %v957 = vmul.f32 %v791, %v945
        %v958 = vmul.f32 %v792, %v947
        %v959 = vmul.f32 %v793, %v947
        %968 = vrot.lane.b32.xlu0 %v952, 126
        %v969 = vpop.permute.xlu0 %968
        %970 = vrot.lane.b32.xlu0 %v953, 126
        %v971 = vpop.permute.xlu0 %970
        %972 = vrot.lane.b32.xlu0 %v954, 126
        %v973 = vpop.permute.xlu0 %972
        %974 = vrot.lane.b32.xlu0 %v955, 126
        %v975 = vpop.permute.xlu0 %974
        %976 = vrot.lane.b32.xlu0 %v956, 126
        %v977 = vpop.permute.xlu0 %976
        %978 = vrot.lane.b32.xlu0 %v957, 126
        %v979 = vpop.permute.xlu0 %978
        %980 = vrot.lane.b32.xlu0 %v958, 126
        %v981 = vpop.permute.xlu0 %980
        %982 = vrot.lane.b32.xlu0 %v959, 126
        %v983 = vpop.permute.xlu0 %982
        %v992 = vadd.f32 %v889, %v969
        %v993 = vadd.f32 %v890, %v971
        %v994 = vadd.f32 %v891, %v973
        %v995 = vadd.f32 %v892, %v975
        %v996 = vadd.f32 %v893, %v977
        %v997 = vadd.f32 %v894, %v979
        %v998 = vadd.f32 %v895, %v981
        %v999 = vadd.f32 %v896, %v983
        %s1000 = scalar_lea.vmem %s1, 24
        %v1001 = vld [vmem:[%s1000] sm:$0xf]
        %v1004 = vunpack.c.l.s4 1966171168
        %v1005 = vunpack.c.0.s8 %v1004
        %v1006 = vlaneseq
        %v1007 = vshrl.u32 %v1006, 7
        %v1008 = vsub.s32 %v1005, %v1007
        %v1009 = vrot.slane %v1001, %v1008
        %v1010 = vcombine.high %v1009, %v1009
        %v1012 = vunpack.c.l.s4 1966171168
        %v1013 = vunpack.c.0.s8 %v1012
        %v1014 = vlaneseq
        %v1015 = vshrl.u32 %v1014, 7
        %v1016 = vsub.s32 %v1013, %v1015
        %v1017 = vrot.slane %v1009, %v1016
        %v1019 = vunpack.c.l.s4 1966171168
        %v1020 = vunpack.c.0.s8 %v1019
        %v1021 = vlaneseq
        %v1022 = vshrl.u32 %v1021, 7
        %v1023 = vsub.s32 %v1020, %v1022
        %v1024 = vrot.slane %v1010, %v1023
        %v1025 = vcombine.high %v1017, %v1017
        %v1026 = vcombine.high %v1024, %v1024
        %v1027 = vlaneseq
        %v1028 = vshrl.u32 %v1027, 7
        %v1029 = vsub.s32 0, %v1028
        %v1030 = vrot.slane %v1017, %v1029
        %v1031 = vlaneseq
        %v1032 = vshrl.u32 %v1031, 7
        %v1033 = vsub.s32 0, %v1032
        %v1034 = vrot.slane %v1024, %v1033
        %v1035 = vlaneseq
        %v1036 = vshrl.u32 %v1035, 7
        %v1037 = vsub.s32 0, %v1036
        %v1038 = vrot.slane %v1025, %v1037
        %v1039 = vlaneseq
        %v1040 = vshrl.u32 %v1039, 7
        %v1041 = vsub.s32 0, %v1040
        %v1042 = vrot.slane %v1026, %v1041
        %1043 = vrot.lane.b32.xlu0 %v1030, 3
        %v1044 = vpop.permute.xlu0 %1043
        %1045 = vrot.lane.b32.xlu0 %v1034, 3
        %v1046 = vpop.permute.xlu0 %1045
        %1047 = vrot.lane.b32.xlu0 %v1038, 3
        %v1048 = vpop.permute.xlu0 %1047
        %1049 = vrot.lane.b32.xlu0 %v1042, 3
        %v1050 = vpop.permute.xlu0 %1049
        %v1055 = vmul.f32 %v786, %v1044
        %v1056 = vmul.f32 %v787, %v1044
        %v1057 = vmul.f32 %v788, %v1046
        %v1058 = vmul.f32 %v789, %v1046
        %v1059 = vmul.f32 %v790, %v1048
        %v1060 = vmul.f32 %v791, %v1048
        %v1061 = vmul.f32 %v792, %v1050
        %v1062 = vmul.f32 %v793, %v1050
        %1071 = vrot.lane.b32.xlu0 %v1055, 125
        %v1072 = vpop.permute.xlu0 %1071
        %1073 = vrot.lane.b32.xlu0 %v1056, 125
        %v1074 = vpop.permute.xlu0 %1073
        %1075 = vrot.lane.b32.xlu0 %v1057, 125
        %v1076 = vpop.permute.xlu0 %1075
        %1077 = vrot.lane.b32.xlu0 %v1058, 125
        %v1078 = vpop.permute.xlu0 %1077
        %1079 = vrot.lane.b32.xlu0 %v1059, 125
        %v1080 = vpop.permute.xlu0 %1079
        %1081 = vrot.lane.b32.xlu0 %v1060, 125
        %v1082 = vpop.permute.xlu0 %1081
        %1083 = vrot.lane.b32.xlu0 %v1061, 125
        %v1084 = vpop.permute.xlu0 %1083
        %1085 = vrot.lane.b32.xlu0 %v1062, 125
        %v1086 = vpop.permute.xlu0 %1085
        %v1095 = vadd.f32 %v992, %v1072
        %v1096 = vadd.f32 %v993, %v1074
        %v1097 = vadd.f32 %v994, %v1076
        %v1098 = vadd.f32 %v995, %v1078
        %v1099 = vadd.f32 %v996, %v1080
        %v1100 = vadd.f32 %v997, %v1082
        %v1101 = vadd.f32 %v998, %v1084
        %v1102 = vadd.f32 %v999, %v1086
        %v1103 = vld [vmem:[%s240 + $0x3] sm:$0xff]
        %v1104 = vld [vmem:[%s240 + $0xb] sm:$0xff]
        %v1105 = vld [vmem:[%s240 + $0x1b] sm:$0xff]
        %v1106 = vld [vmem:[%s240 + $0x23] sm:$0xff]
        %v1107 = vld [vmem:[%s240 + $0x33] sm:$0xff]
        %v1108 = vld [vmem:[%s240 + $0x3b] sm:$0xff]
        %v1109 = vld [vmem:[%s240 + $0x4b] sm:$0xff]
        %v1110 = vld [vmem:[%s240 + $0x53] sm:$0xff]
        %s1111 = scalar_lea.vmem %s1, 28
        %v1112 = vld [vmem:[%s1111] sm:$0xf]
        %v1115 = vunpack.c.l.s4 1966171168
        %v1116 = vunpack.c.0.s8 %v1115
        %v1117 = vlaneseq
        %v1118 = vshrl.u32 %v1117, 7
        %v1119 = vsub.s32 %v1116, %v1118
        %v1120 = vrot.slane %v1112, %v1119
        %v1121 = vcombine.high %v1120, %v1120
        %v1123 = vunpack.c.l.s4 1966171168
        %v1124 = vunpack.c.0.s8 %v1123
        %v1125 = vlaneseq
        %v1126 = vshrl.u32 %v1125, 7
        %v1127 = vsub.s32 %v1124, %v1126
        %v1128 = vrot.slane %v1120, %v1127
        %v1130 = vunpack.c.l.s4 1966171168
        %v1131 = vunpack.c.0.s8 %v1130
        %v1132 = vlaneseq
        %v1133 = vshrl.u32 %v1132, 7
        %v1134 = vsub.s32 %v1131, %v1133
        %v1135 = vrot.slane %v1121, %v1134
        %v1136 = vcombine.high %v1128, %v1128
        %v1137 = vcombine.high %v1135, %v1135
        %v1138 = vlaneseq
        %v1139 = vshrl.u32 %v1138, 7
        %v1140 = vsub.s32 0, %v1139
        %v1141 = vrot.slane %v1128, %v1140
        %v1142 = vlaneseq
        %v1143 = vshrl.u32 %v1142, 7
        %v1144 = vsub.s32 0, %v1143
        %v1145 = vrot.slane %v1135, %v1144
        %v1146 = vlaneseq
        %v1147 = vshrl.u32 %v1146, 7
        %v1148 = vsub.s32 0, %v1147
        %v1149 = vrot.slane %v1136, %v1148
        %v1150 = vlaneseq
        %v1151 = vshrl.u32 %v1150, 7
        %v1152 = vsub.s32 0, %v1151
        %v1153 = vrot.slane %v1137, %v1152
        %1154 = vrot.lane.b32.xlu0 %v1141, 1
        %v1155 = vpop.permute.xlu0 %1154
        %1156 = vrot.lane.b32.xlu0 %v1145, 1
        %v1157 = vpop.permute.xlu0 %1156
        %1158 = vrot.lane.b32.xlu0 %v1149, 1
        %v1159 = vpop.permute.xlu0 %1158
        %1160 = vrot.lane.b32.xlu0 %v1153, 1
        %v1161 = vpop.permute.xlu0 %1160
        %v1166 = vmul.f32 %v1103, %v1155
        %v1167 = vmul.f32 %v1104, %v1155
        %v1168 = vmul.f32 %v1105, %v1157
        %v1169 = vmul.f32 %v1106, %v1157
        %v1170 = vmul.f32 %v1107, %v1159
        %v1171 = vmul.f32 %v1108, %v1159
        %v1172 = vmul.f32 %v1109, %v1161
        %v1173 = vmul.f32 %v1110, %v1161
        %1182 = vrot.lane.b32.xlu0 %v1166, 127
        %v1183 = vpop.permute.xlu0 %1182
        %1184 = vrot.lane.b32.xlu0 %v1167, 127
        %v1185 = vpop.permute.xlu0 %1184
        %1186 = vrot.lane.b32.xlu0 %v1168, 127
        %v1187 = vpop.permute.xlu0 %1186
        %1188 = vrot.lane.b32.xlu0 %v1169, 127
        %v1189 = vpop.permute.xlu0 %1188
        %1190 = vrot.lane.b32.xlu0 %v1170, 127
        %v1191 = vpop.permute.xlu0 %1190
        %1192 = vrot.lane.b32.xlu0 %v1171, 127
        %v1193 = vpop.permute.xlu0 %1192
        %1194 = vrot.lane.b32.xlu0 %v1172, 127
        %v1195 = vpop.permute.xlu0 %1194
        %1196 = vrot.lane.b32.xlu0 %v1173, 127
        %v1197 = vpop.permute.xlu0 %1196
        %v1206 = vadd.f32 %v1095, %v1183
        %v1207 = vadd.f32 %v1096, %v1185
        %v1208 = vadd.f32 %v1097, %v1187
        %v1209 = vadd.f32 %v1098, %v1189
        %v1210 = vadd.f32 %v1099, %v1191
        %v1211 = vadd.f32 %v1100, %v1193
        %v1212 = vadd.f32 %v1101, %v1195
        %v1213 = vadd.f32 %v1102, %v1197
        %s1214 = scalar_lea.vmem %s1, 32
        %v1215 = vld [vmem:[%s1214] sm:$0xf]
        %v1218 = vunpack.c.l.s4 1966171168
        %v1219 = vunpack.c.0.s8 %v1218
        %v1220 = vlaneseq
        %v1221 = vshrl.u32 %v1220, 7
        %v1222 = vsub.s32 %v1219, %v1221
        %v1223 = vrot.slane %v1215, %v1222
        %v1224 = vcombine.high %v1223, %v1223
        %v1226 = vunpack.c.l.s4 1966171168
        %v1227 = vunpack.c.0.s8 %v1226
        %v1228 = vlaneseq
        %v1229 = vshrl.u32 %v1228, 7
        %v1230 = vsub.s32 %v1227, %v1229
        %v1231 = vrot.slane %v1223, %v1230
        %v1233 = vunpack.c.l.s4 1966171168
        %v1234 = vunpack.c.0.s8 %v1233
        %v1235 = vlaneseq
        %v1236 = vshrl.u32 %v1235, 7
        %v1237 = vsub.s32 %v1234, %v1236
        %v1238 = vrot.slane %v1224, %v1237
        %v1239 = vcombine.high %v1231, %v1231
        %v1240 = vcombine.high %v1238, %v1238
        %v1241 = vlaneseq
        %v1242 = vshrl.u32 %v1241, 7
        %v1243 = vsub.s32 0, %v1242
        %v1244 = vrot.slane %v1231, %v1243
        %v1245 = vlaneseq
        %v1246 = vshrl.u32 %v1245, 7
        %v1247 = vsub.s32 0, %v1246
        %v1248 = vrot.slane %v1238, %v1247
        %v1249 = vlaneseq
        %v1250 = vshrl.u32 %v1249, 7
        %v1251 = vsub.s32 0, %v1250
        %v1252 = vrot.slane %v1239, %v1251
        %v1253 = vlaneseq
        %v1254 = vshrl.u32 %v1253, 7
        %v1255 = vsub.s32 0, %v1254
        %v1256 = vrot.slane %v1240, %v1255
        %1257 = vrot.lane.b32.xlu0 %v1244, 2
        %v1258 = vpop.permute.xlu0 %1257
        %1259 = vrot.lane.b32.xlu0 %v1248, 2
        %v1260 = vpop.permute.xlu0 %1259
        %1261 = vrot.lane.b32.xlu0 %v1252, 2
        %v1262 = vpop.permute.xlu0 %1261
        %1263 = vrot.lane.b32.xlu0 %v1256, 2
        %v1264 = vpop.permute.xlu0 %1263
        %v1269 = vmul.f32 %v1103, %v1258
        %v1270 = vmul.f32 %v1104, %v1258
        %v1271 = vmul.f32 %v1105, %v1260
        %v1272 = vmul.f32 %v1106, %v1260
        %v1273 = vmul.f32 %v1107, %v1262
        %v1274 = vmul.f32 %v1108, %v1262
        %v1275 = vmul.f32 %v1109, %v1264
        %v1276 = vmul.f32 %v1110, %v1264
        %1285 = vrot.lane.b32.xlu0 %v1269, 126
        %v1286 = vpop.permute.xlu0 %1285
        %1287 = vrot.lane.b32.xlu0 %v1270, 126
        %v1288 = vpop.permute.xlu0 %1287
        %1289 = vrot.lane.b32.xlu0 %v1271, 126
        %v1290 = vpop.permute.xlu0 %1289
        %1291 = vrot.lane.b32.xlu0 %v1272, 126
        %v1292 = vpop.permute.xlu0 %1291
        %1293 = vrot.lane.b32.xlu0 %v1273, 126
        %v1294 = vpop.permute.xlu0 %1293
        %1295 = vrot.lane.b32.xlu0 %v1274, 126
        %v1296 = vpop.permute.xlu0 %1295
        %1297 = vrot.lane.b32.xlu0 %v1275, 126
        %v1298 = vpop.permute.xlu0 %1297
        %1299 = vrot.lane.b32.xlu0 %v1276, 126
        %v1300 = vpop.permute.xlu0 %1299
        %v1309 = vadd.f32 %v1206, %v1286
        %v1310 = vadd.f32 %v1207, %v1288
        %v1311 = vadd.f32 %v1208, %v1290
        %v1312 = vadd.f32 %v1209, %v1292
        %v1313 = vadd.f32 %v1210, %v1294
        %v1314 = vadd.f32 %v1211, %v1296
        %v1315 = vadd.f32 %v1212, %v1298
        %v1316 = vadd.f32 %v1213, %v1300
        %s1317 = scalar_lea.vmem %s1, 36
        %v1318 = vld [vmem:[%s1317] sm:$0xf]
        %v1321 = vunpack.c.l.s4 1966171168
        %v1322 = vunpack.c.0.s8 %v1321
        %v1323 = vlaneseq
        %v1324 = vshrl.u32 %v1323, 7
        %v1325 = vsub.s32 %v1322, %v1324
        %v1326 = vrot.slane %v1318, %v1325
        %v1327 = vcombine.high %v1326, %v1326
        %v1329 = vunpack.c.l.s4 1966171168
        %v1330 = vunpack.c.0.s8 %v1329
        %v1331 = vlaneseq
        %v1332 = vshrl.u32 %v1331, 7
        %v1333 = vsub.s32 %v1330, %v1332
        %v1334 = vrot.slane %v1326, %v1333
        %v1336 = vunpack.c.l.s4 1966171168
        %v1337 = vunpack.c.0.s8 %v1336
        %v1338 = vlaneseq
        %v1339 = vshrl.u32 %v1338, 7
        %v1340 = vsub.s32 %v1337, %v1339
        %v1341 = vrot.slane %v1327, %v1340
        %v1342 = vcombine.high %v1334, %v1334
        %v1343 = vcombine.high %v1341, %v1341
        %v1344 = vlaneseq
        %v1345 = vshrl.u32 %v1344, 7
        %v1346 = vsub.s32 0, %v1345
        %v1347 = vrot.slane %v1334, %v1346
        %v1348 = vlaneseq
        %v1349 = vshrl.u32 %v1348, 7
        %v1350 = vsub.s32 0, %v1349
        %v1351 = vrot.slane %v1341, %v1350
        %v1352 = vlaneseq
        %v1353 = vshrl.u32 %v1352, 7
        %v1354 = vsub.s32 0, %v1353
        %v1355 = vrot.slane %v1342, %v1354
        %v1356 = vlaneseq
        %v1357 = vshrl.u32 %v1356, 7
        %v1358 = vsub.s32 0, %v1357
        %v1359 = vrot.slane %v1343, %v1358
        %1360 = vrot.lane.b32.xlu0 %v1347, 3
        %v1361 = vpop.permute.xlu0 %1360
        %1362 = vrot.lane.b32.xlu0 %v1351, 3
        %v1363 = vpop.permute.xlu0 %1362
        %1364 = vrot.lane.b32.xlu0 %v1355, 3
        %v1365 = vpop.permute.xlu0 %1364
        %1366 = vrot.lane.b32.xlu0 %v1359, 3
        %v1367 = vpop.permute.xlu0 %1366
        %v1372 = vmul.f32 %v1103, %v1361
        %v1373 = vmul.f32 %v1104, %v1361
        %v1374 = vmul.f32 %v1105, %v1363
        %v1375 = vmul.f32 %v1106, %v1363
        %v1376 = vmul.f32 %v1107, %v1365
        %v1377 = vmul.f32 %v1108, %v1365
        %v1378 = vmul.f32 %v1109, %v1367
        %v1379 = vmul.f32 %v1110, %v1367
        %1388 = vrot.lane.b32.xlu0 %v1372, 125
        %v1389 = vpop.permute.xlu0 %1388
        %1390 = vrot.lane.b32.xlu0 %v1373, 125
        %v1391 = vpop.permute.xlu0 %1390
        %1392 = vrot.lane.b32.xlu0 %v1374, 125
        %v1393 = vpop.permute.xlu0 %1392
        %1394 = vrot.lane.b32.xlu0 %v1375, 125
        %v1395 = vpop.permute.xlu0 %1394
        %1396 = vrot.lane.b32.xlu0 %v1376, 125
        %v1397 = vpop.permute.xlu0 %1396
        %1398 = vrot.lane.b32.xlu0 %v1377, 125
        %v1399 = vpop.permute.xlu0 %1398
        %1400 = vrot.lane.b32.xlu0 %v1378, 125
        %v1401 = vpop.permute.xlu0 %1400
        %1402 = vrot.lane.b32.xlu0 %v1379, 125
        %v1403 = vpop.permute.xlu0 %1402
        %v1412 = vadd.f32 %v1309, %v1389
        %v1413 = vadd.f32 %v1310, %v1391
        %v1414 = vadd.f32 %v1311, %v1393
        %v1415 = vadd.f32 %v1312, %v1395
        %v1416 = vadd.f32 %v1313, %v1397
        %v1417 = vadd.f32 %v1314, %v1399
        %v1418 = vadd.f32 %v1315, %v1401
        %v1419 = vadd.f32 %v1316, %v1403
        %v1420 = vmax.f32 %v1412, 0.0
        %v1421 = vmax.f32 %v1413, 0.0
        %v1422 = vmax.f32 %v1414, 0.0
        %v1423 = vmax.f32 %v1415, 0.0
        %v1424 = vmax.f32 %v1416, 0.0
        %v1425 = vmax.f32 %v1417, 0.0
        %v1426 = vmax.f32 %v1418, 0.0
        %v1427 = vmax.f32 %v1419, 0.0
        %v1428 = vmin.f32 %v1420, 6.0
        %v1429 = vmin.f32 %v1421, 6.0
        %v1430 = vmin.f32 %v1422, 6.0
        %v1431 = vmin.f32 %v1423, 6.0
        %v1432 = vmin.f32 %v1424, 6.0
        %v1433 = vmin.f32 %v1425, 6.0
        %v1434 = vmin.f32 %v1426, 6.0
        %v1435 = vmin.f32 %v1427, 6.0
        %1436 = vst.msk [vmem:[%s228] sm:$0xff] %vm413, %v1428
        %1437 = vst.msk [vmem:[%s228 + $0x8] sm:$0xff] %vm413, %v1429
        %1438 = vst.msk [vmem:[%s228 + $0x10] sm:$0xff] %vm413, %v1430
        %1439 = vst.msk [vmem:[%s228 + $0x18] sm:$0xff] %vm413, %v1431
        %1440 = vst.msk [vmem:[%s228 + $0x20] sm:$0xff] %vm413, %v1432
        %1441 = vst.msk [vmem:[%s228 + $0x28] sm:$0xff] %vm413, %v1433
        %1442 = vst.msk [vmem:[%s228 + $0x30] sm:$0xff] %vm413, %v1434
        %1443 = vst.msk [vmem:[%s228 + $0x38] sm:$0xff] %vm413, %v1435
        %s1444 = scalar_lea.vmem %s2, 8
        %v1445 = vld [vmem:[%s1444] sm:$0xf]
        %v1448 = vunpack.c.l.s4 1966171168
        %v1449 = vunpack.c.0.s8 %v1448
        %v1450 = vlaneseq
        %v1451 = vshrl.u32 %v1450, 7
        %v1452 = vsub.s32 %v1449, %v1451
        %v1453 = vrot.slane %v1445, %v1452
        %v1454 = vcombine.high %v1453, %v1453
        %v1456 = vunpack.c.l.s4 1966171168
        %v1457 = vunpack.c.0.s8 %v1456
        %v1458 = vlaneseq
        %v1459 = vshrl.u32 %v1458, 7
        %v1460 = vsub.s32 %v1457, %v1459
        %v1461 = vrot.slane %v1453, %v1460
        %v1463 = vunpack.c.l.s4 1966171168
        %v1464 = vunpack.c.0.s8 %v1463
        %v1465 = vlaneseq
        %v1466 = vshrl.u32 %v1465, 7
        %v1467 = vsub.s32 %v1464, %v1466
        %v1468 = vrot.slane %v1454, %v1467
        %v1469 = vcombine.high %v1461, %v1461
        %v1470 = vcombine.high %v1468, %v1468
        %v1471 = vlaneseq
        %v1472 = vshrl.u32 %v1471, 7
        %v1473 = vsub.s32 0, %v1472
        %v1474 = vrot.slane %v1461, %v1473
        %v1475 = vlaneseq
        %v1476 = vshrl.u32 %v1475, 7
        %v1477 = vsub.s32 0, %v1476
        %v1478 = vrot.slane %v1468, %v1477
        %v1479 = vlaneseq
        %v1480 = vshrl.u32 %v1479, 7
        %v1481 = vsub.s32 0, %v1480
        %v1482 = vrot.slane %v1469, %v1481
        %v1483 = vlaneseq
        %v1484 = vshrl.u32 %v1483, 7
        %v1485 = vsub.s32 0, %v1484
        %v1486 = vrot.slane %v1470, %v1485
        %v1491 = vld [vmem:[%s240] sm:$0xff]
        %v1492 = vld [vmem:[%s240 + $0x8] sm:$0xff]
        %v1493 = vld [vmem:[%s240 + $0x18] sm:$0xff]
        %v1494 = vld [vmem:[%s240 + $0x20] sm:$0xff]
        %v1495 = vld [vmem:[%s240 + $0x30] sm:$0xff]
        %v1496 = vld [vmem:[%s240 + $0x38] sm:$0xff]
        %v1497 = vld [vmem:[%s240 + $0x48] sm:$0xff]
        %v1498 = vld [vmem:[%s240 + $0x50] sm:$0xff]
        %s1499 = scalar_lea.vmem %s1, 40
        %v1500 = vld [vmem:[%s1499] sm:$0xf]
        %v1503 = vunpack.c.l.s4 1966171168
        %v1504 = vunpack.c.0.s8 %v1503
        %v1505 = vlaneseq
        %v1506 = vshrl.u32 %v1505, 7
        %v1507 = vsub.s32 %v1504, %v1506
        %v1508 = vrot.slane %v1500, %v1507
        %v1509 = vcombine.high %v1508, %v1508
        %v1511 = vunpack.c.l.s4 1966171168
        %v1512 = vunpack.c.0.s8 %v1511
        %v1513 = vlaneseq
        %v1514 = vshrl.u32 %v1513, 7
        %v1515 = vsub.s32 %v1512, %v1514
        %v1516 = vrot.slane %v1508, %v1515
        %v1518 = vunpack.c.l.s4 1966171168
        %v1519 = vunpack.c.0.s8 %v1518
        %v1520 = vlaneseq
        %v1521 = vshrl.u32 %v1520, 7
        %v1522 = vsub.s32 %v1519, %v1521
        %v1523 = vrot.slane %v1509, %v1522
        %v1524 = vcombine.high %v1516, %v1516
        %v1525 = vcombine.high %v1523, %v1523
        %v1526 = vlaneseq
        %v1527 = vshrl.u32 %v1526, 7
        %v1528 = vsub.s32 0, %v1527
        %v1529 = vrot.slane %v1516, %v1528
        %v1530 = vlaneseq
        %v1531 = vshrl.u32 %v1530, 7
        %v1532 = vsub.s32 0, %v1531
        %v1533 = vrot.slane %v1523, %v1532
        %v1534 = vlaneseq
        %v1535 = vshrl.u32 %v1534, 7
        %v1536 = vsub.s32 0, %v1535
        %v1537 = vrot.slane %v1524, %v1536
        %v1538 = vlaneseq
        %v1539 = vshrl.u32 %v1538, 7
        %v1540 = vsub.s32 0, %v1539
        %v1541 = vrot.slane %v1525, %v1540
        %v1546 = vmul.f32 %v1491, %v1529
        %v1547 = vmul.f32 %v1492, %v1529
        %v1548 = vmul.f32 %v1493, %v1533
        %v1549 = vmul.f32 %v1494, %v1533
        %v1550 = vmul.f32 %v1495, %v1537
        %v1551 = vmul.f32 %v1496, %v1537
        %v1552 = vmul.f32 %v1497, %v1541
        %v1553 = vmul.f32 %v1498, %v1541
        %v1554 = vadd.f32 %v1474, %v1546
        %v1555 = vadd.f32 %v1474, %v1547
        %v1556 = vadd.f32 %v1478, %v1548
        %v1557 = vadd.f32 %v1478, %v1549
        %v1558 = vadd.f32 %v1482, %v1550
        %v1559 = vadd.f32 %v1482, %v1551
        %v1560 = vadd.f32 %v1486, %v1552
        %v1561 = vadd.f32 %v1486, %v1553
        %s1562 = scalar_lea.vmem %s1, 44
        %v1563 = vld [vmem:[%s1562] sm:$0xf]
        %v1566 = vunpack.c.l.s4 1966171168
        %v1567 = vunpack.c.0.s8 %v1566
        %v1568 = vlaneseq
        %v1569 = vshrl.u32 %v1568, 7
        %v1570 = vsub.s32 %v1567, %v1569
        %v1571 = vrot.slane %v1563, %v1570
        %v1572 = vcombine.high %v1571, %v1571
        %v1574 = vunpack.c.l.s4 1966171168
        %v1575 = vunpack.c.0.s8 %v1574
        %v1576 = vlaneseq
        %v1577 = vshrl.u32 %v1576, 7
        %v1578 = vsub.s32 %v1575, %v1577
        %v1579 = vrot.slane %v1571, %v1578
        %v1581 = vunpack.c.l.s4 1966171168
        %v1582 = vunpack.c.0.s8 %v1581
        %v1583 = vlaneseq
        %v1584 = vshrl.u32 %v1583, 7
        %v1585 = vsub.s32 %v1582, %v1584
        %v1586 = vrot.slane %v1572, %v1585
        %v1587 = vcombine.high %v1579, %v1579
        %v1588 = vcombine.high %v1586, %v1586
        %v1589 = vlaneseq
        %v1590 = vshrl.u32 %v1589, 7
        %v1591 = vsub.s32 0, %v1590
        %v1592 = vrot.slane %v1579, %v1591
        %v1593 = vlaneseq
        %v1594 = vshrl.u32 %v1593, 7
        %v1595 = vsub.s32 0, %v1594
        %v1596 = vrot.slane %v1586, %v1595
        %v1597 = vlaneseq
        %v1598 = vshrl.u32 %v1597, 7
        %v1599 = vsub.s32 0, %v1598
        %v1600 = vrot.slane %v1587, %v1599
        %v1601 = vlaneseq
        %v1602 = vshrl.u32 %v1601, 7
        %v1603 = vsub.s32 0, %v1602
        %v1604 = vrot.slane %v1588, %v1603
        %1605 = vrot.lane.b32.xlu0 %v1592, 1
        %v1606 = vpop.permute.xlu0 %1605
        %1607 = vrot.lane.b32.xlu0 %v1596, 1
        %v1608 = vpop.permute.xlu0 %1607
        %1609 = vrot.lane.b32.xlu0 %v1600, 1
        %v1610 = vpop.permute.xlu0 %1609
        %1611 = vrot.lane.b32.xlu0 %v1604, 1
        %v1612 = vpop.permute.xlu0 %1611
        %v1617 = vmul.f32 %v1491, %v1606
        %v1618 = vmul.f32 %v1492, %v1606
        %v1619 = vmul.f32 %v1493, %v1608
        %v1620 = vmul.f32 %v1494, %v1608
        %v1621 = vmul.f32 %v1495, %v1610
        %v1622 = vmul.f32 %v1496, %v1610
        %v1623 = vmul.f32 %v1497, %v1612
        %v1624 = vmul.f32 %v1498, %v1612
        %1633 = vrot.lane.b32.xlu0 %v1617, 127
        %v1634 = vpop.permute.xlu0 %1633
        %1635 = vrot.lane.b32.xlu0 %v1618, 127
        %v1636 = vpop.permute.xlu0 %1635
        %1637 = vrot.lane.b32.xlu0 %v1619, 127
        %v1638 = vpop.permute.xlu0 %1637
        %1639 = vrot.lane.b32.xlu0 %v1620, 127
        %v1640 = vpop.permute.xlu0 %1639
        %1641 = vrot.lane.b32.xlu0 %v1621, 127
        %v1642 = vpop.permute.xlu0 %1641
        %1643 = vrot.lane.b32.xlu0 %v1622, 127
        %v1644 = vpop.permute.xlu0 %1643
        %1645 = vrot.lane.b32.xlu0 %v1623, 127
        %v1646 = vpop.permute.xlu0 %1645
        %1647 = vrot.lane.b32.xlu0 %v1624, 127
        %v1648 = vpop.permute.xlu0 %1647
        %v1657 = vadd.f32 %v1554, %v1634
        %v1658 = vadd.f32 %v1555, %v1636
        %v1659 = vadd.f32 %v1556, %v1638
        %v1660 = vadd.f32 %v1557, %v1640
        %v1661 = vadd.f32 %v1558, %v1642
        %v1662 = vadd.f32 %v1559, %v1644
        %v1663 = vadd.f32 %v1560, %v1646
        %v1664 = vadd.f32 %v1561, %v1648
        %s1665 = scalar_lea.vmem %s1, 48
        %v1666 = vld [vmem:[%s1665] sm:$0xf]
        %v1669 = vunpack.c.l.s4 1966171168
        %v1670 = vunpack.c.0.s8 %v1669
        %v1671 = vlaneseq
        %v1672 = vshrl.u32 %v1671, 7
        %v1673 = vsub.s32 %v1670, %v1672
        %v1674 = vrot.slane %v1666, %v1673
        %v1675 = vcombine.high %v1674, %v1674
        %v1677 = vunpack.c.l.s4 1966171168
        %v1678 = vunpack.c.0.s8 %v1677
        %v1679 = vlaneseq
        %v1680 = vshrl.u32 %v1679, 7
        %v1681 = vsub.s32 %v1678, %v1680
        %v1682 = vrot.slane %v1674, %v1681
        %v1684 = vunpack.c.l.s4 1966171168
        %v1685 = vunpack.c.0.s8 %v1684
        %v1686 = vlaneseq
        %v1687 = vshrl.u32 %v1686, 7
        %v1688 = vsub.s32 %v1685, %v1687
        %v1689 = vrot.slane %v1675, %v1688
        %v1690 = vcombine.high %v1682, %v1682
        %v1691 = vcombine.high %v1689, %v1689
        %v1692 = vlaneseq
        %v1693 = vshrl.u32 %v1692, 7
        %v1694 = vsub.s32 0, %v1693
        %v1695 = vrot.slane %v1682, %v1694
        %v1696 = vlaneseq
        %v1697 = vshrl.u32 %v1696, 7
        %v1698 = vsub.s32 0, %v1697
        %v1699 = vrot.slane %v1689, %v1698
        %v1700 = vlaneseq
        %v1701 = vshrl.u32 %v1700, 7
        %v1702 = vsub.s32 0, %v1701
        %v1703 = vrot.slane %v1690, %v1702
        %v1704 = vlaneseq
        %v1705 = vshrl.u32 %v1704, 7
        %v1706 = vsub.s32 0, %v1705
        %v1707 = vrot.slane %v1691, %v1706
        %1708 = vrot.lane.b32.xlu0 %v1695, 2
        %v1709 = vpop.permute.xlu0 %1708
        %1710 = vrot.lane.b32.xlu0 %v1699, 2
        %v1711 = vpop.permute.xlu0 %1710
        %1712 = vrot.lane.b32.xlu0 %v1703, 2
        %v1713 = vpop.permute.xlu0 %1712
        %1714 = vrot.lane.b32.xlu0 %v1707, 2
        %v1715 = vpop.permute.xlu0 %1714
        %v1720 = vmul.f32 %v1491, %v1709
        %v1721 = vmul.f32 %v1492, %v1709
        %v1722 = vmul.f32 %v1493, %v1711
        %v1723 = vmul.f32 %v1494, %v1711
        %v1724 = vmul.f32 %v1495, %v1713
        %v1725 = vmul.f32 %v1496, %v1713
        %v1726 = vmul.f32 %v1497, %v1715
        %v1727 = vmul.f32 %v1498, %v1715
        %1736 = vrot.lane.b32.xlu0 %v1720, 126
        %v1737 = vpop.permute.xlu0 %1736
        %1738 = vrot.lane.b32.xlu0 %v1721, 126
        %v1739 = vpop.permute.xlu0 %1738
        %1740 = vrot.lane.b32.xlu0 %v1722, 126
        %v1741 = vpop.permute.xlu0 %1740
        %1742 = vrot.lane.b32.xlu0 %v1723, 126
        %v1743 = vpop.permute.xlu0 %1742
        %1744 = vrot.lane.b32.xlu0 %v1724, 126
        %v1745 = vpop.permute.xlu0 %1744
        %1746 = vrot.lane.b32.xlu0 %v1725, 126
        %v1747 = vpop.permute.xlu0 %1746
        %1748 = vrot.lane.b32.xlu0 %v1726, 126
        %v1749 = vpop.permute.xlu0 %1748
        %1750 = vrot.lane.b32.xlu0 %v1727, 126
        %v1751 = vpop.permute.xlu0 %1750
        %v1760 = vadd.f32 %v1657, %v1737
        %v1761 = vadd.f32 %v1658, %v1739
        %v1762 = vadd.f32 %v1659, %v1741
        %v1763 = vadd.f32 %v1660, %v1743
        %v1764 = vadd.f32 %v1661, %v1745
        %v1765 = vadd.f32 %v1662, %v1747
        %v1766 = vadd.f32 %v1663, %v1749
        %v1767 = vadd.f32 %v1664, %v1751
        %s1768 = scalar_lea.vmem %s1, 52
        %v1769 = vld [vmem:[%s1768] sm:$0xf]
        %v1772 = vunpack.c.l.s4 1966171168
        %v1773 = vunpack.c.0.s8 %v1772
        %v1774 = vlaneseq
        %v1775 = vshrl.u32 %v1774, 7
        %v1776 = vsub.s32 %v1773, %v1775
        %v1777 = vrot.slane %v1769, %v1776
        %v1778 = vcombine.high %v1777, %v1777
        %v1780 = vunpack.c.l.s4 1966171168
        %v1781 = vunpack.c.0.s8 %v1780
        %v1782 = vlaneseq
        %v1783 = vshrl.u32 %v1782, 7
        %v1784 = vsub.s32 %v1781, %v1783
        %v1785 = vrot.slane %v1777, %v1784
        %v1787 = vunpack.c.l.s4 1966171168
        %v1788 = vunpack.c.0.s8 %v1787
        %v1789 = vlaneseq
        %v1790 = vshrl.u32 %v1789, 7
        %v1791 = vsub.s32 %v1788, %v1790
        %v1792 = vrot.slane %v1778, %v1791
        %v1793 = vcombine.high %v1785, %v1785
        %v1794 = vcombine.high %v1792, %v1792
        %v1795 = vlaneseq
        %v1796 = vshrl.u32 %v1795, 7
        %v1797 = vsub.s32 0, %v1796
        %v1798 = vrot.slane %v1785, %v1797
        %v1799 = vlaneseq
        %v1800 = vshrl.u32 %v1799, 7
        %v1801 = vsub.s32 0, %v1800
        %v1802 = vrot.slane %v1792, %v1801
        %v1803 = vlaneseq
        %v1804 = vshrl.u32 %v1803, 7
        %v1805 = vsub.s32 0, %v1804
        %v1806 = vrot.slane %v1793, %v1805
        %v1807 = vlaneseq
        %v1808 = vshrl.u32 %v1807, 7
        %v1809 = vsub.s32 0, %v1808
        %v1810 = vrot.slane %v1794, %v1809
        %1811 = vrot.lane.b32.xlu0 %v1798, 3
        %v1812 = vpop.permute.xlu0 %1811
        %1813 = vrot.lane.b32.xlu0 %v1802, 3
        %v1814 = vpop.permute.xlu0 %1813
        %1815 = vrot.lane.b32.xlu0 %v1806, 3
        %v1816 = vpop.permute.xlu0 %1815
        %1817 = vrot.lane.b32.xlu0 %v1810, 3
        %v1818 = vpop.permute.xlu0 %1817
        %v1823 = vmul.f32 %v1491, %v1812
        %v1824 = vmul.f32 %v1492, %v1812
        %v1825 = vmul.f32 %v1493, %v1814
        %v1826 = vmul.f32 %v1494, %v1814
        %v1827 = vmul.f32 %v1495, %v1816
        %v1828 = vmul.f32 %v1496, %v1816
        %v1829 = vmul.f32 %v1497, %v1818
        %v1830 = vmul.f32 %v1498, %v1818
        %1839 = vrot.lane.b32.xlu0 %v1823, 125
        %v1840 = vpop.permute.xlu0 %1839
        %1841 = vrot.lane.b32.xlu0 %v1824, 125
        %v1842 = vpop.permute.xlu0 %1841
        %1843 = vrot.lane.b32.xlu0 %v1825, 125
        %v1844 = vpop.permute.xlu0 %1843
        %1845 = vrot.lane.b32.xlu0 %v1826, 125
        %v1846 = vpop.permute.xlu0 %1845
        %1847 = vrot.lane.b32.xlu0 %v1827, 125
        %v1848 = vpop.permute.xlu0 %1847
        %1849 = vrot.lane.b32.xlu0 %v1828, 125
        %v1850 = vpop.permute.xlu0 %1849
        %1851 = vrot.lane.b32.xlu0 %v1829, 125
        %v1852 = vpop.permute.xlu0 %1851
        %1853 = vrot.lane.b32.xlu0 %v1830, 125
        %v1854 = vpop.permute.xlu0 %1853
        %v1863 = vadd.f32 %v1760, %v1840
        %v1864 = vadd.f32 %v1761, %v1842
        %v1865 = vadd.f32 %v1762, %v1844
        %v1866 = vadd.f32 %v1763, %v1846
        %v1867 = vadd.f32 %v1764, %v1848
        %v1868 = vadd.f32 %v1765, %v1850
        %v1869 = vadd.f32 %v1766, %v1852
        %v1870 = vadd.f32 %v1767, %v1854
        %s1871 = scalar_lea.vmem %s1, 56
        %v1872 = vld [vmem:[%s1871] sm:$0xf]
        %v1875 = vunpack.c.l.s4 1966171168
        %v1876 = vunpack.c.0.s8 %v1875
        %v1877 = vlaneseq
        %v1878 = vshrl.u32 %v1877, 7
        %v1879 = vsub.s32 %v1876, %v1878
        %v1880 = vrot.slane %v1872, %v1879
        %v1881 = vcombine.high %v1880, %v1880
        %v1883 = vunpack.c.l.s4 1966171168
        %v1884 = vunpack.c.0.s8 %v1883
        %v1885 = vlaneseq
        %v1886 = vshrl.u32 %v1885, 7
        %v1887 = vsub.s32 %v1884, %v1886
        %v1888 = vrot.slane %v1880, %v1887
        %v1890 = vunpack.c.l.s4 1966171168
        %v1891 = vunpack.c.0.s8 %v1890
        %v1892 = vlaneseq
        %v1893 = vshrl.u32 %v1892, 7
        %v1894 = vsub.s32 %v1891, %v1893
        %v1895 = vrot.slane %v1881, %v1894
        %v1896 = vcombine.high %v1888, %v1888
        %v1897 = vcombine.high %v1895, %v1895
        %v1898 = vlaneseq
        %v1899 = vshrl.u32 %v1898, 7
        %v1900 = vsub.s32 0, %v1899
        %v1901 = vrot.slane %v1888, %v1900
        %v1902 = vlaneseq
        %v1903 = vshrl.u32 %v1902, 7
        %v1904 = vsub.s32 0, %v1903
        %v1905 = vrot.slane %v1895, %v1904
        %v1906 = vlaneseq
        %v1907 = vshrl.u32 %v1906, 7
        %v1908 = vsub.s32 0, %v1907
        %v1909 = vrot.slane %v1896, %v1908
        %v1910 = vlaneseq
        %v1911 = vshrl.u32 %v1910, 7
        %v1912 = vsub.s32 0, %v1911
        %v1913 = vrot.slane %v1897, %v1912
        %1914 = vrot.lane.b32.xlu0 %v1901, 4
        %v1915 = vpop.permute.xlu0 %1914
        %1916 = vrot.lane.b32.xlu0 %v1905, 4
        %v1917 = vpop.permute.xlu0 %1916
        %1918 = vrot.lane.b32.xlu0 %v1909, 4
        %v1919 = vpop.permute.xlu0 %1918
        %1920 = vrot.lane.b32.xlu0 %v1913, 4
        %v1921 = vpop.permute.xlu0 %1920
        %v1926 = vmul.f32 %v1491, %v1915
        %v1927 = vmul.f32 %v1492, %v1915
        %v1928 = vmul.f32 %v1493, %v1917
        %v1929 = vmul.f32 %v1494, %v1917
        %v1930 = vmul.f32 %v1495, %v1919
        %v1931 = vmul.f32 %v1496, %v1919
        %v1932 = vmul.f32 %v1497, %v1921
        %v1933 = vmul.f32 %v1498, %v1921
        %1942 = vrot.lane.b32.xlu0 %v1926, 124
        %v1943 = vpop.permute.xlu0 %1942
        %1944 = vrot.lane.b32.xlu0 %v1927, 124
        %v1945 = vpop.permute.xlu0 %1944
        %1946 = vrot.lane.b32.xlu0 %v1928, 124
        %v1947 = vpop.permute.xlu0 %1946
        %1948 = vrot.lane.b32.xlu0 %v1929, 124
        %v1949 = vpop.permute.xlu0 %1948
        %1950 = vrot.lane.b32.xlu0 %v1930, 124
        %v1951 = vpop.permute.xlu0 %1950
        %1952 = vrot.lane.b32.xlu0 %v1931, 124
        %v1953 = vpop.permute.xlu0 %1952
        %1954 = vrot.lane.b32.xlu0 %v1932, 124
        %v1955 = vpop.permute.xlu0 %1954
        %1956 = vrot.lane.b32.xlu0 %v1933, 124
        %v1957 = vpop.permute.xlu0 %1956
        %v1966 = vadd.f32 %v1863, %v1943
        %v1967 = vadd.f32 %v1864, %v1945
        %v1968 = vadd.f32 %v1865, %v1947
        %v1969 = vadd.f32 %v1866, %v1949
        %v1970 = vadd.f32 %v1867, %v1951
        %v1971 = vadd.f32 %v1868, %v1953
        %v1972 = vadd.f32 %v1869, %v1955
        %v1973 = vadd.f32 %v1870, %v1957
        %v1974 = vld [vmem:[%s240 + $0x1] sm:$0xff]
        %v1975 = vld [vmem:[%s240 + $0x9] sm:$0xff]
        %v1976 = vld [vmem:[%s240 + $0x19] sm:$0xff]
        %v1977 = vld [vmem:[%s240 + $0x21] sm:$0xff]
        %v1978 = vld [vmem:[%s240 + $0x31] sm:$0xff]
        %v1979 = vld [vmem:[%s240 + $0x39] sm:$0xff]
        %v1980 = vld [vmem:[%s240 + $0x49] sm:$0xff]
        %v1981 = vld [vmem:[%s240 + $0x51] sm:$0xff]
        %s1982 = scalar_lea.vmem %s1, 60
        %v1983 = vld [vmem:[%s1982] sm:$0xf]
        %v1986 = vunpack.c.l.s4 1966171168
        %v1987 = vunpack.c.0.s8 %v1986
        %v1988 = vlaneseq
        %v1989 = vshrl.u32 %v1988, 7
        %v1990 = vsub.s32 %v1987, %v1989
        %v1991 = vrot.slane %v1983, %v1990
        %v1992 = vcombine.high %v1991, %v1991
        %v1994 = vunpack.c.l.s4 1966171168
        %v1995 = vunpack.c.0.s8 %v1994
        %v1996 = vlaneseq
        %v1997 = vshrl.u32 %v1996, 7
        %v1998 = vsub.s32 %v1995, %v1997
        %v1999 = vrot.slane %v1991, %v1998
        %v2001 = vunpack.c.l.s4 1966171168
        %v2002 = vunpack.c.0.s8 %v2001
        %v2003 = vlaneseq
        %v2004 = vshrl.u32 %v2003, 7
        %v2005 = vsub.s32 %v2002, %v2004
        %v2006 = vrot.slane %v1992, %v2005
        %v2007 = vcombine.high %v1999, %v1999
        %v2008 = vcombine.high %v2006, %v2006
        %v2009 = vlaneseq
        %v2010 = vshrl.u32 %v2009, 7
        %v2011 = vsub.s32 0, %v2010
        %v2012 = vrot.slane %v1999, %v2011
        %v2013 = vlaneseq
        %v2014 = vshrl.u32 %v2013, 7
        %v2015 = vsub.s32 0, %v2014
        %v2016 = vrot.slane %v2006, %v2015
        %v2017 = vlaneseq
        %v2018 = vshrl.u32 %v2017, 7
        %v2019 = vsub.s32 0, %v2018
        %v2020 = vrot.slane %v2007, %v2019
        %v2021 = vlaneseq
        %v2022 = vshrl.u32 %v2021, 7
        %v2023 = vsub.s32 0, %v2022
        %v2024 = vrot.slane %v2008, %v2023
        %v2029 = vmul.f32 %v1974, %v2012
        %v2030 = vmul.f32 %v1975, %v2012
        %v2031 = vmul.f32 %v1976, %v2016
        %v2032 = vmul.f32 %v1977, %v2016
        %v2033 = vmul.f32 %v1978, %v2020
        %v2034 = vmul.f32 %v1979, %v2020
        %v2035 = vmul.f32 %v1980, %v2024
        %v2036 = vmul.f32 %v1981, %v2024
        %v2037 = vadd.f32 %v1966, %v2029
        %v2038 = vadd.f32 %v1967, %v2030
        %v2039 = vadd.f32 %v1968, %v2031
        %v2040 = vadd.f32 %v1969, %v2032
        %v2041 = vadd.f32 %v1970, %v2033
        %v2042 = vadd.f32 %v1971, %v2034
        %v2043 = vadd.f32 %v1972, %v2035
        %v2044 = vadd.f32 %v1973, %v2036
        %s2045 = scalar_lea.vmem %s1, 64
        %v2046 = vld [vmem:[%s2045] sm:$0xf]
        %v2049 = vunpack.c.l.s4 1966171168
        %v2050 = vunpack.c.0.s8 %v2049
        %v2051 = vlaneseq
        %v2052 = vshrl.u32 %v2051, 7
        %v2053 = vsub.s32 %v2050, %v2052
        %v2054 = vrot.slane %v2046, %v2053
        %v2055 = vcombine.high %v2054, %v2054
        %v2057 = vunpack.c.l.s4 1966171168
        %v2058 = vunpack.c.0.s8 %v2057
        %v2059 = vlaneseq
        %v2060 = vshrl.u32 %v2059, 7
        %v2061 = vsub.s32 %v2058, %v2060
        %v2062 = vrot.slane %v2054, %v2061
        %v2064 = vunpack.c.l.s4 1966171168
        %v2065 = vunpack.c.0.s8 %v2064
        %v2066 = vlaneseq
        %v2067 = vshrl.u32 %v2066, 7
        %v2068 = vsub.s32 %v2065, %v2067
        %v2069 = vrot.slane %v2055, %v2068
        %v2070 = vcombine.high %v2062, %v2062
        %v2071 = vcombine.high %v2069, %v2069
        %v2072 = vlaneseq
        %v2073 = vshrl.u32 %v2072, 7
        %v2074 = vsub.s32 0, %v2073
        %v2075 = vrot.slane %v2062, %v2074
        %v2076 = vlaneseq
        %v2077 = vshrl.u32 %v2076, 7
        %v2078 = vsub.s32 0, %v2077
        %v2079 = vrot.slane %v2069, %v2078
        %v2080 = vlaneseq
        %v2081 = vshrl.u32 %v2080, 7
        %v2082 = vsub.s32 0, %v2081
        %v2083 = vrot.slane %v2070, %v2082
        %v2084 = vlaneseq
        %v2085 = vshrl.u32 %v2084, 7
        %v2086 = vsub.s32 0, %v2085
        %v2087 = vrot.slane %v2071, %v2086
        %2088 = vrot.lane.b32.xlu0 %v2075, 1
        %v2089 = vpop.permute.xlu0 %2088
        %2090 = vrot.lane.b32.xlu0 %v2079, 1
        %v2091 = vpop.permute.xlu0 %2090
        %2092 = vrot.lane.b32.xlu0 %v2083, 1
        %v2093 = vpop.permute.xlu0 %2092
        %2094 = vrot.lane.b32.xlu0 %v2087, 1
        %v2095 = vpop.permute.xlu0 %2094
        %v2100 = vmul.f32 %v1974, %v2089
        %v2101 = vmul.f32 %v1975, %v2089
        %v2102 = vmul.f32 %v1976, %v2091
        %v2103 = vmul.f32 %v1977, %v2091
        %v2104 = vmul.f32 %v1978, %v2093
        %v2105 = vmul.f32 %v1979, %v2093
        %v2106 = vmul.f32 %v1980, %v2095
        %v2107 = vmul.f32 %v1981, %v2095
        %2116 = vrot.lane.b32.xlu0 %v2100, 127
        %v2117 = vpop.permute.xlu0 %2116
        %2118 = vrot.lane.b32.xlu0 %v2101, 127
        %v2119 = vpop.permute.xlu0 %2118
        %2120 = vrot.lane.b32.xlu0 %v2102, 127
        %v2121 = vpop.permute.xlu0 %2120
        %2122 = vrot.lane.b32.xlu0 %v2103, 127
        %v2123 = vpop.permute.xlu0 %2122
        %2124 = vrot.lane.b32.xlu0 %v2104, 127
        %v2125 = vpop.permute.xlu0 %2124
        %2126 = vrot.lane.b32.xlu0 %v2105, 127
        %v2127 = vpop.permute.xlu0 %2126
        %2128 = vrot.lane.b32.xlu0 %v2106, 127
        %v2129 = vpop.permute.xlu0 %2128
        %2130 = vrot.lane.b32.xlu0 %v2107, 127
        %v2131 = vpop.permute.xlu0 %2130
        %v2140 = vadd.f32 %v2037, %v2117
        %v2141 = vadd.f32 %v2038, %v2119
        %v2142 = vadd.f32 %v2039, %v2121
        %v2143 = vadd.f32 %v2040, %v2123
        %v2144 = vadd.f32 %v2041, %v2125
        %v2145 = vadd.f32 %v2042, %v2127
        %v2146 = vadd.f32 %v2043, %v2129
        %v2147 = vadd.f32 %v2044, %v2131
        %s2148 = scalar_lea.vmem %s1, 68
        %v2149 = vld [vmem:[%s2148] sm:$0xf]
        %v2152 = vunpack.c.l.s4 1966171168
        %v2153 = vunpack.c.0.s8 %v2152
        %v2154 = vlaneseq
        %v2155 = vshrl.u32 %v2154, 7
        %v2156 = vsub.s32 %v2153, %v2155
        %v2157 = vrot.slane %v2149, %v2156
        %v2158 = vcombine.high %v2157, %v2157
        %v2160 = vunpack.c.l.s4 1966171168
        %v2161 = vunpack.c.0.s8 %v2160
        %v2162 = vlaneseq
        %v2163 = vshrl.u32 %v2162, 7
        %v2164 = vsub.s32 %v2161, %v2163
        %v2165 = vrot.slane %v2157, %v2164
        %v2167 = vunpack.c.l.s4 1966171168
        %v2168 = vunpack.c.0.s8 %v2167
        %v2169 = vlaneseq
        %v2170 = vshrl.u32 %v2169, 7
        %v2171 = vsub.s32 %v2168, %v2170
        %v2172 = vrot.slane %v2158, %v2171
        %v2173 = vcombine.high %v2165, %v2165
        %v2174 = vcombine.high %v2172, %v2172
        %v2175 = vlaneseq
        %v2176 = vshrl.u32 %v2175, 7
        %v2177 = vsub.s32 0, %v2176
        %v2178 = vrot.slane %v2165, %v2177
        %v2179 = vlaneseq
        %v2180 = vshrl.u32 %v2179, 7
        %v2181 = vsub.s32 0, %v2180
        %v2182 = vrot.slane %v2172, %v2181
        %v2183 = vlaneseq
        %v2184 = vshrl.u32 %v2183, 7
        %v2185 = vsub.s32 0, %v2184
        %v2186 = vrot.slane %v2173, %v2185
        %v2187 = vlaneseq
        %v2188 = vshrl.u32 %v2187, 7
        %v2189 = vsub.s32 0, %v2188
        %v2190 = vrot.slane %v2174, %v2189
        %2191 = vrot.lane.b32.xlu0 %v2178, 2
        %v2192 = vpop.permute.xlu0 %2191
        %2193 = vrot.lane.b32.xlu0 %v2182, 2
        %v2194 = vpop.permute.xlu0 %2193
        %2195 = vrot.lane.b32.xlu0 %v2186, 2
        %v2196 = vpop.permute.xlu0 %2195
        %2197 = vrot.lane.b32.xlu0 %v2190, 2
        %v2198 = vpop.permute.xlu0 %2197
        %v2203 = vmul.f32 %v1974, %v2192
        %v2204 = vmul.f32 %v1975, %v2192
        %v2205 = vmul.f32 %v1976, %v2194
        %v2206 = vmul.f32 %v1977, %v2194
        %v2207 = vmul.f32 %v1978, %v2196
        %v2208 = vmul.f32 %v1979, %v2196
        %v2209 = vmul.f32 %v1980, %v2198
        %v2210 = vmul.f32 %v1981, %v2198
        %2219 = vrot.lane.b32.xlu0 %v2203, 126
        %v2220 = vpop.permute.xlu0 %2219
        %2221 = vrot.lane.b32.xlu0 %v2204, 126
        %v2222 = vpop.permute.xlu0 %2221
        %2223 = vrot.lane.b32.xlu0 %v2205, 126
        %v2224 = vpop.permute.xlu0 %2223
        %2225 = vrot.lane.b32.xlu0 %v2206, 126
        %v2226 = vpop.permute.xlu0 %2225
        %2227 = vrot.lane.b32.xlu0 %v2207, 126
        %v2228 = vpop.permute.xlu0 %2227
        %2229 = vrot.lane.b32.xlu0 %v2208, 126
        %v2230 = vpop.permute.xlu0 %2229
        %2231 = vrot.lane.b32.xlu0 %v2209, 126
        %v2232 = vpop.permute.xlu0 %2231
        %2233 = vrot.lane.b32.xlu0 %v2210, 126
        %v2234 = vpop.permute.xlu0 %2233
        %v2243 = vadd.f32 %v2140, %v2220
        %v2244 = vadd.f32 %v2141, %v2222
        %v2245 = vadd.f32 %v2142, %v2224
        %v2246 = vadd.f32 %v2143, %v2226
        %v2247 = vadd.f32 %v2144, %v2228
        %v2248 = vadd.f32 %v2145, %v2230
        %v2249 = vadd.f32 %v2146, %v2232
        %v2250 = vadd.f32 %v2147, %v2234
        %s2251 = scalar_lea.vmem %s1, 72
        %v2252 = vld [vmem:[%s2251] sm:$0xf]
        %v2255 = vunpack.c.l.s4 1966171168
        %v2256 = vunpack.c.0.s8 %v2255
        %v2257 = vlaneseq
        %v2258 = vshrl.u32 %v2257, 7
        %v2259 = vsub.s32 %v2256, %v2258
        %v2260 = vrot.slane %v2252, %v2259
        %v2261 = vcombine.high %v2260, %v2260
        %v2263 = vunpack.c.l.s4 1966171168
        %v2264 = vunpack.c.0.s8 %v2263
        %v2265 = vlaneseq
        %v2266 = vshrl.u32 %v2265, 7
        %v2267 = vsub.s32 %v2264, %v2266
        %v2268 = vrot.slane %v2260, %v2267
        %v2270 = vunpack.c.l.s4 1966171168
        %v2271 = vunpack.c.0.s8 %v2270
        %v2272 = vlaneseq
        %v2273 = vshrl.u32 %v2272, 7
        %v2274 = vsub.s32 %v2271, %v2273
        %v2275 = vrot.slane %v2261, %v2274
        %v2276 = vcombine.high %v2268, %v2268
        %v2277 = vcombine.high %v2275, %v2275
        %v2278 = vlaneseq
        %v2279 = vshrl.u32 %v2278, 7
        %v2280 = vsub.s32 0, %v2279
        %v2281 = vrot.slane %v2268, %v2280
        %v2282 = vlaneseq
        %v2283 = vshrl.u32 %v2282, 7
        %v2284 = vsub.s32 0, %v2283
        %v2285 = vrot.slane %v2275, %v2284
        %v2286 = vlaneseq
        %v2287 = vshrl.u32 %v2286, 7
        %v2288 = vsub.s32 0, %v2287
        %v2289 = vrot.slane %v2276, %v2288
        %v2290 = vlaneseq
        %v2291 = vshrl.u32 %v2290, 7
        %v2292 = vsub.s32 0, %v2291
        %v2293 = vrot.slane %v2277, %v2292
        %2294 = vrot.lane.b32.xlu0 %v2281, 3
        %v2295 = vpop.permute.xlu0 %2294
        %2296 = vrot.lane.b32.xlu0 %v2285, 3
        %v2297 = vpop.permute.xlu0 %2296
        %2298 = vrot.lane.b32.xlu0 %v2289, 3
        %v2299 = vpop.permute.xlu0 %2298
        %2300 = vrot.lane.b32.xlu0 %v2293, 3
        %v2301 = vpop.permute.xlu0 %2300
        %v2306 = vmul.f32 %v1974, %v2295
        %v2307 = vmul.f32 %v1975, %v2295
        %v2308 = vmul.f32 %v1976, %v2297
        %v2309 = vmul.f32 %v1977, %v2297
        %v2310 = vmul.f32 %v1978, %v2299
        %v2311 = vmul.f32 %v1979, %v2299
        %v2312 = vmul.f32 %v1980, %v2301
        %v2313 = vmul.f32 %v1981, %v2301
        %2322 = vrot.lane.b32.xlu0 %v2306, 125
        %v2323 = vpop.permute.xlu0 %2322
        %2324 = vrot.lane.b32.xlu0 %v2307, 125
        %v2325 = vpop.permute.xlu0 %2324
        %2326 = vrot.lane.b32.xlu0 %v2308, 125
        %v2327 = vpop.permute.xlu0 %2326
        %2328 = vrot.lane.b32.xlu0 %v2309, 125
        %v2329 = vpop.permute.xlu0 %2328
        %2330 = vrot.lane.b32.xlu0 %v2310, 125
        %v2331 = vpop.permute.xlu0 %2330
        %2332 = vrot.lane.b32.xlu0 %v2311, 125
        %v2333 = vpop.permute.xlu0 %2332
        %2334 = vrot.lane.b32.xlu0 %v2312, 125
        %v2335 = vpop.permute.xlu0 %2334
        %2336 = vrot.lane.b32.xlu0 %v2313, 125
        %v2337 = vpop.permute.xlu0 %2336
        %v2346 = vadd.f32 %v2243, %v2323
        %v2347 = vadd.f32 %v2244, %v2325
        %v2348 = vadd.f32 %v2245, %v2327
        %v2349 = vadd.f32 %v2246, %v2329
        %v2350 = vadd.f32 %v2247, %v2331
        %v2351 = vadd.f32 %v2248, %v2333
        %v2352 = vadd.f32 %v2249, %v2335
        %v2353 = vadd.f32 %v2250, %v2337
        %s2354 = scalar_lea.vmem %s1, 76
        %v2355 = vld [vmem:[%s2354] sm:$0xf]
        %v2358 = vunpack.c.l.s4 1966171168
        %v2359 = vunpack.c.0.s8 %v2358
        %v2360 = vlaneseq
        %v2361 = vshrl.u32 %v2360, 7
        %v2362 = vsub.s32 %v2359, %v2361
        %v2363 = vrot.slane %v2355, %v2362
        %v2364 = vcombine.high %v2363, %v2363
        %v2366 = vunpack.c.l.s4 1966171168
        %v2367 = vunpack.c.0.s8 %v2366
        %v2368 = vlaneseq
        %v2369 = vshrl.u32 %v2368, 7
        %v2370 = vsub.s32 %v2367, %v2369
        %v2371 = vrot.slane %v2363, %v2370
        %v2373 = vunpack.c.l.s4 1966171168
        %v2374 = vunpack.c.0.s8 %v2373
        %v2375 = vlaneseq
        %v2376 = vshrl.u32 %v2375, 7
        %v2377 = vsub.s32 %v2374, %v2376
        %v2378 = vrot.slane %v2364, %v2377
        %v2379 = vcombine.high %v2371, %v2371
        %v2380 = vcombine.high %v2378, %v2378
        %v2381 = vlaneseq
        %v2382 = vshrl.u32 %v2381, 7
        %v2383 = vsub.s32 0, %v2382
        %v2384 = vrot.slane %v2371, %v2383
        %v2385 = vlaneseq
        %v2386 = vshrl.u32 %v2385, 7
        %v2387 = vsub.s32 0, %v2386
        %v2388 = vrot.slane %v2378, %v2387
        %v2389 = vlaneseq
        %v2390 = vshrl.u32 %v2389, 7
        %v2391 = vsub.s32 0, %v2390
        %v2392 = vrot.slane %v2379, %v2391
        %v2393 = vlaneseq
        %v2394 = vshrl.u32 %v2393, 7
        %v2395 = vsub.s32 0, %v2394
        %v2396 = vrot.slane %v2380, %v2395
        %2397 = vrot.lane.b32.xlu0 %v2384, 4
        %v2398 = vpop.permute.xlu0 %2397
        %2399 = vrot.lane.b32.xlu0 %v2388, 4
        %v2400 = vpop.permute.xlu0 %2399
        %2401 = vrot.lane.b32.xlu0 %v2392, 4
        %v2402 = vpop.permute.xlu0 %2401
        %2403 = vrot.lane.b32.xlu0 %v2396, 4
        %v2404 = vpop.permute.xlu0 %2403
        %v2409 = vmul.f32 %v1974, %v2398
        %v2410 = vmul.f32 %v1975, %v2398
        %v2411 = vmul.f32 %v1976, %v2400
        %v2412 = vmul.f32 %v1977, %v2400
        %v2413 = vmul.f32 %v1978, %v2402
        %v2414 = vmul.f32 %v1979, %v2402
        %v2415 = vmul.f32 %v1980, %v2404
        %v2416 = vmul.f32 %v1981, %v2404
        %2425 = vrot.lane.b32.xlu0 %v2409, 124
        %v2426 = vpop.permute.xlu0 %2425
        %2427 = vrot.lane.b32.xlu0 %v2410, 124
        %v2428 = vpop.permute.xlu0 %2427
        %2429 = vrot.lane.b32.xlu0 %v2411, 124
        %v2430 = vpop.permute.xlu0 %2429
        %2431 = vrot.lane.b32.xlu0 %v2412, 124
        %v2432 = vpop.permute.xlu0 %2431
        %2433 = vrot.lane.b32.xlu0 %v2413, 124
        %v2434 = vpop.permute.xlu0 %2433
        %2435 = vrot.lane.b32.xlu0 %v2414, 124
        %v2436 = vpop.permute.xlu0 %2435
        %2437 = vrot.lane.b32.xlu0 %v2415, 124
        %v2438 = vpop.permute.xlu0 %2437
        %2439 = vrot.lane.b32.xlu0 %v2416, 124
        %v2440 = vpop.permute.xlu0 %2439
        %v2449 = vadd.f32 %v2346, %v2426
        %v2450 = vadd.f32 %v2347, %v2428
        %v2451 = vadd.f32 %v2348, %v2430
        %v2452 = vadd.f32 %v2349, %v2432
        %v2453 = vadd.f32 %v2350, %v2434
        %v2454 = vadd.f32 %v2351, %v2436
        %v2455 = vadd.f32 %v2352, %v2438
        %v2456 = vadd.f32 %v2353, %v2440
        %v2457 = vld [vmem:[%s240 + $0x2] sm:$0xff]
        %v2458 = vld [vmem:[%s240 + $0xa] sm:$0xff]
        %v2459 = vld [vmem:[%s240 + $0x1a] sm:$0xff]
        %v2460 = vld [vmem:[%s240 + $0x22] sm:$0xff]
        %v2461 = vld [vmem:[%s240 + $0x32] sm:$0xff]
        %v2462 = vld [vmem:[%s240 + $0x3a] sm:$0xff]
        %v2463 = vld [vmem:[%s240 + $0x4a] sm:$0xff]
        %v2464 = vld [vmem:[%s240 + $0x52] sm:$0xff]
        %s2465 = scalar_lea.vmem %s1, 80
        %v2466 = vld [vmem:[%s2465] sm:$0xf]
        %v2469 = vunpack.c.l.s4 1966171168
        %v2470 = vunpack.c.0.s8 %v2469
        %v2471 = vlaneseq
        %v2472 = vshrl.u32 %v2471, 7
        %v2473 = vsub.s32 %v2470, %v2472
        %v2474 = vrot.slane %v2466, %v2473
        %v2475 = vcombine.high %v2474, %v2474
        %v2477 = vunpack.c.l.s4 1966171168
        %v2478 = vunpack.c.0.s8 %v2477
        %v2479 = vlaneseq
        %v2480 = vshrl.u32 %v2479, 7
        %v2481 = vsub.s32 %v2478, %v2480
        %v2482 = vrot.slane %v2474, %v2481
        %v2484 = vunpack.c.l.s4 1966171168
        %v2485 = vunpack.c.0.s8 %v2484
        %v2486 = vlaneseq
        %v2487 = vshrl.u32 %v2486, 7
        %v2488 = vsub.s32 %v2485, %v2487
        %v2489 = vrot.slane %v2475, %v2488
        %v2490 = vcombine.high %v2482, %v2482
        %v2491 = vcombine.high %v2489, %v2489
        %v2492 = vlaneseq
        %v2493 = vshrl.u32 %v2492, 7
        %v2494 = vsub.s32 0, %v2493
        %v2495 = vrot.slane %v2482, %v2494
        %v2496 = vlaneseq
        %v2497 = vshrl.u32 %v2496, 7
        %v2498 = vsub.s32 0, %v2497
        %v2499 = vrot.slane %v2489, %v2498
        %v2500 = vlaneseq
        %v2501 = vshrl.u32 %v2500, 7
        %v2502 = vsub.s32 0, %v2501
        %v2503 = vrot.slane %v2490, %v2502
        %v2504 = vlaneseq
        %v2505 = vshrl.u32 %v2504, 7
        %v2506 = vsub.s32 0, %v2505
        %v2507 = vrot.slane %v2491, %v2506
        %v2512 = vmul.f32 %v2457, %v2495
        %v2513 = vmul.f32 %v2458, %v2495
        %v2514 = vmul.f32 %v2459, %v2499
        %v2515 = vmul.f32 %v2460, %v2499
        %v2516 = vmul.f32 %v2461, %v2503
        %v2517 = vmul.f32 %v2462, %v2503
        %v2518 = vmul.f32 %v2463, %v2507
        %v2519 = vmul.f32 %v2464, %v2507
        %v2520 = vadd.f32 %v2449, %v2512
        %v2521 = vadd.f32 %v2450, %v2513
        %v2522 = vadd.f32 %v2451, %v2514
        %v2523 = vadd.f32 %v2452, %v2515
        %v2524 = vadd.f32 %v2453, %v2516
        %v2525 = vadd.f32 %v2454, %v2517
        %v2526 = vadd.f32 %v2455, %v2518
        %v2527 = vadd.f32 %v2456, %v2519
        %s2528 = scalar_lea.vmem %s1, 84
        %v2529 = vld [vmem:[%s2528] sm:$0xf]
        %v2532 = vunpack.c.l.s4 1966171168
        %v2533 = vunpack.c.0.s8 %v2532
        %v2534 = vlaneseq
        %v2535 = vshrl.u32 %v2534, 7
        %v2536 = vsub.s32 %v2533, %v2535
        %v2537 = vrot.slane %v2529, %v2536
        %v2538 = vcombine.high %v2537, %v2537
        %v2540 = vunpack.c.l.s4 1966171168
        %v2541 = vunpack.c.0.s8 %v2540
        %v2542 = vlaneseq
        %v2543 = vshrl.u32 %v2542, 7
        %v2544 = vsub.s32 %v2541, %v2543
        %v2545 = vrot.slane %v2537, %v2544
        %v2547 = vunpack.c.l.s4 1966171168
        %v2548 = vunpack.c.0.s8 %v2547
        %v2549 = vlaneseq
        %v2550 = vshrl.u32 %v2549, 7
        %v2551 = vsub.s32 %v2548, %v2550
        %v2552 = vrot.slane %v2538, %v2551
        %v2553 = vcombine.high %v2545, %v2545
        %v2554 = vcombine.high %v2552, %v2552
        %v2555 = vlaneseq
        %v2556 = vshrl.u32 %v2555, 7
        %v2557 = vsub.s32 0, %v2556
        %v2558 = vrot.slane %v2545, %v2557
        %v2559 = vlaneseq
        %v2560 = vshrl.u32 %v2559, 7
        %v2561 = vsub.s32 0, %v2560
        %v2562 = vrot.slane %v2552, %v2561
        %v2563 = vlaneseq
        %v2564 = vshrl.u32 %v2563, 7
        %v2565 = vsub.s32 0, %v2564
        %v2566 = vrot.slane %v2553, %v2565
        %v2567 = vlaneseq
        %v2568 = vshrl.u32 %v2567, 7
        %v2569 = vsub.s32 0, %v2568
        %v2570 = vrot.slane %v2554, %v2569
        %2571 = vrot.lane.b32.xlu0 %v2558, 1
        %v2572 = vpop.permute.xlu0 %2571
        %2573 = vrot.lane.b32.xlu0 %v2562, 1
        %v2574 = vpop.permute.xlu0 %2573
        %2575 = vrot.lane.b32.xlu0 %v2566, 1
        %v2576 = vpop.permute.xlu0 %2575
        %2577 = vrot.lane.b32.xlu0 %v2570, 1
        %v2578 = vpop.permute.xlu0 %2577
        %v2583 = vmul.f32 %v2457, %v2572
        %v2584 = vmul.f32 %v2458, %v2572
        %v2585 = vmul.f32 %v2459, %v2574
        %v2586 = vmul.f32 %v2460, %v2574
        %v2587 = vmul.f32 %v2461, %v2576
        %v2588 = vmul.f32 %v2462, %v2576
        %v2589 = vmul.f32 %v2463, %v2578
        %v2590 = vmul.f32 %v2464, %v2578
        %2599 = vrot.lane.b32.xlu0 %v2583, 127
        %v2600 = vpop.permute.xlu0 %2599
        %2601 = vrot.lane.b32.xlu0 %v2584, 127
        %v2602 = vpop.permute.xlu0 %2601
        %2603 = vrot.lane.b32.xlu0 %v2585, 127
        %v2604 = vpop.permute.xlu0 %2603
        %2605 = vrot.lane.b32.xlu0 %v2586, 127
        %v2606 = vpop.permute.xlu0 %2605
        %2607 = vrot.lane.b32.xlu0 %v2587, 127
        %v2608 = vpop.permute.xlu0 %2607
        %2609 = vrot.lane.b32.xlu0 %v2588, 127
        %v2610 = vpop.permute.xlu0 %2609
        %2611 = vrot.lane.b32.xlu0 %v2589, 127
        %v2612 = vpop.permute.xlu0 %2611
        %2613 = vrot.lane.b32.xlu0 %v2590, 127
        %v2614 = vpop.permute.xlu0 %2613
        %v2623 = vadd.f32 %v2520, %v2600
        %v2624 = vadd.f32 %v2521, %v2602
        %v2625 = vadd.f32 %v2522, %v2604
        %v2626 = vadd.f32 %v2523, %v2606
        %v2627 = vadd.f32 %v2524, %v2608
        %v2628 = vadd.f32 %v2525, %v2610
        %v2629 = vadd.f32 %v2526, %v2612
        %v2630 = vadd.f32 %v2527, %v2614
        %s2631 = scalar_lea.vmem %s1, 88
        %v2632 = vld [vmem:[%s2631] sm:$0xf]
        %v2635 = vunpack.c.l.s4 1966171168
        %v2636 = vunpack.c.0.s8 %v2635
        %v2637 = vlaneseq
        %v2638 = vshrl.u32 %v2637, 7
        %v2639 = vsub.s32 %v2636, %v2638
        %v2640 = vrot.slane %v2632, %v2639
        %v2641 = vcombine.high %v2640, %v2640
        %v2643 = vunpack.c.l.s4 1966171168
        %v2644 = vunpack.c.0.s8 %v2643
        %v2645 = vlaneseq
        %v2646 = vshrl.u32 %v2645, 7
        %v2647 = vsub.s32 %v2644, %v2646
        %v2648 = vrot.slane %v2640, %v2647
        %v2650 = vunpack.c.l.s4 1966171168
        %v2651 = vunpack.c.0.s8 %v2650
        %v2652 = vlaneseq
        %v2653 = vshrl.u32 %v2652, 7
        %v2654 = vsub.s32 %v2651, %v2653
        %v2655 = vrot.slane %v2641, %v2654
        %v2656 = vcombine.high %v2648, %v2648
        %v2657 = vcombine.high %v2655, %v2655
        %v2658 = vlaneseq
        %v2659 = vshrl.u32 %v2658, 7
        %v2660 = vsub.s32 0, %v2659
        %v2661 = vrot.slane %v2648, %v2660
        %v2662 = vlaneseq
        %v2663 = vshrl.u32 %v2662, 7
        %v2664 = vsub.s32 0, %v2663
        %v2665 = vrot.slane %v2655, %v2664
        %v2666 = vlaneseq
        %v2667 = vshrl.u32 %v2666, 7
        %v2668 = vsub.s32 0, %v2667
        %v2669 = vrot.slane %v2656, %v2668
        %v2670 = vlaneseq
        %v2671 = vshrl.u32 %v2670, 7
        %v2672 = vsub.s32 0, %v2671
        %v2673 = vrot.slane %v2657, %v2672
        %2674 = vrot.lane.b32.xlu0 %v2661, 2
        %v2675 = vpop.permute.xlu0 %2674
        %2676 = vrot.lane.b32.xlu0 %v2665, 2
        %v2677 = vpop.permute.xlu0 %2676
        %2678 = vrot.lane.b32.xlu0 %v2669, 2
        %v2679 = vpop.permute.xlu0 %2678
        %2680 = vrot.lane.b32.xlu0 %v2673, 2
        %v2681 = vpop.permute.xlu0 %2680
        %v2686 = vmul.f32 %v2457, %v2675
        %v2687 = vmul.f32 %v2458, %v2675
        %v2688 = vmul.f32 %v2459, %v2677
        %v2689 = vmul.f32 %v2460, %v2677
        %v2690 = vmul.f32 %v2461, %v2679
        %v2691 = vmul.f32 %v2462, %v2679
        %v2692 = vmul.f32 %v2463, %v2681
        %v2693 = vmul.f32 %v2464, %v2681
        %2702 = vrot.lane.b32.xlu0 %v2686, 126
        %v2703 = vpop.permute.xlu0 %2702
        %2704 = vrot.lane.b32.xlu0 %v2687, 126
        %v2705 = vpop.permute.xlu0 %2704
        %2706 = vrot.lane.b32.xlu0 %v2688, 126
        %v2707 = vpop.permute.xlu0 %2706
        %2708 = vrot.lane.b32.xlu0 %v2689, 126
        %v2709 = vpop.permute.xlu0 %2708
        %2710 = vrot.lane.b32.xlu0 %v2690, 126
        %v2711 = vpop.permute.xlu0 %2710
        %2712 = vrot.lane.b32.xlu0 %v2691, 126
        %v2713 = vpop.permute.xlu0 %2712
        %2714 = vrot.lane.b32.xlu0 %v2692, 126
        %v2715 = vpop.permute.xlu0 %2714
        %2716 = vrot.lane.b32.xlu0 %v2693, 126
        %v2717 = vpop.permute.xlu0 %2716
        %v2726 = vadd.f32 %v2623, %v2703
        %v2727 = vadd.f32 %v2624, %v2705
        %v2728 = vadd.f32 %v2625, %v2707
        %v2729 = vadd.f32 %v2626, %v2709
        %v2730 = vadd.f32 %v2627, %v2711
        %v2731 = vadd.f32 %v2628, %v2713
        %v2732 = vadd.f32 %v2629, %v2715
        %v2733 = vadd.f32 %v2630, %v2717
        %s2734 = scalar_lea.vmem %s1, 92
        %v2735 = vld [vmem:[%s2734] sm:$0xf]
        %v2738 = vunpack.c.l.s4 1966171168
        %v2739 = vunpack.c.0.s8 %v2738
        %v2740 = vlaneseq
        %v2741 = vshrl.u32 %v2740, 7
        %v2742 = vsub.s32 %v2739, %v2741
        %v2743 = vrot.slane %v2735, %v2742
        %v2744 = vcombine.high %v2743, %v2743
        %v2746 = vunpack.c.l.s4 1966171168
        %v2747 = vunpack.c.0.s8 %v2746
        %v2748 = vlaneseq
        %v2749 = vshrl.u32 %v2748, 7
        %v2750 = vsub.s32 %v2747, %v2749
        %v2751 = vrot.slane %v2743, %v2750
        %v2753 = vunpack.c.l.s4 1966171168
        %v2754 = vunpack.c.0.s8 %v2753
        %v2755 = vlaneseq
        %v2756 = vshrl.u32 %v2755, 7
        %v2757 = vsub.s32 %v2754, %v2756
        %v2758 = vrot.slane %v2744, %v2757
        %v2759 = vcombine.high %v2751, %v2751
        %v2760 = vcombine.high %v2758, %v2758
        %v2761 = vlaneseq
        %v2762 = vshrl.u32 %v2761, 7
        %v2763 = vsub.s32 0, %v2762
        %v2764 = vrot.slane %v2751, %v2763
        %v2765 = vlaneseq
        %v2766 = vshrl.u32 %v2765, 7
        %v2767 = vsub.s32 0, %v2766
        %v2768 = vrot.slane %v2758, %v2767
        %v2769 = vlaneseq
        %v2770 = vshrl.u32 %v2769, 7
        %v2771 = vsub.s32 0, %v2770
        %v2772 = vrot.slane %v2759, %v2771
        %v2773 = vlaneseq
        %v2774 = vshrl.u32 %v2773, 7
        %v2775 = vsub.s32 0, %v2774
        %v2776 = vrot.slane %v2760, %v2775
        %2777 = vrot.lane.b32.xlu0 %v2764, 3
        %v2778 = vpop.permute.xlu0 %2777
        %2779 = vrot.lane.b32.xlu0 %v2768, 3
        %v2780 = vpop.permute.xlu0 %2779
        %2781 = vrot.lane.b32.xlu0 %v2772, 3
        %v2782 = vpop.permute.xlu0 %2781
        %2783 = vrot.lane.b32.xlu0 %v2776, 3
        %v2784 = vpop.permute.xlu0 %2783
        %v2789 = vmul.f32 %v2457, %v2778
        %v2790 = vmul.f32 %v2458, %v2778
        %v2791 = vmul.f32 %v2459, %v2780
        %v2792 = vmul.f32 %v2460, %v2780
        %v2793 = vmul.f32 %v2461, %v2782
        %v2794 = vmul.f32 %v2462, %v2782
        %v2795 = vmul.f32 %v2463, %v2784
        %v2796 = vmul.f32 %v2464, %v2784
        %2805 = vrot.lane.b32.xlu0 %v2789, 125
        %v2806 = vpop.permute.xlu0 %2805
        %2807 = vrot.lane.b32.xlu0 %v2790, 125
        %v2808 = vpop.permute.xlu0 %2807
        %2809 = vrot.lane.b32.xlu0 %v2791, 125
        %v2810 = vpop.permute.xlu0 %2809
        %2811 = vrot.lane.b32.xlu0 %v2792, 125
        %v2812 = vpop.permute.xlu0 %2811
        %2813 = vrot.lane.b32.xlu0 %v2793, 125
        %v2814 = vpop.permute.xlu0 %2813
        %2815 = vrot.lane.b32.xlu0 %v2794, 125
        %v2816 = vpop.permute.xlu0 %2815
        %2817 = vrot.lane.b32.xlu0 %v2795, 125
        %v2818 = vpop.permute.xlu0 %2817
        %2819 = vrot.lane.b32.xlu0 %v2796, 125
        %v2820 = vpop.permute.xlu0 %2819
        %v2829 = vadd.f32 %v2726, %v2806
        %v2830 = vadd.f32 %v2727, %v2808
        %v2831 = vadd.f32 %v2728, %v2810
        %v2832 = vadd.f32 %v2729, %v2812
        %v2833 = vadd.f32 %v2730, %v2814
        %v2834 = vadd.f32 %v2731, %v2816
        %v2835 = vadd.f32 %v2732, %v2818
        %v2836 = vadd.f32 %v2733, %v2820
        %s2837 = scalar_lea.vmem %s1, 96
        %v2838 = vld [vmem:[%s2837] sm:$0xf]
        %v2841 = vunpack.c.l.s4 1966171168
        %v2842 = vunpack.c.0.s8 %v2841
        %v2843 = vlaneseq
        %v2844 = vshrl.u32 %v2843, 7
        %v2845 = vsub.s32 %v2842, %v2844
        %v2846 = vrot.slane %v2838, %v2845
        %v2847 = vcombine.high %v2846, %v2846
        %v2849 = vunpack.c.l.s4 1966171168
        %v2850 = vunpack.c.0.s8 %v2849
        %v2851 = vlaneseq
        %v2852 = vshrl.u32 %v2851, 7
        %v2853 = vsub.s32 %v2850, %v2852
        %v2854 = vrot.slane %v2846, %v2853
        %v2856 = vunpack.c.l.s4 1966171168
        %v2857 = vunpack.c.0.s8 %v2856
        %v2858 = vlaneseq
        %v2859 = vshrl.u32 %v2858, 7
        %v2860 = vsub.s32 %v2857, %v2859
        %v2861 = vrot.slane %v2847, %v2860
        %v2862 = vcombine.high %v2854, %v2854
        %v2863 = vcombine.high %v2861, %v2861
        %v2864 = vlaneseq
        %v2865 = vshrl.u32 %v2864, 7
        %v2866 = vsub.s32 0, %v2865
        %v2867 = vrot.slane %v2854, %v2866
        %v2868 = vlaneseq
        %v2869 = vshrl.u32 %v2868, 7
        %v2870 = vsub.s32 0, %v2869
        %v2871 = vrot.slane %v2861, %v2870
        %v2872 = vlaneseq
        %v2873 = vshrl.u32 %v2872, 7
        %v2874 = vsub.s32 0, %v2873
        %v2875 = vrot.slane %v2862, %v2874
        %v2876 = vlaneseq
        %v2877 = vshrl.u32 %v2876, 7
        %v2878 = vsub.s32 0, %v2877
        %v2879 = vrot.slane %v2863, %v2878
        %2880 = vrot.lane.b32.xlu0 %v2867, 4
        %v2881 = vpop.permute.xlu0 %2880
        %2882 = vrot.lane.b32.xlu0 %v2871, 4
        %v2883 = vpop.permute.xlu0 %2882
        %2884 = vrot.lane.b32.xlu0 %v2875, 4
        %v2885 = vpop.permute.xlu0 %2884
        %2886 = vrot.lane.b32.xlu0 %v2879, 4
        %v2887 = vpop.permute.xlu0 %2886
        %v2892 = vmul.f32 %v2457, %v2881
        %v2893 = vmul.f32 %v2458, %v2881
        %v2894 = vmul.f32 %v2459, %v2883
        %v2895 = vmul.f32 %v2460, %v2883
        %v2896 = vmul.f32 %v2461, %v2885
        %v2897 = vmul.f32 %v2462, %v2885
        %v2898 = vmul.f32 %v2463, %v2887
        %v2899 = vmul.f32 %v2464, %v2887
        %2908 = vrot.lane.b32.xlu0 %v2892, 124
        %v2909 = vpop.permute.xlu0 %2908
        %2910 = vrot.lane.b32.xlu0 %v2893, 124
        %v2911 = vpop.permute.xlu0 %2910
        %2912 = vrot.lane.b32.xlu0 %v2894, 124
        %v2913 = vpop.permute.xlu0 %2912
        %2914 = vrot.lane.b32.xlu0 %v2895, 124
        %v2915 = vpop.permute.xlu0 %2914
        %2916 = vrot.lane.b32.xlu0 %v2896, 124
        %v2917 = vpop.permute.xlu0 %2916
        %2918 = vrot.lane.b32.xlu0 %v2897, 124
        %v2919 = vpop.permute.xlu0 %2918
        %2920 = vrot.lane.b32.xlu0 %v2898, 124
        %v2921 = vpop.permute.xlu0 %2920
        %2922 = vrot.lane.b32.xlu0 %v2899, 124
        %v2923 = vpop.permute.xlu0 %2922
        %v2932 = vadd.f32 %v2829, %v2909
        %v2933 = vadd.f32 %v2830, %v2911
        %v2934 = vadd.f32 %v2831, %v2913
        %v2935 = vadd.f32 %v2832, %v2915
        %v2936 = vadd.f32 %v2833, %v2917
        %v2937 = vadd.f32 %v2834, %v2919
        %v2938 = vadd.f32 %v2835, %v2921
        %v2939 = vadd.f32 %v2836, %v2923
        %v2940 = vld [vmem:[%s240 + $0x3] sm:$0xff]
        %v2941 = vld [vmem:[%s240 + $0xb] sm:$0xff]
        %v2942 = vld [vmem:[%s240 + $0x1b] sm:$0xff]
        %v2943 = vld [vmem:[%s240 + $0x23] sm:$0xff]
        %v2944 = vld [vmem:[%s240 + $0x33] sm:$0xff]
        %v2945 = vld [vmem:[%s240 + $0x3b] sm:$0xff]
        %v2946 = vld [vmem:[%s240 + $0x4b] sm:$0xff]
        %v2947 = vld [vmem:[%s240 + $0x53] sm:$0xff]
        %s2948 = scalar_lea.vmem %s1, 100
        %v2949 = vld [vmem:[%s2948] sm:$0xf]
        %v2952 = vunpack.c.l.s4 1966171168
        %v2953 = vunpack.c.0.s8 %v2952
        %v2954 = vlaneseq
        %v2955 = vshrl.u32 %v2954, 7
        %v2956 = vsub.s32 %v2953, %v2955
        %v2957 = vrot.slane %v2949, %v2956
        %v2958 = vcombine.high %v2957, %v2957
        %v2960 = vunpack.c.l.s4 1966171168
        %v2961 = vunpack.c.0.s8 %v2960
        %v2962 = vlaneseq
        %v2963 = vshrl.u32 %v2962, 7
        %v2964 = vsub.s32 %v2961, %v2963
        %v2965 = vrot.slane %v2957, %v2964
        %v2967 = vunpack.c.l.s4 1966171168
        %v2968 = vunpack.c.0.s8 %v2967
        %v2969 = vlaneseq
        %v2970 = vshrl.u32 %v2969, 7
        %v2971 = vsub.s32 %v2968, %v2970
        %v2972 = vrot.slane %v2958, %v2971
        %v2973 = vcombine.high %v2965, %v2965
        %v2974 = vcombine.high %v2972, %v2972
        %v2975 = vlaneseq
        %v2976 = vshrl.u32 %v2975, 7
        %v2977 = vsub.s32 0, %v2976
        %v2978 = vrot.slane %v2965, %v2977
        %v2979 = vlaneseq
        %v2980 = vshrl.u32 %v2979, 7
        %v2981 = vsub.s32 0, %v2980
        %v2982 = vrot.slane %v2972, %v2981
        %v2983 = vlaneseq
        %v2984 = vshrl.u32 %v2983, 7
        %v2985 = vsub.s32 0, %v2984
        %v2986 = vrot.slane %v2973, %v2985
        %v2987 = vlaneseq
        %v2988 = vshrl.u32 %v2987, 7
        %v2989 = vsub.s32 0, %v2988
        %v2990 = vrot.slane %v2974, %v2989
        %v2995 = vmul.f32 %v2940, %v2978
        %v2996 = vmul.f32 %v2941, %v2978
        %v2997 = vmul.f32 %v2942, %v2982
        %v2998 = vmul.f32 %v2943, %v2982
        %v2999 = vmul.f32 %v2944, %v2986
        %v3000 = vmul.f32 %v2945, %v2986
        %v3001 = vmul.f32 %v2946, %v2990
        %v3002 = vmul.f32 %v2947, %v2990
        %v3003 = vadd.f32 %v2932, %v2995
        %v3004 = vadd.f32 %v2933, %v2996
        %v3005 = vadd.f32 %v2934, %v2997
        %v3006 = vadd.f32 %v2935, %v2998
        %v3007 = vadd.f32 %v2936, %v2999
        %v3008 = vadd.f32 %v2937, %v3000
        %v3009 = vadd.f32 %v2938, %v3001
        %v3010 = vadd.f32 %v2939, %v3002
        %s3011 = scalar_lea.vmem %s1, 104
        %v3012 = vld [vmem:[%s3011] sm:$0xf]
        %v3015 = vunpack.c.l.s4 1966171168
        %v3016 = vunpack.c.0.s8 %v3015
        %v3017 = vlaneseq
        %v3018 = vshrl.u32 %v3017, 7
        %v3019 = vsub.s32 %v3016, %v3018
        %v3020 = vrot.slane %v3012, %v3019
        %v3021 = vcombine.high %v3020, %v3020
        %v3023 = vunpack.c.l.s4 1966171168
        %v3024 = vunpack.c.0.s8 %v3023
        %v3025 = vlaneseq
        %v3026 = vshrl.u32 %v3025, 7
        %v3027 = vsub.s32 %v3024, %v3026
        %v3028 = vrot.slane %v3020, %v3027
        %v3030 = vunpack.c.l.s4 1966171168
        %v3031 = vunpack.c.0.s8 %v3030
        %v3032 = vlaneseq
        %v3033 = vshrl.u32 %v3032, 7
        %v3034 = vsub.s32 %v3031, %v3033
        %v3035 = vrot.slane %v3021, %v3034
        %v3036 = vcombine.high %v3028, %v3028
        %v3037 = vcombine.high %v3035, %v3035
        %v3038 = vlaneseq
        %v3039 = vshrl.u32 %v3038, 7
        %v3040 = vsub.s32 0, %v3039
        %v3041 = vrot.slane %v3028, %v3040
        %v3042 = vlaneseq
        %v3043 = vshrl.u32 %v3042, 7
        %v3044 = vsub.s32 0, %v3043
        %v3045 = vrot.slane %v3035, %v3044
        %v3046 = vlaneseq
        %v3047 = vshrl.u32 %v3046, 7
        %v3048 = vsub.s32 0, %v3047
        %v3049 = vrot.slane %v3036, %v3048
        %v3050 = vlaneseq
        %v3051 = vshrl.u32 %v3050, 7
        %v3052 = vsub.s32 0, %v3051
        %v3053 = vrot.slane %v3037, %v3052
        %3054 = vrot.lane.b32.xlu0 %v3041, 1
        %v3055 = vpop.permute.xlu0 %3054
        %3056 = vrot.lane.b32.xlu0 %v3045, 1
        %v3057 = vpop.permute.xlu0 %3056
        %3058 = vrot.lane.b32.xlu0 %v3049, 1
        %v3059 = vpop.permute.xlu0 %3058
        %3060 = vrot.lane.b32.xlu0 %v3053, 1
        %v3061 = vpop.permute.xlu0 %3060
        %v3066 = vmul.f32 %v2940, %v3055
        %v3067 = vmul.f32 %v2941, %v3055
        %v3068 = vmul.f32 %v2942, %v3057
        %v3069 = vmul.f32 %v2943, %v3057
        %v3070 = vmul.f32 %v2944, %v3059
        %v3071 = vmul.f32 %v2945, %v3059
        %v3072 = vmul.f32 %v2946, %v3061
        %v3073 = vmul.f32 %v2947, %v3061
        %3082 = vrot.lane.b32.xlu0 %v3066, 127
        %v3083 = vpop.permute.xlu0 %3082
        %3084 = vrot.lane.b32.xlu0 %v3067, 127
        %v3085 = vpop.permute.xlu0 %3084
        %3086 = vrot.lane.b32.xlu0 %v3068, 127
        %v3087 = vpop.permute.xlu0 %3086
        %3088 = vrot.lane.b32.xlu0 %v3069, 127
        %v3089 = vpop.permute.xlu0 %3088
        %3090 = vrot.lane.b32.xlu0 %v3070, 127
        %v3091 = vpop.permute.xlu0 %3090
        %3092 = vrot.lane.b32.xlu0 %v3071, 127
        %v3093 = vpop.permute.xlu0 %3092
        %3094 = vrot.lane.b32.xlu0 %v3072, 127
        %v3095 = vpop.permute.xlu0 %3094
        %3096 = vrot.lane.b32.xlu0 %v3073, 127
        %v3097 = vpop.permute.xlu0 %3096
        %v3106 = vadd.f32 %v3003, %v3083
        %v3107 = vadd.f32 %v3004, %v3085
        %v3108 = vadd.f32 %v3005, %v3087
        %v3109 = vadd.f32 %v3006, %v3089
        %v3110 = vadd.f32 %v3007, %v3091
        %v3111 = vadd.f32 %v3008, %v3093
        %v3112 = vadd.f32 %v3009, %v3095
        %v3113 = vadd.f32 %v3010, %v3097
        %s3114 = scalar_lea.vmem %s1, 108
        %v3115 = vld [vmem:[%s3114] sm:$0xf]
        %v3118 = vunpack.c.l.s4 1966171168
        %v3119 = vunpack.c.0.s8 %v3118
        %v3120 = vlaneseq
        %v3121 = vshrl.u32 %v3120, 7
        %v3122 = vsub.s32 %v3119, %v3121
        %v3123 = vrot.slane %v3115, %v3122
        %v3124 = vcombine.high %v3123, %v3123
        %v3126 = vunpack.c.l.s4 1966171168
        %v3127 = vunpack.c.0.s8 %v3126
        %v3128 = vlaneseq
        %v3129 = vshrl.u32 %v3128, 7
        %v3130 = vsub.s32 %v3127, %v3129
        %v3131 = vrot.slane %v3123, %v3130
        %v3133 = vunpack.c.l.s4 1966171168
        %v3134 = vunpack.c.0.s8 %v3133
        %v3135 = vlaneseq
        %v3136 = vshrl.u32 %v3135, 7
        %v3137 = vsub.s32 %v3134, %v3136
        %v3138 = vrot.slane %v3124, %v3137
        %v3139 = vcombine.high %v3131, %v3131
        %v3140 = vcombine.high %v3138, %v3138
        %v3141 = vlaneseq
        %v3142 = vshrl.u32 %v3141, 7
        %v3143 = vsub.s32 0, %v3142
        %v3144 = vrot.slane %v3131, %v3143
        %v3145 = vlaneseq
        %v3146 = vshrl.u32 %v3145, 7
        %v3147 = vsub.s32 0, %v3146
        %v3148 = vrot.slane %v3138, %v3147
        %v3149 = vlaneseq
        %v3150 = vshrl.u32 %v3149, 7
        %v3151 = vsub.s32 0, %v3150
        %v3152 = vrot.slane %v3139, %v3151
        %v3153 = vlaneseq
        %v3154 = vshrl.u32 %v3153, 7
        %v3155 = vsub.s32 0, %v3154
        %v3156 = vrot.slane %v3140, %v3155
        %3157 = vrot.lane.b32.xlu0 %v3144, 2
        %v3158 = vpop.permute.xlu0 %3157
        %3159 = vrot.lane.b32.xlu0 %v3148, 2
        %v3160 = vpop.permute.xlu0 %3159
        %3161 = vrot.lane.b32.xlu0 %v3152, 2
        %v3162 = vpop.permute.xlu0 %3161
        %3163 = vrot.lane.b32.xlu0 %v3156, 2
        %v3164 = vpop.permute.xlu0 %3163
        %v3169 = vmul.f32 %v2940, %v3158
        %v3170 = vmul.f32 %v2941, %v3158
        %v3171 = vmul.f32 %v2942, %v3160
        %v3172 = vmul.f32 %v2943, %v3160
        %v3173 = vmul.f32 %v2944, %v3162
        %v3174 = vmul.f32 %v2945, %v3162
        %v3175 = vmul.f32 %v2946, %v3164
        %v3176 = vmul.f32 %v2947, %v3164
        %3185 = vrot.lane.b32.xlu0 %v3169, 126
        %v3186 = vpop.permute.xlu0 %3185
        %3187 = vrot.lane.b32.xlu0 %v3170, 126
        %v3188 = vpop.permute.xlu0 %3187
        %3189 = vrot.lane.b32.xlu0 %v3171, 126
        %v3190 = vpop.permute.xlu0 %3189
        %3191 = vrot.lane.b32.xlu0 %v3172, 126
        %v3192 = vpop.permute.xlu0 %3191
        %3193 = vrot.lane.b32.xlu0 %v3173, 126
        %v3194 = vpop.permute.xlu0 %3193
        %3195 = vrot.lane.b32.xlu0 %v3174, 126
        %v3196 = vpop.permute.xlu0 %3195
        %3197 = vrot.lane.b32.xlu0 %v3175, 126
        %v3198 = vpop.permute.xlu0 %3197
        %3199 = vrot.lane.b32.xlu0 %v3176, 126
        %v3200 = vpop.permute.xlu0 %3199
        %v3209 = vadd.f32 %v3106, %v3186
        %v3210 = vadd.f32 %v3107, %v3188
        %v3211 = vadd.f32 %v3108, %v3190
        %v3212 = vadd.f32 %v3109, %v3192
        %v3213 = vadd.f32 %v3110, %v3194
        %v3214 = vadd.f32 %v3111, %v3196
        %v3215 = vadd.f32 %v3112, %v3198
        %v3216 = vadd.f32 %v3113, %v3200
        %s3217 = scalar_lea.vmem %s1, 112
        %v3218 = vld [vmem:[%s3217] sm:$0xf]
        %v3221 = vunpack.c.l.s4 1966171168
        %v3222 = vunpack.c.0.s8 %v3221
        %v3223 = vlaneseq
        %v3224 = vshrl.u32 %v3223, 7
        %v3225 = vsub.s32 %v3222, %v3224
        %v3226 = vrot.slane %v3218, %v3225
        %v3227 = vcombine.high %v3226, %v3226
        %v3229 = vunpack.c.l.s4 1966171168
        %v3230 = vunpack.c.0.s8 %v3229
        %v3231 = vlaneseq
        %v3232 = vshrl.u32 %v3231, 7
        %v3233 = vsub.s32 %v3230, %v3232
        %v3234 = vrot.slane %v3226, %v3233
        %v3236 = vunpack.c.l.s4 1966171168
        %v3237 = vunpack.c.0.s8 %v3236
        %v3238 = vlaneseq
        %v3239 = vshrl.u32 %v3238, 7
        %v3240 = vsub.s32 %v3237, %v3239
        %v3241 = vrot.slane %v3227, %v3240
        %v3242 = vcombine.high %v3234, %v3234
        %v3243 = vcombine.high %v3241, %v3241
        %v3244 = vlaneseq
        %v3245 = vshrl.u32 %v3244, 7
        %v3246 = vsub.s32 0, %v3245
        %v3247 = vrot.slane %v3234, %v3246
        %v3248 = vlaneseq
        %v3249 = vshrl.u32 %v3248, 7
        %v3250 = vsub.s32 0, %v3249
        %v3251 = vrot.slane %v3241, %v3250
        %v3252 = vlaneseq
        %v3253 = vshrl.u32 %v3252, 7
        %v3254 = vsub.s32 0, %v3253
        %v3255 = vrot.slane %v3242, %v3254
        %v3256 = vlaneseq
        %v3257 = vshrl.u32 %v3256, 7
        %v3258 = vsub.s32 0, %v3257
        %v3259 = vrot.slane %v3243, %v3258
        %3260 = vrot.lane.b32.xlu0 %v3247, 3
        %v3261 = vpop.permute.xlu0 %3260
        %3262 = vrot.lane.b32.xlu0 %v3251, 3
        %v3263 = vpop.permute.xlu0 %3262
        %3264 = vrot.lane.b32.xlu0 %v3255, 3
        %v3265 = vpop.permute.xlu0 %3264
        %3266 = vrot.lane.b32.xlu0 %v3259, 3
        %v3267 = vpop.permute.xlu0 %3266
        %v3272 = vmul.f32 %v2940, %v3261
        %v3273 = vmul.f32 %v2941, %v3261
        %v3274 = vmul.f32 %v2942, %v3263
        %v3275 = vmul.f32 %v2943, %v3263
        %v3276 = vmul.f32 %v2944, %v3265
        %v3277 = vmul.f32 %v2945, %v3265
        %v3278 = vmul.f32 %v2946, %v3267
        %v3279 = vmul.f32 %v2947, %v3267
        %3288 = vrot.lane.b32.xlu0 %v3272, 125
        %v3289 = vpop.permute.xlu0 %3288
        %3290 = vrot.lane.b32.xlu0 %v3273, 125
        %v3291 = vpop.permute.xlu0 %3290
        %3292 = vrot.lane.b32.xlu0 %v3274, 125
        %v3293 = vpop.permute.xlu0 %3292
        %3294 = vrot.lane.b32.xlu0 %v3275, 125
        %v3295 = vpop.permute.xlu0 %3294
        %3296 = vrot.lane.b32.xlu0 %v3276, 125
        %v3297 = vpop.permute.xlu0 %3296
        %3298 = vrot.lane.b32.xlu0 %v3277, 125
        %v3299 = vpop.permute.xlu0 %3298
        %3300 = vrot.lane.b32.xlu0 %v3278, 125
        %v3301 = vpop.permute.xlu0 %3300
        %3302 = vrot.lane.b32.xlu0 %v3279, 125
        %v3303 = vpop.permute.xlu0 %3302
        %v3312 = vadd.f32 %v3209, %v3289
        %v3313 = vadd.f32 %v3210, %v3291
        %v3314 = vadd.f32 %v3211, %v3293
        %v3315 = vadd.f32 %v3212, %v3295
        %v3316 = vadd.f32 %v3213, %v3297
        %v3317 = vadd.f32 %v3214, %v3299
        %v3318 = vadd.f32 %v3215, %v3301
        %v3319 = vadd.f32 %v3216, %v3303
        %s3320 = scalar_lea.vmem %s1, 116
        %v3321 = vld [vmem:[%s3320] sm:$0xf]
        %v3324 = vunpack.c.l.s4 1966171168
        %v3325 = vunpack.c.0.s8 %v3324
        %v3326 = vlaneseq
        %v3327 = vshrl.u32 %v3326, 7
        %v3328 = vsub.s32 %v3325, %v3327
        %v3329 = vrot.slane %v3321, %v3328
        %v3330 = vcombine.high %v3329, %v3329
        %v3332 = vunpack.c.l.s4 1966171168
        %v3333 = vunpack.c.0.s8 %v3332
        %v3334 = vlaneseq
        %v3335 = vshrl.u32 %v3334, 7
        %v3336 = vsub.s32 %v3333, %v3335
        %v3337 = vrot.slane %v3329, %v3336
        %v3339 = vunpack.c.l.s4 1966171168
        %v3340 = vunpack.c.0.s8 %v3339
        %v3341 = vlaneseq
        %v3342 = vshrl.u32 %v3341, 7
        %v3343 = vsub.s32 %v3340, %v3342
        %v3344 = vrot.slane %v3330, %v3343
        %v3345 = vcombine.high %v3337, %v3337
        %v3346 = vcombine.high %v3344, %v3344
        %v3347 = vlaneseq
        %v3348 = vshrl.u32 %v3347, 7
        %v3349 = vsub.s32 0, %v3348
        %v3350 = vrot.slane %v3337, %v3349
        %v3351 = vlaneseq
        %v3352 = vshrl.u32 %v3351, 7
        %v3353 = vsub.s32 0, %v3352
        %v3354 = vrot.slane %v3344, %v3353
        %v3355 = vlaneseq
        %v3356 = vshrl.u32 %v3355, 7
        %v3357 = vsub.s32 0, %v3356
        %v3358 = vrot.slane %v3345, %v3357
        %v3359 = vlaneseq
        %v3360 = vshrl.u32 %v3359, 7
        %v3361 = vsub.s32 0, %v3360
        %v3362 = vrot.slane %v3346, %v3361
        %3363 = vrot.lane.b32.xlu0 %v3350, 4
        %v3364 = vpop.permute.xlu0 %3363
        %3365 = vrot.lane.b32.xlu0 %v3354, 4
        %v3366 = vpop.permute.xlu0 %3365
        %3367 = vrot.lane.b32.xlu0 %v3358, 4
        %v3368 = vpop.permute.xlu0 %3367
        %3369 = vrot.lane.b32.xlu0 %v3362, 4
        %v3370 = vpop.permute.xlu0 %3369
        %v3375 = vmul.f32 %v2940, %v3364
        %v3376 = vmul.f32 %v2941, %v3364
        %v3377 = vmul.f32 %v2942, %v3366
        %v3378 = vmul.f32 %v2943, %v3366
        %v3379 = vmul.f32 %v2944, %v3368
        %v3380 = vmul.f32 %v2945, %v3368
        %v3381 = vmul.f32 %v2946, %v3370
        %v3382 = vmul.f32 %v2947, %v3370
        %3391 = vrot.lane.b32.xlu0 %v3375, 124
        %v3392 = vpop.permute.xlu0 %3391
        %3393 = vrot.lane.b32.xlu0 %v3376, 124
        %v3394 = vpop.permute.xlu0 %3393
        %3395 = vrot.lane.b32.xlu0 %v3377, 124
        %v3396 = vpop.permute.xlu0 %3395
        %3397 = vrot.lane.b32.xlu0 %v3378, 124
        %v3398 = vpop.permute.xlu0 %3397
        %3399 = vrot.lane.b32.xlu0 %v3379, 124
        %v3400 = vpop.permute.xlu0 %3399
        %3401 = vrot.lane.b32.xlu0 %v3380, 124
        %v3402 = vpop.permute.xlu0 %3401
        %3403 = vrot.lane.b32.xlu0 %v3381, 124
        %v3404 = vpop.permute.xlu0 %3403
        %3405 = vrot.lane.b32.xlu0 %v3382, 124
        %v3406 = vpop.permute.xlu0 %3405
        %v3415 = vadd.f32 %v3312, %v3392
        %v3416 = vadd.f32 %v3313, %v3394
        %v3417 = vadd.f32 %v3314, %v3396
        %v3418 = vadd.f32 %v3315, %v3398
        %v3419 = vadd.f32 %v3316, %v3400
        %v3420 = vadd.f32 %v3317, %v3402
        %v3421 = vadd.f32 %v3318, %v3404
        %v3422 = vadd.f32 %v3319, %v3406
        %v3423 = vld [vmem:[%s240 + $0x4] sm:$0xff]
        %v3424 = vld [vmem:[%s240 + $0xc] sm:$0xff]
        %v3425 = vld [vmem:[%s240 + $0x1c] sm:$0xff]
        %v3426 = vld [vmem:[%s240 + $0x24] sm:$0xff]
        %v3427 = vld [vmem:[%s240 + $0x34] sm:$0xff]
        %v3428 = vld [vmem:[%s240 + $0x3c] sm:$0xff]
        %v3429 = vld [vmem:[%s240 + $0x4c] sm:$0xff]
        %v3430 = vld [vmem:[%s240 + $0x54] sm:$0xff]
        %s3431 = scalar_lea.vmem %s1, 120
        %v3432 = vld [vmem:[%s3431] sm:$0xf]
        %v3435 = vunpack.c.l.s4 1966171168
        %v3436 = vunpack.c.0.s8 %v3435
        %v3437 = vlaneseq
        %v3438 = vshrl.u32 %v3437, 7
        %v3439 = vsub.s32 %v3436, %v3438
        %v3440 = vrot.slane %v3432, %v3439
        %v3441 = vcombine.high %v3440, %v3440
        %v3443 = vunpack.c.l.s4 1966171168
        %v3444 = vunpack.c.0.s8 %v3443
        %v3445 = vlaneseq
        %v3446 = vshrl.u32 %v3445, 7
        %v3447 = vsub.s32 %v3444, %v3446
        %v3448 = vrot.slane %v3440, %v3447
        %v3450 = vunpack.c.l.s4 1966171168
        %v3451 = vunpack.c.0.s8 %v3450
        %v3452 = vlaneseq
        %v3453 = vshrl.u32 %v3452, 7
        %v3454 = vsub.s32 %v3451, %v3453
        %v3455 = vrot.slane %v3441, %v3454
        %v3456 = vcombine.high %v3448, %v3448
        %v3457 = vcombine.high %v3455, %v3455
        %v3458 = vlaneseq
        %v3459 = vshrl.u32 %v3458, 7
        %v3460 = vsub.s32 0, %v3459
        %v3461 = vrot.slane %v3448, %v3460
        %v3462 = vlaneseq
        %v3463 = vshrl.u32 %v3462, 7
        %v3464 = vsub.s32 0, %v3463
        %v3465 = vrot.slane %v3455, %v3464
        %v3466 = vlaneseq
        %v3467 = vshrl.u32 %v3466, 7
        %v3468 = vsub.s32 0, %v3467
        %v3469 = vrot.slane %v3456, %v3468
        %v3470 = vlaneseq
        %v3471 = vshrl.u32 %v3470, 7
        %v3472 = vsub.s32 0, %v3471
        %v3473 = vrot.slane %v3457, %v3472
        %v3478 = vmul.f32 %v3423, %v3461
        %v3479 = vmul.f32 %v3424, %v3461
        %v3480 = vmul.f32 %v3425, %v3465
        %v3481 = vmul.f32 %v3426, %v3465
        %v3482 = vmul.f32 %v3427, %v3469
        %v3483 = vmul.f32 %v3428, %v3469
        %v3484 = vmul.f32 %v3429, %v3473
        %v3485 = vmul.f32 %v3430, %v3473
        %v3486 = vadd.f32 %v3415, %v3478
        %v3487 = vadd.f32 %v3416, %v3479
        %v3488 = vadd.f32 %v3417, %v3480
        %v3489 = vadd.f32 %v3418, %v3481
        %v3490 = vadd.f32 %v3419, %v3482
        %v3491 = vadd.f32 %v3420, %v3483
        %v3492 = vadd.f32 %v3421, %v3484
        %v3493 = vadd.f32 %v3422, %v3485
        %s3494 = scalar_lea.vmem %s1, 124
        %v3495 = vld [vmem:[%s3494] sm:$0xf]
        %v3498 = vunpack.c.l.s4 1966171168
        %v3499 = vunpack.c.0.s8 %v3498
        %v3500 = vlaneseq
        %v3501 = vshrl.u32 %v3500, 7
        %v3502 = vsub.s32 %v3499, %v3501
        %v3503 = vrot.slane %v3495, %v3502
        %v3504 = vcombine.high %v3503, %v3503
        %v3506 = vunpack.c.l.s4 1966171168
        %v3507 = vunpack.c.0.s8 %v3506
        %v3508 = vlaneseq
        %v3509 = vshrl.u32 %v3508, 7
        %v3510 = vsub.s32 %v3507, %v3509
        %v3511 = vrot.slane %v3503, %v3510
        %v3513 = vunpack.c.l.s4 1966171168
        %v3514 = vunpack.c.0.s8 %v3513
        %v3515 = vlaneseq
        %v3516 = vshrl.u32 %v3515, 7
        %v3517 = vsub.s32 %v3514, %v3516
        %v3518 = vrot.slane %v3504, %v3517
        %v3519 = vcombine.high %v3511, %v3511
        %v3520 = vcombine.high %v3518, %v3518
        %v3521 = vlaneseq
        %v3522 = vshrl.u32 %v3521, 7
        %v3523 = vsub.s32 0, %v3522
        %v3524 = vrot.slane %v3511, %v3523
        %v3525 = vlaneseq
        %v3526 = vshrl.u32 %v3525, 7
        %v3527 = vsub.s32 0, %v3526
        %v3528 = vrot.slane %v3518, %v3527
        %v3529 = vlaneseq
        %v3530 = vshrl.u32 %v3529, 7
        %v3531 = vsub.s32 0, %v3530
        %v3532 = vrot.slane %v3519, %v3531
        %v3533 = vlaneseq
        %v3534 = vshrl.u32 %v3533, 7
        %v3535 = vsub.s32 0, %v3534
        %v3536 = vrot.slane %v3520, %v3535
        %3537 = vrot.lane.b32.xlu0 %v3524, 1
        %v3538 = vpop.permute.xlu0 %3537
        %3539 = vrot.lane.b32.xlu0 %v3528, 1
        %v3540 = vpop.permute.xlu0 %3539
        %3541 = vrot.lane.b32.xlu0 %v3532, 1
        %v3542 = vpop.permute.xlu0 %3541
        %3543 = vrot.lane.b32.xlu0 %v3536, 1
        %v3544 = vpop.permute.xlu0 %3543
        %v3549 = vmul.f32 %v3423, %v3538
        %v3550 = vmul.f32 %v3424, %v3538
        %v3551 = vmul.f32 %v3425, %v3540
        %v3552 = vmul.f32 %v3426, %v3540
        %v3553 = vmul.f32 %v3427, %v3542
        %v3554 = vmul.f32 %v3428, %v3542
        %v3555 = vmul.f32 %v3429, %v3544
        %v3556 = vmul.f32 %v3430, %v3544
        %3565 = vrot.lane.b32.xlu0 %v3549, 127
        %v3566 = vpop.permute.xlu0 %3565
        %3567 = vrot.lane.b32.xlu0 %v3550, 127
        %v3568 = vpop.permute.xlu0 %3567
        %3569 = vrot.lane.b32.xlu0 %v3551, 127
        %v3570 = vpop.permute.xlu0 %3569
        %3571 = vrot.lane.b32.xlu0 %v3552, 127
        %v3572 = vpop.permute.xlu0 %3571
        %3573 = vrot.lane.b32.xlu0 %v3553, 127
        %v3574 = vpop.permute.xlu0 %3573
        %3575 = vrot.lane.b32.xlu0 %v3554, 127
        %v3576 = vpop.permute.xlu0 %3575
        %3577 = vrot.lane.b32.xlu0 %v3555, 127
        %v3578 = vpop.permute.xlu0 %3577
        %3579 = vrot.lane.b32.xlu0 %v3556, 127
        %v3580 = vpop.permute.xlu0 %3579
        %v3589 = vadd.f32 %v3486, %v3566
        %v3590 = vadd.f32 %v3487, %v3568
        %v3591 = vadd.f32 %v3488, %v3570
        %v3592 = vadd.f32 %v3489, %v3572
        %v3593 = vadd.f32 %v3490, %v3574
        %v3594 = vadd.f32 %v3491, %v3576
        %v3595 = vadd.f32 %v3492, %v3578
        %v3596 = vadd.f32 %v3493, %v3580
        %s3597 = scalar_lea.vmem %s1, 128
        %v3598 = vld [vmem:[%s3597] sm:$0xf]
        %v3601 = vunpack.c.l.s4 1966171168
        %v3602 = vunpack.c.0.s8 %v3601
        %v3603 = vlaneseq
        %v3604 = vshrl.u32 %v3603, 7
        %v3605 = vsub.s32 %v3602, %v3604
        %v3606 = vrot.slane %v3598, %v3605
        %v3607 = vcombine.high %v3606, %v3606
        %v3609 = vunpack.c.l.s4 1966171168
        %v3610 = vunpack.c.0.s8 %v3609
        %v3611 = vlaneseq
        %v3612 = vshrl.u32 %v3611, 7
        %v3613 = vsub.s32 %v3610, %v3612
        %v3614 = vrot.slane %v3606, %v3613
        %v3616 = vunpack.c.l.s4 1966171168
        %v3617 = vunpack.c.0.s8 %v3616
        %v3618 = vlaneseq
        %v3619 = vshrl.u32 %v3618, 7
        %v3620 = vsub.s32 %v3617, %v3619
        %v3621 = vrot.slane %v3607, %v3620
        %v3622 = vcombine.high %v3614, %v3614
        %v3623 = vcombine.high %v3621, %v3621
        %v3624 = vlaneseq
        %v3625 = vshrl.u32 %v3624, 7
        %v3626 = vsub.s32 0, %v3625
        %v3627 = vrot.slane %v3614, %v3626
        %v3628 = vlaneseq
        %v3629 = vshrl.u32 %v3628, 7
        %v3630 = vsub.s32 0, %v3629
        %v3631 = vrot.slane %v3621, %v3630
        %v3632 = vlaneseq
        %v3633 = vshrl.u32 %v3632, 7
        %v3634 = vsub.s32 0, %v3633
        %v3635 = vrot.slane %v3622, %v3634
        %v3636 = vlaneseq
        %v3637 = vshrl.u32 %v3636, 7
        %v3638 = vsub.s32 0, %v3637
        %v3639 = vrot.slane %v3623, %v3638
        %3640 = vrot.lane.b32.xlu0 %v3627, 2
        %v3641 = vpop.permute.xlu0 %3640
        %3642 = vrot.lane.b32.xlu0 %v3631, 2
        %v3643 = vpop.permute.xlu0 %3642
        %3644 = vrot.lane.b32.xlu0 %v3635, 2
        %v3645 = vpop.permute.xlu0 %3644
        %3646 = vrot.lane.b32.xlu0 %v3639, 2
        %v3647 = vpop.permute.xlu0 %3646
        %v3652 = vmul.f32 %v3423, %v3641
        %v3653 = vmul.f32 %v3424, %v3641
        %v3654 = vmul.f32 %v3425, %v3643
        %v3655 = vmul.f32 %v3426, %v3643
        %v3656 = vmul.f32 %v3427, %v3645
        %v3657 = vmul.f32 %v3428, %v3645
        %v3658 = vmul.f32 %v3429, %v3647
        %v3659 = vmul.f32 %v3430, %v3647
        %3668 = vrot.lane.b32.xlu0 %v3652, 126
        %v3669 = vpop.permute.xlu0 %3668
        %3670 = vrot.lane.b32.xlu0 %v3653, 126
        %v3671 = vpop.permute.xlu0 %3670
        %3672 = vrot.lane.b32.xlu0 %v3654, 126
        %v3673 = vpop.permute.xlu0 %3672
        %3674 = vrot.lane.b32.xlu0 %v3655, 126
        %v3675 = vpop.permute.xlu0 %3674
        %3676 = vrot.lane.b32.xlu0 %v3656, 126
        %v3677 = vpop.permute.xlu0 %3676
        %3678 = vrot.lane.b32.xlu0 %v3657, 126
        %v3679 = vpop.permute.xlu0 %3678
        %3680 = vrot.lane.b32.xlu0 %v3658, 126
        %v3681 = vpop.permute.xlu0 %3680
        %3682 = vrot.lane.b32.xlu0 %v3659, 126
        %v3683 = vpop.permute.xlu0 %3682
        %v3692 = vadd.f32 %v3589, %v3669
        %v3693 = vadd.f32 %v3590, %v3671
        %v3694 = vadd.f32 %v3591, %v3673
        %v3695 = vadd.f32 %v3592, %v3675
        %v3696 = vadd.f32 %v3593, %v3677
        %v3697 = vadd.f32 %v3594, %v3679
        %v3698 = vadd.f32 %v3595, %v3681
        %v3699 = vadd.f32 %v3596, %v3683
        %s3700 = scalar_lea.vmem %s1, 132
        %v3701 = vld [vmem:[%s3700] sm:$0xf]
        %v3704 = vunpack.c.l.s4 1966171168
        %v3705 = vunpack.c.0.s8 %v3704
        %v3706 = vlaneseq
        %v3707 = vshrl.u32 %v3706, 7
        %v3708 = vsub.s32 %v3705, %v3707
        %v3709 = vrot.slane %v3701, %v3708
        %v3710 = vcombine.high %v3709, %v3709
        %v3712 = vunpack.c.l.s4 1966171168
        %v3713 = vunpack.c.0.s8 %v3712
        %v3714 = vlaneseq
        %v3715 = vshrl.u32 %v3714, 7
        %v3716 = vsub.s32 %v3713, %v3715
        %v3717 = vrot.slane %v3709, %v3716
        %v3719 = vunpack.c.l.s4 1966171168
        %v3720 = vunpack.c.0.s8 %v3719
        %v3721 = vlaneseq
        %v3722 = vshrl.u32 %v3721, 7
        %v3723 = vsub.s32 %v3720, %v3722
        %v3724 = vrot.slane %v3710, %v3723
        %v3725 = vcombine.high %v3717, %v3717
        %v3726 = vcombine.high %v3724, %v3724
        %v3727 = vlaneseq
        %v3728 = vshrl.u32 %v3727, 7
        %v3729 = vsub.s32 0, %v3728
        %v3730 = vrot.slane %v3717, %v3729
        %v3731 = vlaneseq
        %v3732 = vshrl.u32 %v3731, 7
        %v3733 = vsub.s32 0, %v3732
        %v3734 = vrot.slane %v3724, %v3733
        %v3735 = vlaneseq
        %v3736 = vshrl.u32 %v3735, 7
        %v3737 = vsub.s32 0, %v3736
        %v3738 = vrot.slane %v3725, %v3737
        %v3739 = vlaneseq
        %v3740 = vshrl.u32 %v3739, 7
        %v3741 = vsub.s32 0, %v3740
        %v3742 = vrot.slane %v3726, %v3741
        %3743 = vrot.lane.b32.xlu0 %v3730, 3
        %v3744 = vpop.permute.xlu0 %3743
        %3745 = vrot.lane.b32.xlu0 %v3734, 3
        %v3746 = vpop.permute.xlu0 %3745
        %3747 = vrot.lane.b32.xlu0 %v3738, 3
        %v3748 = vpop.permute.xlu0 %3747
        %3749 = vrot.lane.b32.xlu0 %v3742, 3
        %v3750 = vpop.permute.xlu0 %3749
        %v3755 = vmul.f32 %v3423, %v3744
        %v3756 = vmul.f32 %v3424, %v3744
        %v3757 = vmul.f32 %v3425, %v3746
        %v3758 = vmul.f32 %v3426, %v3746
        %v3759 = vmul.f32 %v3427, %v3748
        %v3760 = vmul.f32 %v3428, %v3748
        %v3761 = vmul.f32 %v3429, %v3750
        %v3762 = vmul.f32 %v3430, %v3750
        %3771 = vrot.lane.b32.xlu0 %v3755, 125
        %v3772 = vpop.permute.xlu0 %3771
        %3773 = vrot.lane.b32.xlu0 %v3756, 125
        %v3774 = vpop.permute.xlu0 %3773
        %3775 = vrot.lane.b32.xlu0 %v3757, 125
        %v3776 = vpop.permute.xlu0 %3775
        %3777 = vrot.lane.b32.xlu0 %v3758, 125
        %v3778 = vpop.permute.xlu0 %3777
        %3779 = vrot.lane.b32.xlu0 %v3759, 125
        %v3780 = vpop.permute.xlu0 %3779
        %3781 = vrot.lane.b32.xlu0 %v3760, 125
        %v3782 = vpop.permute.xlu0 %3781
        %3783 = vrot.lane.b32.xlu0 %v3761, 125
        %v3784 = vpop.permute.xlu0 %3783
        %3785 = vrot.lane.b32.xlu0 %v3762, 125
        %v3786 = vpop.permute.xlu0 %3785
        %v3795 = vadd.f32 %v3692, %v3772
        %v3796 = vadd.f32 %v3693, %v3774
        %v3797 = vadd.f32 %v3694, %v3776
        %v3798 = vadd.f32 %v3695, %v3778
        %v3799 = vadd.f32 %v3696, %v3780
        %v3800 = vadd.f32 %v3697, %v3782
        %v3801 = vadd.f32 %v3698, %v3784
        %v3802 = vadd.f32 %v3699, %v3786
        %s3803 = scalar_lea.vmem %s1, 136
        %v3804 = vld [vmem:[%s3803] sm:$0xf]
        %v3807 = vunpack.c.l.s4 1966171168
        %v3808 = vunpack.c.0.s8 %v3807
        %v3809 = vlaneseq
        %v3810 = vshrl.u32 %v3809, 7
        %v3811 = vsub.s32 %v3808, %v3810
        %v3812 = vrot.slane %v3804, %v3811
        %v3813 = vcombine.high %v3812, %v3812
        %v3815 = vunpack.c.l.s4 1966171168
        %v3816 = vunpack.c.0.s8 %v3815
        %v3817 = vlaneseq
        %v3818 = vshrl.u32 %v3817, 7
        %v3819 = vsub.s32 %v3816, %v3818
        %v3820 = vrot.slane %v3812, %v3819
        %v3822 = vunpack.c.l.s4 1966171168
        %v3823 = vunpack.c.0.s8 %v3822
        %v3824 = vlaneseq
        %v3825 = vshrl.u32 %v3824, 7
        %v3826 = vsub.s32 %v3823, %v3825
        %v3827 = vrot.slane %v3813, %v3826
        %v3828 = vcombine.high %v3820, %v3820
        %v3829 = vcombine.high %v3827, %v3827
        %v3830 = vlaneseq
        %v3831 = vshrl.u32 %v3830, 7
        %v3832 = vsub.s32 0, %v3831
        %v3833 = vrot.slane %v3820, %v3832
        %v3834 = vlaneseq
        %v3835 = vshrl.u32 %v3834, 7
        %v3836 = vsub.s32 0, %v3835
        %v3837 = vrot.slane %v3827, %v3836
        %v3838 = vlaneseq
        %v3839 = vshrl.u32 %v3838, 7
        %v3840 = vsub.s32 0, %v3839
        %v3841 = vrot.slane %v3828, %v3840
        %v3842 = vlaneseq
        %v3843 = vshrl.u32 %v3842, 7
        %v3844 = vsub.s32 0, %v3843
        %v3845 = vrot.slane %v3829, %v3844
        %3846 = vrot.lane.b32.xlu0 %v3833, 4
        %v3847 = vpop.permute.xlu0 %3846
        %3848 = vrot.lane.b32.xlu0 %v3837, 4
        %v3849 = vpop.permute.xlu0 %3848
        %3850 = vrot.lane.b32.xlu0 %v3841, 4
        %v3851 = vpop.permute.xlu0 %3850
        %3852 = vrot.lane.b32.xlu0 %v3845, 4
        %v3853 = vpop.permute.xlu0 %3852
        %v3858 = vmul.f32 %v3423, %v3847
        %v3859 = vmul.f32 %v3424, %v3847
        %v3860 = vmul.f32 %v3425, %v3849
        %v3861 = vmul.f32 %v3426, %v3849
        %v3862 = vmul.f32 %v3427, %v3851
        %v3863 = vmul.f32 %v3428, %v3851
        %v3864 = vmul.f32 %v3429, %v3853
        %v3865 = vmul.f32 %v3430, %v3853
        %3874 = vrot.lane.b32.xlu0 %v3858, 124
        %v3875 = vpop.permute.xlu0 %3874
        %3876 = vrot.lane.b32.xlu0 %v3859, 124
        %v3877 = vpop.permute.xlu0 %3876
        %3878 = vrot.lane.b32.xlu0 %v3860, 124
        %v3879 = vpop.permute.xlu0 %3878
        %3880 = vrot.lane.b32.xlu0 %v3861, 124
        %v3881 = vpop.permute.xlu0 %3880
        %3882 = vrot.lane.b32.xlu0 %v3862, 124
        %v3883 = vpop.permute.xlu0 %3882
        %3884 = vrot.lane.b32.xlu0 %v3863, 124
        %v3885 = vpop.permute.xlu0 %3884
        %3886 = vrot.lane.b32.xlu0 %v3864, 124
        %v3887 = vpop.permute.xlu0 %3886
        %3888 = vrot.lane.b32.xlu0 %v3865, 124
        %v3889 = vpop.permute.xlu0 %3888
        %v3898 = vadd.f32 %v3795, %v3875
        %v3899 = vadd.f32 %v3796, %v3877
        %v3900 = vadd.f32 %v3797, %v3879
        %v3901 = vadd.f32 %v3798, %v3881
        %v3902 = vadd.f32 %v3799, %v3883
        %v3903 = vadd.f32 %v3800, %v3885
        %v3904 = vadd.f32 %v3801, %v3887
        %v3905 = vadd.f32 %v3802, %v3889
        %v3906 = vmax.f32 %v3898, 0.0
        %v3907 = vmax.f32 %v3899, 0.0
        %v3908 = vmax.f32 %v3900, 0.0
        %v3909 = vmax.f32 %v3901, 0.0
        %v3910 = vmax.f32 %v3902, 0.0
        %v3911 = vmax.f32 %v3903, 0.0
        %v3912 = vmax.f32 %v3904, 0.0
        %v3913 = vmax.f32 %v3905, 0.0
        %v3914 = vmin.f32 %v3906, 6.0
        %v3915 = vmin.f32 %v3907, 6.0
        %v3916 = vmin.f32 %v3908, 6.0
        %v3917 = vmin.f32 %v3909, 6.0
        %v3918 = vmin.f32 %v3910, 6.0
        %v3919 = vmin.f32 %v3911, 6.0
        %v3920 = vmin.f32 %v3912, 6.0
        %v3921 = vmin.f32 %v3913, 6.0
        %3922 = vst.msk [vmem:[%s235] sm:$0xff] %vm413, %v3914
        %3923 = vst.msk [vmem:[%s235 + $0x8] sm:$0xff] %vm413, %v3915
        %3924 = vst.msk [vmem:[%s235 + $0x10] sm:$0xff] %vm413, %v3916
        %3925 = vst.msk [vmem:[%s235 + $0x18] sm:$0xff] %vm413, %v3917
        %3926 = vst.msk [vmem:[%s235 + $0x20] sm:$0xff] %vm413, %v3918
        %3927 = vst.msk [vmem:[%s235 + $0x28] sm:$0xff] %vm413, %v3919
        %3928 = vst.msk [vmem:[%s235 + $0x30] sm:$0xff] %vm413, %v3920
        %3929 = vst.msk [vmem:[%s235 + $0x38] sm:$0xff] %vm413, %v3921
        %s3930 = sand.u32 %s99, 1
        %s3931 = scalar_lea.sflag [#allocation3], %s3930
        %s3932 = sand.u32 %s99, 1
        %s3933 = smul.addr %s3932, 64
        %s3934 = scalar_lea.vmem [#allocation2], %s3933
        %s3935 = sand.u32 %s23, 1
        %s3936 = scalar_lea.sflag [#allocation5], %s3935
        %s3937 = sand.u32 %s125, 1
        %s3938 = smul.addr %s3937, 64
        %s3939 = scalar_lea.vmem [#allocation4], %s3938
        %s3940 = sand.u32 %s23, 1
        %s3941 = scalar_lea.sflag [#allocation5], %s3940
        %s3942 = sand.u32 %s151, 1
        %s3943 = smul.addr %s3942, 64
        %s3944 = scalar_lea.vmem [#allocation6], %s3943
        // Predicated region
        $region33: #{tpu_custom_call.1} parent=31 // pred_check
          %p3945 = pneg %p109
        $region34: #{tpu_custom_call.1} parent=31 // pred_check_branch
          %3947 = sbr.rel (%p3945) target = $region36
        $region35: #{tpu_custom_call.1} parent=31 // pred_region
          %s3949 = ssub.s32 1024, 1024
          %3950 = vsyncadd %s3931, %s3949
          %s3951 = smul.addr %s23, 8
          %s3952 = smul.addr %s3951, 128
          %s3953 = scalar_lea.hbm %s3, %s3952
          %s3954 = sshll.u32 %s3934, 4
          %s3955 = int_to_ptr.vmem [resolvable:$true] %s3954
          %3960 = dma.vmem_to_hbm [thread:$0]  %s3955, 1024, %s3953, %s3931, 128, 128, 8
        $region36: #{tpu_custom_call.1} parent=31 // pred_fallthru
          _
        // Predicated region
        $region37: #{tpu_custom_call.1} parent=31 // pred_check
          %p3961 = pneg %p135
        $region38: #{tpu_custom_call.1} parent=31 // pred_check_branch
          %3963 = sbr.rel (%p3961) target = $region40
        $region39: #{tpu_custom_call.1} parent=31 // pred_region
          %s3965 = ssub.s32 1024, 1024
          %3966 = vsyncadd %s3936, %s3965
          %s3967 = smul.addr %s23, 8
          %s3968 = smul.addr %s3967, 128
          %s3969 = scalar_lea.hbm %s4, %s3968
          %s3970 = sshll.u32 %s3939, 4
          %s3971 = int_to_ptr.vmem [resolvable:$true] %s3970
          %3976 = dma.vmem_to_hbm [thread:$0]  %s3971, 1024, %s3969, %s3936, 128, 128, 8
        $region40: #{tpu_custom_call.1} parent=31 // pred_fallthru
          _
        // Predicated region
        $region41: #{tpu_custom_call.1} parent=31 // pred_check
          %p3977 = pneg %p161
        $region42: #{tpu_custom_call.1} parent=31 // pred_check_branch
          %3979 = sbr.rel (%p3977) target = $region44
        $region43: #{tpu_custom_call.1} parent=31 // pred_region
          %s3981 = ssub.s32 1024, 1024
          %3982 = vsyncadd %s3941, %s3981
          %s3983 = smul.addr %s23, 8
          %s3984 = smul.addr %s3983, 128
          %s3985 = scalar_lea.hbm %s5, %s3984
          %s3986 = sshll.u32 %s3944, 4
          %s3987 = int_to_ptr.vmem [resolvable:$true] %s3986
          %3992 = dma.vmem_to_hbm [thread:$0]  %s3987, 1024, %s3985, %s3941, 128, 128, 8
        $region44: #{tpu_custom_call.1} parent=31 // pred_fallthru
          _
      $region32: #{tpu_custom_call.1} parent=5 // pred_fallthru
        _
      %p3993 = scmp.le.s32.totalorder 2, %s18
      // Predicated region
      $region45: #{tpu_custom_call.1} parent=5 // pred_check
        %p3994 = pneg %p3993
      $region46: #{tpu_custom_call.1} parent=5 // pred_check_branch
        %3996 = sbr.rel (%p3994) target = $region48
      $region47: #{tpu_custom_call.1} parent=5 // pred_region
        %s3997 = ssub.s32 %s18, 2
        // Predicated region
        $region49: #{tpu_custom_call.1} parent=47 // pred_check
          %p3998 = pneg %p115
        $region50: #{tpu_custom_call.1} parent=47 // pred_check_branch
          %4000 = sbr.rel (%p3998) target = $region52
        $region51: #{tpu_custom_call.1} parent=47 // pred_region
          %s4001 = sand.u32 %s100, 1
          %s4002 = scalar_lea.sflag [#allocation3], %s4001
          %s4003 = sand.u32 %s100, 1
          %s4004 = smul.addr %s4003, 64
          %s4005 = scalar_lea.vmem [#allocation2], %s4004
          %4006 = dma.done %s4002, 1024
        $region52: #{tpu_custom_call.1} parent=47 // pred_fallthru
          _
        // Predicated region
        $region53: #{tpu_custom_call.1} parent=47 // pred_check
          %p4007 = pneg %p141
        $region54: #{tpu_custom_call.1} parent=47 // pred_check_branch
          %4009 = sbr.rel (%p4007) target = $region56
        $region55: #{tpu_custom_call.1} parent=47 // pred_region
          %s4010 = sand.u32 %s24, 1
          %s4011 = scalar_lea.sflag [#allocation5], %s4010
          %s4012 = sand.u32 %s126, 1
          %s4013 = smul.addr %s4012, 64
          %s4014 = scalar_lea.vmem [#allocation4], %s4013
          %4015 = dma.done %s4011, 1024
        $region56: #{tpu_custom_call.1} parent=47 // pred_fallthru
          _
        // Predicated region
        $region57: #{tpu_custom_call.1} parent=47 // pred_check
          %p4016 = pneg %p167
        $region58: #{tpu_custom_call.1} parent=47 // pred_check_branch
          %4018 = sbr.rel (%p4016) target = $region60
        $region59: #{tpu_custom_call.1} parent=47 // pred_region
          %s4019 = sand.u32 %s24, 1
          %s4020 = scalar_lea.sflag [#allocation5], %s4019
          %s4021 = sand.u32 %s152, 1
          %s4022 = smul.addr %s4021, 64
          %s4023 = scalar_lea.vmem [#allocation6], %s4022
          %4024 = dma.done %s4020, 1024
        $region60: #{tpu_custom_call.1} parent=47 // pred_fallthru
          _
      $region48: #{tpu_custom_call.1} parent=5 // pred_fallthru
        _
    $region6: #{tpu_custom_call.1} parent=1 // loop_footer
      %s22 = sadd.s32 1, %s18
    $region7: #{tpu_custom_call.1} parent=1 // loop_footer_branch
      %17 = sbr.rel target = $region3
    $region8: #{tpu_custom_call.1} parent=1 // loop_exit
      _
    %4025 = vsyncpa [#allocation3], 1
    %s4026 = scalar_lea.sflag [#allocation3], 1
    %4027 = vsyncpa %s4026, 1
    %4028 = vsyncpa [#allocation5], 1
    %s4029 = scalar_lea.sflag [#allocation5], 1
    %4030 = vsyncpa %s4029, 1

</llo_original>
